<compile_context>
chip_gen: v5e
topology: v5e:2x2
jax: 0.10.0
libtpu: 0.0.40
codegen_flags: <defaults>
</compile_context>

<pallas_src>
import functools

import jax
import jax.numpy as jnp
from jax.experimental import pallas as pl
from jax.experimental.pallas import tpu as pltpu


def sa_attn_kernel(x_ref, m_ref, wv_ref, bv_ref, wt_ref, bt_ref,
                   y_ref, stats_ref, *, b_blk, bf16_attention):
    """One grid step = b_blk batch elements.  NCL layout: C on sublanes, N on lanes."""
    # Statically unrolled loop (b_blk is tiny); for large N keep b_blk == 1 so only
    # one (N, N) tile is live at a time.
    for bi in range(b_blk):
        x = x_ref[bi]                                                     # (C, N) f32

        # ---- energy = x^T (Wqk^T Wqk) x : symmetric PSD Gram ---------------------
        xe = x.astype(m_ref.dtype)
        mx = jnp.dot(m_ref[...], xe, preferred_element_type=jnp.float32)  # (C, N)
        energy = jnp.einsum('cn,cm->nm', xe, mx.astype(m_ref.dtype),
                            preferred_element_type=jnp.float32)           # (N, N) f32

        # ---- softmax over keys, with both normalizations folded off the (N,N) ----
        # Global max (scalar) keeps exponents <= 0 since max of a PSD Gram is on the
        # diagonal; symmetry makes row sums == column sums (lane-major, no transpose).
        g = jnp.max(jnp.max(energy, axis=-1, keepdims=True),
                    axis=0, keepdims=True)                                # (1, 1)
        if bf16_attention:
            p = jnp.exp((energy - g).astype(jnp.bfloat16))                # bf16 EUP exp
        else:
            p = jnp.exp(energy - g)                                       # (N, N) f32
        row_sum = jnp.sum(p, axis=0, keepdims=True, dtype=jnp.float32)    # (1, N)
        inv_row = pl.reciprocal(row_sum, approx=True)                     # EUP
        inv_row = inv_row * (2.0 - row_sum * inv_row)                     # Newton step

        # Second normalization: col_sum[m] = 1e-9 + sum_n p[n,m]*inv_row[n]  (MXU).
        pb = p.astype(jnp.bfloat16)                                       # apply operand
        col_sum = 1e-9 + jnp.dot(inv_row.astype(jnp.bfloat16), pb,
                                 preferred_element_type=jnp.float32)      # (1, N)
        inv_col = pl.reciprocal(col_sum, approx=True)
        inv_col = inv_col * (2.0 - col_sum * inv_col)

        # ---- v projection + attention apply (norms folded into (C,N) operands) ---
        xv = jnp.dot(wv_ref[...], x,
                     preferred_element_type=jnp.float32) + bv_ref[...]    # (C, N)
        xv_s = (xv * inv_row).astype(jnp.bfloat16)
        x_r = jnp.dot(xv_s, pb,
                      preferred_element_type=jnp.float32) * inv_col       # (C, N)

        # ---- trans_conv(x - x_r), pre-BatchNorm -----------------------------------
        y = jnp.dot(wt_ref[...], x - x_r,
                    preferred_element_type=jnp.float32) + bt_ref[...]     # (C, N)
        y_ref[bi] = y

        # Packed per-batch BN partial sums: [:, 0] = sum, [:, 1] = sum of squares.
        stats_ref[bi, :, 0:1] = jnp.sum(y, axis=-1, keepdims=True)
        stats_ref[bi, :, 1:2] = jnp.sum(y * y, axis=-1, keepdims=True)


def sa_bn_residual_kernel(x_ref, y_ref, scale_ref, shift_ref, o_ref):
    # Folded BatchNorm (precomputed scale/shift) + ReLU + residual, coarse blocks.
    y_bn = scale_ref[...] * y_ref[...] + shift_ref[...]                   # one FMA/elem
    o_ref[...] = x_ref[...] + jnp.maximum(y_bn, 0.0)


def _largest_divisor_at_most(n, cap):
    d = int(max(1, min(n, cap)))
    while n % d:
        d -= 1
    return d


def sa_layer(x, w_qk, w_v, b_v, w_t, b_t, gamma, beta,
             eps=1e-5, bf16_attention=False):
    """x: (B, C, N) float32 (PyTorch NCL conv layout); weights (out_ch, in_ch)."""
    B, C, N = x.shape
    f32 = jnp.float32

    # Parameter folding (would be hoisted to parameter init in a real network).
    # TODO(synk): on v5e with C >= 256 keep the explicit (C/4, C) q/k projection
    #             instead of the Gram fold (the fold doubles MXU passes of the
    #             dominant energy matmul on its 128-deep MXU); pass-neutral on v6e/v7x.
    m = jnp.dot(w_qk.T, w_qk).astype(jnp.bfloat16 if bf16_attention else f32)
    bv = b_v.reshape(C, 1).astype(f32)
    bt = b_t.reshape(C, 1).astype(f32)

    # A few batch elements per grid step, but keep >= 2 steps for v7x megacore.
    b_blk = 2 if (B % 2 == 0 and B >= 4) else 1
    nb = B // b_blk

    xspec = pl.BlockSpec((b_blk, C, N), lambda b: (b, 0, 0))
    wspec = pl.BlockSpec((C, C), lambda b: (0, 0))
    bspec = pl.BlockSpec((C, 1), lambda b: (0, 0))
    sspec = pl.BlockSpec((b_blk, C, 2), lambda b: (b, 0, 0))

    y, stats = pl.pallas_call(
        functools.partial(sa_attn_kernel, b_blk=b_blk,
                          bf16_attention=bf16_attention),
        grid=(nb,),
        in_specs=[xspec, wspec, wspec, bspec, wspec, bspec],
        out_specs=(xspec, sspec),
        out_shape=(jax.ShapeDtypeStruct((B, C, N), f32),
                   jax.ShapeDtypeStruct((B, C, 2), f32)),
        compiler_params=pltpu.CompilerParams(
            dimension_semantics=("parallel",),
            # Ample for the test shape.  For production N (~2048) on v6e raise
            # towards ~96 MiB and keep the untiled (N,N) path; on v7x (64 MiB)
            # flash-style key tiling is required instead (see TODO above).
            vmem_limit_bytes=32 * 1024 * 1024),
    )(x, m, w_v, bv, w_t, bt)

    # BatchNorm1d training-mode statistics over (batch, points), per channel —
    # reduced over the batch grid here so the stats stay global despite tiling.
    cnt = float(B * N)
    mean = jnp.sum(stats[:, :, 0:1], axis=0) / cnt                        # (C, 1)
    var = jnp.sum(stats[:, :, 1:2], axis=0) / cnt - mean * mean
    var = jnp.maximum(var, 0.0)                                           # cancellation guard
    scale = gamma.reshape(C, 1) * jax.lax.rsqrt(var + eps)
    shift = beta.reshape(C, 1) - mean * scale

    # HBM-bound epilogue: coarse blocks (several batch elems, ~MiB-scale tiles),
    # but keep >= 2 grid steps when possible so both v7x cores participate.
    b_epi = _largest_divisor_at_most(B, max(1, (2 * 1024 * 1024) // (C * N * 4)))
    if B // b_epi < 2 and B >= 2:
        b_epi = _largest_divisor_at_most(B, max(1, b_epi // 2))
    espec = pl.BlockSpec((b_epi, C, N), lambda b: (b, 0, 0))

    out = pl.pallas_call(
        sa_bn_residual_kernel,
        grid=(B // b_epi,),
        in_specs=[espec, espec, bspec, bspec],
        out_specs=espec,
        out_shape=jax.ShapeDtypeStruct((B, C, N), f32),
        compiler_params=pltpu.CompilerParams(
            dimension_semantics=("parallel",)),
    )(x, y, scale, shift)
    return out


def sa_layer_reference(x, w_qk, w_v, b_v, w_t, b_t, gamma, beta):
    """Pure-JAX f32 reference in PyTorch NCL layout, mirroring the torch module."""
    x_q = jnp.einsum('dc,bcn->bdn', w_qk, x).transpose(0, 2, 1)           # (B, N, C4)
    x_k = jnp.einsum('dc,bcn->bdn', w_qk, x)                              # (B, C4, N)
    x_v = jnp.einsum('dc,bcn->bdn', w_v, x) + b_v[None, :, None]          # (B, C, N)
    energy = jnp.einsum('bnd,bdm->bnm', x_q, x_k)
    att = jax.nn.softmax(energy, axis=-1)
    att = att / (1e-9 + att.sum(axis=1, keepdims=True))
    x_r = jnp.einsum('bcn,bnm->bcm', x_v, att)
    y = jnp.einsum('dc,bcn->bdn', w_t, x - x_r) + b_t[None, :, None]
    mean = y.mean(axis=(0, 2), keepdims=True)
    var = ((y - mean) ** 2).mean(axis=(0, 2), keepdims=True)
    y_bn = gamma[None, :, None] * (y - mean) / jnp.sqrt(var + 1e-5) + beta[None, :, None]
    return x + jax.nn.relu(y_bn)


if __name__ == "__main__":
    # Small shapes consistent with the module (channels=64 in Point_Transformer_Last).
    B, C, N = 4, 64, 256
    C4 = C // 4

    key = jax.random.PRNGKey(0)
    kx, kqk, kv, kbv, kt, kbt, kg, kb = jax.random.split(key, 8)

    x = jax.random.normal(kx, (B, C, N), dtype=jnp.float32)
    w_qk = 0.1 * jax.random.normal(kqk, (C4, C), dtype=jnp.float32)   # shared q/k weight
    w_v = 0.1 * jax.random.normal(kv, (C, C), dtype=jnp.float32)
    b_v = 0.1 * jax.random.normal(kbv, (C,), dtype=jnp.float32)
    w_t = 0.1 * jax.random.normal(kt, (C, C), dtype=jnp.float32)
    b_t = 0.1 * jax.random.normal(kbt, (C,), dtype=jnp.float32)
    gamma = 1.0 + 0.1 * jax.random.normal(kg, (C,), dtype=jnp.float32)
    beta = 0.1 * jax.random.normal(kb, (C,), dtype=jnp.float32)

    out = sa_layer(x, w_qk, w_v, b_v, w_t, b_t, gamma, beta)
    out = jax.block_until_ready(out)

    ref = sa_layer_reference(x, w_qk, w_v, b_v, w_t, b_t, gamma, beta)
    assert out.shape == (B, C, N)
    # bf16 MXU operands on the N^2-sized attention-apply path (f32 accumulation)
    # widen the tolerance vs. the pure-f32 variant (which matched at 2e-3).
    max_diff = jnp.max(jnp.abs(out - ref))
    assert jnp.allclose(out, ref, atol=2e-2, rtol=2e-2), f"max abs diff {max_diff}"

    print("KERNEL_OK")
</pallas_src>

<mosaic_0001>
module attributes {stable_mosaic.version = 11 : i64} {
  func.func @sa_attn_kernel(%arg0: i32, %arg1: memref<2x64x256xf32, #tpu.memory_space<vmem>>, %arg2: memref<64x64xf32, #tpu.memory_space<vmem>>, %arg3: memref<64x64xf32, #tpu.memory_space<vmem>>, %arg4: memref<64x1xf32, #tpu.memory_space<vmem>>, %arg5: memref<64x64xf32, #tpu.memory_space<vmem>>, %arg6: memref<64x1xf32, #tpu.memory_space<vmem>>, %arg7: memref<2x64x256xf32, #tpu.memory_space<vmem>>, %arg8: memref<2x64x2xf32, #tpu.memory_space<vmem>>) attributes {dimension_semantics = [#tpu.dimension_semantics<parallel>], iteration_bounds = array<i64: 2>, scalar_prefetch = 0 : i64, scratch_operands = 0 : i64, tpu.core_type = #tpu.core_type<tc>, window_params = [{transform_indices = @transform_0, window_bounds = array<i64: 2, 64, 256>}, {pipeline_mode = #tpu.pipeline_mode<synchronous>, transform_indices = @transform_1, window_bounds = array<i64: 64, 64>}, {pipeline_mode = #tpu.pipeline_mode<synchronous>, transform_indices = @transform_2, window_bounds = array<i64: 64, 64>}, {pipeline_mode = #tpu.pipeline_mode<synchronous>, transform_indices = @transform_3, window_bounds = array<i64: 64, 1>}, {pipeline_mode = #tpu.pipeline_mode<synchronous>, transform_indices = @transform_4, window_bounds = array<i64: 64, 64>}, {pipeline_mode = #tpu.pipeline_mode<synchronous>, transform_indices = @transform_5, window_bounds = array<i64: 64, 1>}, {transform_indices = @transform_6, window_bounds = array<i64: 2, 64, 256>}, {transform_indices = @transform_7, window_bounds = array<i64: 2, 64, 2>}]} {
    %c0 = arith.constant 0 : index
    %c0_0 = arith.constant 0 : index
    %c0_1 = arith.constant 0 : index
    %0 = vector.load %arg1[%c0, %c0_0, %c0_1] : memref<2x64x256xf32, #tpu.memory_space<vmem>>, vector<1x64x256xf32>
    %1 = vector.shape_cast %0 : vector<1x64x256xf32> to vector<64x256xf32>
    %c0_2 = arith.constant 0 : index
    %c0_3 = arith.constant 0 : index
    %2 = vector.load %arg2[%c0_2, %c0_3] : memref<64x64xf32, #tpu.memory_space<vmem>>, vector<64x64xf32>
    %cst = arith.constant dense<0.000000e+00> : vector<64x256xf32>
    %3 = tpu.matmul %2, %1, %cst {dimension_numbers = #tpu.dot_dimension_numbers<[1], [0], [0], [1], [0, 0, 1, 1], [], []>} : vector<64x64xf32>, vector<64x256xf32>, vector<64x256xf32> -> vector<64x256xf32>
    "tpu.trace_start"() <{level = 10 : i32, message = "cn,cm->nm"}> : () -> ()
    %cst_4 = arith.constant dense<0.000000e+00> : vector<256x256xf32>
    %4 = tpu.matmul %1, %3, %cst_4 {dimension_numbers = #tpu.dot_dimension_numbers<[0], [0], [1], [1], [0, 1, 1, 1], [], []>} : vector<64x256xf32>, vector<64x256xf32>, vector<256x256xf32> -> vector<256x256xf32>
    "tpu.trace_stop"() : () -> ()
    %cst_5 = arith.constant dense<0xFF800000> : vector<256xf32>
    %5 = vector.multi_reduction <maximumf>, %4, %cst_5 [1] : vector<256x256xf32> to vector<256xf32>
    %6 = vector.shape_cast %5 : vector<256xf32> to vector<256x1xf32>
    %cst_6 = arith.constant dense<0xFF800000> : vector<1xf32>
    %7 = vector.multi_reduction <maximumf>, %6, %cst_6 [0] : vector<256x1xf32> to vector<1xf32>
    %8 = vector.shape_cast %7 : vector<1xf32> to vector<1x1xf32>
    %9 = vector.broadcast %8 : vector<1x1xf32> to vector<256x256xf32>
    %10 = arith.subf %4, %9 : vector<256x256xf32>
    %11 = math.exp %10 : vector<256x256xf32>
    %cst_7 = arith.constant dense<0.000000e+00> : vector<256xf32>
    %12 = vector.multi_reduction <add>, %11, %cst_7 [0] : vector<256x256xf32> to vector<256xf32>
    %13 = vector.shape_cast %12 : vector<256xf32> to vector<1x256xf32>
    %14 = tpu.reciprocal %13 {approx = true} : vector<1x256xf32> -> vector<1x256xf32>
    %15 = arith.mulf %13, %14 : vector<1x256xf32>
    %cst_8 = arith.constant 2.000000e+00 : f32
    %16 = vector.broadcast %cst_8 : f32 to vector<1x256xf32>
    %17 = arith.subf %16, %15 : vector<1x256xf32>
    %18 = arith.mulf %14, %17 : vector<1x256xf32>
    %19 = arith.truncf %11 : vector<256x256xf32> to vector<256x256xbf16>
    %20 = arith.truncf %18 : vector<1x256xf32> to vector<1x256xbf16>
    %cst_9 = arith.constant dense<0.000000e+00> : vector<1x256xf32>
    %21 = tpu.matmul %20, %19, %cst_9 {dimension_numbers = #tpu.dot_dimension_numbers<[1], [0], [0], [1], [0, 0, 1, 1], [], []>} : vector<1x256xbf16>, vector<256x256xbf16>, vector<1x256xf32> -> vector<1x256xf32>
    %cst_10 = arith.constant 9.99999971E-10 : f32
    %22 = vector.broadcast %cst_10 : f32 to vector<1x256xf32>
    %23 = arith.addf %22, %21 : vector<1x256xf32>
    %24 = tpu.reciprocal %23 {approx = true} : vector<1x256xf32> -> vector<1x256xf32>
    %25 = arith.mulf %23, %24 : vector<1x256xf32>
    %cst_11 = arith.constant 2.000000e+00 : f32
    %26 = vector.broadcast %cst_11 : f32 to vector<1x256xf32>
    %27 = arith.subf %26, %25 : vector<1x256xf32>
    %28 = arith.mulf %24, %27 : vector<1x256xf32>
    %c0_12 = arith.constant 0 : index
    %c0_13 = arith.constant 0 : index
    %29 = vector.load %arg3[%c0_12, %c0_13] : memref<64x64xf32, #tpu.memory_space<vmem>>, vector<64x64xf32>
    %cst_14 = arith.constant dense<0.000000e+00> : vector<64x256xf32>
    %30 = tpu.matmul %29, %1, %cst_14 {dimension_numbers = #tpu.dot_dimension_numbers<[1], [0], [0], [1], [0, 0, 1, 1], [], []>} : vector<64x64xf32>, vector<64x256xf32>, vector<64x256xf32> -> vector<64x256xf32>
    %c0_15 = arith.constant 0 : index
    %c0_16 = arith.constant 0 : index
    %31 = vector.load %arg4[%c0_15, %c0_16] : memref<64x1xf32, #tpu.memory_space<vmem>>, vector<64x1xf32>
    %32 = vector.broadcast %31 : vector<64x1xf32> to vector<64x256xf32>
    %33 = arith.addf %30, %32 : vector<64x256xf32>
    %34 = vector.broadcast %18 : vector<1x256xf32> to vector<64x256xf32>
    %35 = arith.mulf %33, %34 : vector<64x256xf32>
    %36 = arith.truncf %35 : vector<64x256xf32> to vector<64x256xbf16>
    %cst_17 = arith.constant dense<0.000000e+00> : vector<64x256xf32>
    %37 = tpu.matmul %36, %19, %cst_17 {dimension_numbers = #tpu.dot_dimension_numbers<[1], [0], [0], [1], [0, 0, 1, 1], [], []>} : vector<64x256xbf16>, vector<256x256xbf16>, vector<64x256xf32> -> vector<64x256xf32>
    %38 = vector.broadcast %28 : vector<1x256xf32> to vector<64x256xf32>
    %39 = arith.mulf %37, %38 : vector<64x256xf32>
    %c0_18 = arith.constant 0 : index
    %c0_19 = arith.constant 0 : index
    %40 = vector.load %arg5[%c0_18, %c0_19] : memref<64x64xf32, #tpu.memory_space<vmem>>, vector<64x64xf32>
    %41 = arith.subf %1, %39 : vector<64x256xf32>
    %cst_20 = arith.constant dense<0.000000e+00> : vector<64x256xf32>
    %42 = tpu.matmul %40, %41, %cst_20 {dimension_numbers = #tpu.dot_dimension_numbers<[1], [0], [0], [1], [0, 0, 1, 1], [], []>} : vector<64x64xf32>, vector<64x256xf32>, vector<64x256xf32> -> vector<64x256xf32>
    %c0_21 = arith.constant 0 : index
    %c0_22 = arith.constant 0 : index
    %43 = vector.load %arg6[%c0_21, %c0_22] : memref<64x1xf32, #tpu.memory_space<vmem>>, vector<64x1xf32>
    %44 = vector.broadcast %43 : vector<64x1xf32> to vector<64x256xf32>
    %45 = arith.addf %42, %44 : vector<64x256xf32>
    %c0_23 = arith.constant 0 : index
    %c0_24 = arith.constant 0 : index
    %c0_25 = arith.constant 0 : index
    %46 = vector.load %arg7[%c0_23, %c0_24, %c0_25] : memref<2x64x256xf32, #tpu.memory_space<vmem>>, vector<1x64x256xf32>
    %47 = vector.shape_cast %46 : vector<1x64x256xf32> to vector<64x256xf32>
    %48 = vector.shape_cast %45 : vector<64x256xf32> to vector<1x64x256xf32>
    tpu.vector_store %arg7[%c0_23, %c0_24, %c0_25], %48 {strides = array<i32>} : memref<2x64x256xf32, #tpu.memory_space<vmem>>, vector<1x64x256xf32>,
    %cst_26 = arith.constant dense<0.000000e+00> : vector<64xf32>
    %49 = vector.multi_reduction <add>, %45, %cst_26 [1] : vector<64x256xf32> to vector<64xf32>
    %50 = vector.shape_cast %49 : vector<64xf32> to vector<64x1xf32>
    %c0_27 = arith.constant 0 : index
    %c0_28 = arith.constant 0 : index
    %c0_29 = arith.constant 0 : index
    %51 = vector.load %arg8[%c0_27, %c0_28, %c0_29] : memref<2x64x2xf32, #tpu.memory_space<vmem>>, vector<1x64x1xf32>
    %52 = vector.shape_cast %51 : vector<1x64x1xf32> to vector<64x1xf32>
    %53 = vector.shape_cast %50 : vector<64x1xf32> to vector<1x64x1xf32>
    tpu.vector_store %arg8[%c0_27, %c0_28, %c0_29], %53 {strides = array<i32>} : memref<2x64x2xf32, #tpu.memory_space<vmem>>, vector<1x64x1xf32>,
    %54 = arith.mulf %45, %45 : vector<64x256xf32>
    %cst_30 = arith.constant dense<0.000000e+00> : vector<64xf32>
    %55 = vector.multi_reduction <add>, %54, %cst_30 [1] : vector<64x256xf32> to vector<64xf32>
    %56 = vector.shape_cast %55 : vector<64xf32> to vector<64x1xf32>
    %c0_31 = arith.constant 0 : index
    %c0_32 = arith.constant 0 : index
    %c1 = arith.constant 1 : index
    %57 = vector.load %arg8[%c0_31, %c0_32, %c1] : memref<2x64x2xf32, #tpu.memory_space<vmem>>, vector<1x64x1xf32>
    %58 = vector.shape_cast %57 : vector<1x64x1xf32> to vector<64x1xf32>
    %59 = vector.shape_cast %56 : vector<64x1xf32> to vector<1x64x1xf32>
    tpu.vector_store %arg8[%c0_31, %c0_32, %c1], %59 {strides = array<i32>} : memref<2x64x2xf32, #tpu.memory_space<vmem>>, vector<1x64x1xf32>,
    %c1_33 = arith.constant 1 : index
    %c0_34 = arith.constant 0 : index
    %c0_35 = arith.constant 0 : index
    %60 = vector.load %arg1[%c1_33, %c0_34, %c0_35] : memref<2x64x256xf32, #tpu.memory_space<vmem>>, vector<1x64x256xf32>
    %61 = vector.shape_cast %60 : vector<1x64x256xf32> to vector<64x256xf32>
    %c0_36 = arith.constant 0 : index
    %c0_37 = arith.constant 0 : index
    %62 = vector.load %arg2[%c0_36, %c0_37] : memref<64x64xf32, #tpu.memory_space<vmem>>, vector<64x64xf32>
    %cst_38 = arith.constant dense<0.000000e+00> : vector<64x256xf32>
    %63 = tpu.matmul %62, %61, %cst_38 {dimension_numbers = #tpu.dot_dimension_numbers<[1], [0], [0], [1], [0, 0, 1, 1], [], []>} : vector<64x64xf32>, vector<64x256xf32>, vector<64x256xf32> -> vector<64x256xf32>
    "tpu.trace_start"() <{level = 10 : i32, message = "cn,cm->nm"}> : () -> ()
    %cst_39 = arith.constant dense<0.000000e+00> : vector<256x256xf32>
    %64 = tpu.matmul %61, %63, %cst_39 {dimension_numbers = #tpu.dot_dimension_numbers<[0], [0], [1], [1], [0, 1, 1, 1], [], []>} : vector<64x256xf32>, vector<64x256xf32>, vector<256x256xf32> -> vector<256x256xf32>
    "tpu.trace_stop"() : () -> ()
    %cst_40 = arith.constant dense<0xFF800000> : vector<256xf32>
    %65 = vector.multi_reduction <maximumf>, %64, %cst_40 [1] : vector<256x256xf32> to vector<256xf32>
    %66 = vector.shape_cast %65 : vector<256xf32> to vector<256x1xf32>
    %cst_41 = arith.constant dense<0xFF800000> : vector<1xf32>
    %67 = vector.multi_reduction <maximumf>, %66, %cst_41 [0] : vector<256x1xf32> to vector<1xf32>
    %68 = vector.shape_cast %67 : vector<1xf32> to vector<1x1xf32>
    %69 = vector.broadcast %68 : vector<1x1xf32> to vector<256x256xf32>
    %70 = arith.subf %64, %69 : vector<256x256xf32>
    %71 = math.exp %70 : vector<256x256xf32>
    %cst_42 = arith.constant dense<0.000000e+00> : vector<256xf32>
    %72 = vector.multi_reduction <add>, %71, %cst_42 [0] : vector<256x256xf32> to vector<256xf32>
    %73 = vector.shape_cast %72 : vector<256xf32> to vector<1x256xf32>
    %74 = tpu.reciprocal %73 {approx = true} : vector<1x256xf32> -> vector<1x256xf32>
    %75 = arith.mulf %73, %74 : vector<1x256xf32>
    %cst_43 = arith.constant 2.000000e+00 : f32
    %76 = vector.broadcast %cst_43 : f32 to vector<1x256xf32>
    %77 = arith.subf %76, %75 : vector<1x256xf32>
    %78 = arith.mulf %74, %77 : vector<1x256xf32>
    %79 = arith.truncf %71 : vector<256x256xf32> to vector<256x256xbf16>
    %80 = arith.truncf %78 : vector<1x256xf32> to vector<1x256xbf16>
    %cst_44 = arith.constant dense<0.000000e+00> : vector<1x256xf32>
    %81 = tpu.matmul %80, %79, %cst_44 {dimension_numbers = #tpu.dot_dimension_numbers<[1], [0], [0], [1], [0, 0, 1, 1], [], []>} : vector<1x256xbf16>, vector<256x256xbf16>, vector<1x256xf32> -> vector<1x256xf32>
    %cst_45 = arith.constant 9.99999971E-10 : f32
    %82 = vector.broadcast %cst_45 : f32 to vector<1x256xf32>
    %83 = arith.addf %82, %81 : vector<1x256xf32>
    %84 = tpu.reciprocal %83 {approx = true} : vector<1x256xf32> -> vector<1x256xf32>
    %85 = arith.mulf %83, %84 : vector<1x256xf32>
    %cst_46 = arith.constant 2.000000e+00 : f32
    %86 = vector.broadcast %cst_46 : f32 to vector<1x256xf32>
    %87 = arith.subf %86, %85 : vector<1x256xf32>
    %88 = arith.mulf %84, %87 : vector<1x256xf32>
    %c0_47 = arith.constant 0 : index
    %c0_48 = arith.constant 0 : index
    %89 = vector.load %arg3[%c0_47, %c0_48] : memref<64x64xf32, #tpu.memory_space<vmem>>, vector<64x64xf32>
    %cst_49 = arith.constant dense<0.000000e+00> : vector<64x256xf32>
    %90 = tpu.matmul %89, %61, %cst_49 {dimension_numbers = #tpu.dot_dimension_numbers<[1], [0], [0], [1], [0, 0, 1, 1], [], []>} : vector<64x64xf32>, vector<64x256xf32>, vector<64x256xf32> -> vector<64x256xf32>
    %c0_50 = arith.constant 0 : index
    %c0_51 = arith.constant 0 : index
    %91 = vector.load %arg4[%c0_50, %c0_51] : memref<64x1xf32, #tpu.memory_space<vmem>>, vector<64x1xf32>
    %92 = vector.broadcast %91 : vector<64x1xf32> to vector<64x256xf32>
    %93 = arith.addf %90, %92 : vector<64x256xf32>
    %94 = vector.broadcast %78 : vector<1x256xf32> to vector<64x256xf32>
    %95 = arith.mulf %93, %94 : vector<64x256xf32>
    %96 = arith.truncf %95 : vector<64x256xf32> to vector<64x256xbf16>
    %cst_52 = arith.constant dense<0.000000e+00> : vector<64x256xf32>
    %97 = tpu.matmul %96, %79, %cst_52 {dimension_numbers = #tpu.dot_dimension_numbers<[1], [0], [0], [1], [0, 0, 1, 1], [], []>} : vector<64x256xbf16>, vector<256x256xbf16>, vector<64x256xf32> -> vector<64x256xf32>
    %98 = vector.broadcast %88 : vector<1x256xf32> to vector<64x256xf32>
    %99 = arith.mulf %97, %98 : vector<64x256xf32>
    %c0_53 = arith.constant 0 : index
    %c0_54 = arith.constant 0 : index
    %100 = vector.load %arg5[%c0_53, %c0_54] : memref<64x64xf32, #tpu.memory_space<vmem>>, vector<64x64xf32>
    %101 = arith.subf %61, %99 : vector<64x256xf32>
    %cst_55 = arith.constant dense<0.000000e+00> : vector<64x256xf32>
    %102 = tpu.matmul %100, %101, %cst_55 {dimension_numbers = #tpu.dot_dimension_numbers<[1], [0], [0], [1], [0, 0, 1, 1], [], []>} : vector<64x64xf32>, vector<64x256xf32>, vector<64x256xf32> -> vector<64x256xf32>
    %c0_56 = arith.constant 0 : index
    %c0_57 = arith.constant 0 : index
    %103 = vector.load %arg6[%c0_56, %c0_57] : memref<64x1xf32, #tpu.memory_space<vmem>>, vector<64x1xf32>
    %104 = vector.broadcast %103 : vector<64x1xf32> to vector<64x256xf32>
    %105 = arith.addf %102, %104 : vector<64x256xf32>
    %c1_58 = arith.constant 1 : index
    %c0_59 = arith.constant 0 : index
    %c0_60 = arith.constant 0 : index
    %106 = vector.load %arg7[%c1_58, %c0_59, %c0_60] : memref<2x64x256xf32, #tpu.memory_space<vmem>>, vector<1x64x256xf32>
    %107 = vector.shape_cast %106 : vector<1x64x256xf32> to vector<64x256xf32>
    %108 = vector.shape_cast %105 : vector<64x256xf32> to vector<1x64x256xf32>
    tpu.vector_store %arg7[%c1_58, %c0_59, %c0_60], %108 {strides = array<i32>} : memref<2x64x256xf32, #tpu.memory_space<vmem>>, vector<1x64x256xf32>,
    %cst_61 = arith.constant dense<0.000000e+00> : vector<64xf32>
    %109 = vector.multi_reduction <add>, %105, %cst_61 [1] : vector<64x256xf32> to vector<64xf32>
    %110 = vector.shape_cast %109 : vector<64xf32> to vector<64x1xf32>
    %c1_62 = arith.constant 1 : index
    %c0_63 = arith.constant 0 : index
    %c0_64 = arith.constant 0 : index
    %111 = vector.load %arg8[%c1_62, %c0_63, %c0_64] : memref<2x64x2xf32, #tpu.memory_space<vmem>>, vector<1x64x1xf32>
    %112 = vector.shape_cast %111 : vector<1x64x1xf32> to vector<64x1xf32>
    %113 = vector.shape_cast %110 : vector<64x1xf32> to vector<1x64x1xf32>
    tpu.vector_store %arg8[%c1_62, %c0_63, %c0_64], %113 {strides = array<i32>} : memref<2x64x2xf32, #tpu.memory_space<vmem>>, vector<1x64x1xf32>,
    %114 = arith.mulf %105, %105 : vector<64x256xf32>
    %cst_65 = arith.constant dense<0.000000e+00> : vector<64xf32>
    %115 = vector.multi_reduction <add>, %114, %cst_65 [1] : vector<64x256xf32> to vector<64xf32>
    %116 = vector.shape_cast %115 : vector<64xf32> to vector<64x1xf32>
    %c1_66 = arith.constant 1 : index
    %c0_67 = arith.constant 0 : index
    %c1_68 = arith.constant 1 : index
    %117 = vector.load %arg8[%c1_66, %c0_67, %c1_68] : memref<2x64x2xf32, #tpu.memory_space<vmem>>, vector<1x64x1xf32>
    %118 = vector.shape_cast %117 : vector<1x64x1xf32> to vector<64x1xf32>
    %119 = vector.shape_cast %116 : vector<64x1xf32> to vector<1x64x1xf32>
    tpu.vector_store %arg8[%c1_66, %c0_67, %c1_68], %119 {strides = array<i32>} : memref<2x64x2xf32, #tpu.memory_space<vmem>>, vector<1x64x1xf32>,
    return
  }
  func.func @transform_0(%arg0: i32) -> (i32, i32, i32) {
    %c0_i32 = arith.constant 0 : i32
    %c0_i32_0 = arith.constant 0 : i32
    %c0_i32_1 = arith.constant 0 : i32
    return %arg0, %c0_i32, %c0_i32_0 : i32, i32, i32
  }
  func.func @transform_1(%arg0: i32) -> (i32, i32) {
    %c0_i32 = arith.constant 0 : i32
    %c0_i32_0 = arith.constant 0 : i32
    %c0_i32_1 = arith.constant 0 : i32
    return %c0_i32, %c0_i32_0 : i32, i32
  }
  func.func @transform_2(%arg0: i32) -> (i32, i32) {
    %c0_i32 = arith.constant 0 : i32
    %c0_i32_0 = arith.constant 0 : i32
    %c0_i32_1 = arith.constant 0 : i32
    return %c0_i32, %c0_i32_0 : i32, i32
  }
  func.func @transform_3(%arg0: i32) -> (i32, i32) {
    %c0_i32 = arith.constant 0 : i32
    %c0_i32_0 = arith.constant 0 : i32
    %c0_i32_1 = arith.constant 0 : i32
    return %c0_i32, %c0_i32_0 : i32, i32
  }
  func.func @transform_4(%arg0: i32) -> (i32, i32) {
    %c0_i32 = arith.constant 0 : i32
    %c0_i32_0 = arith.constant 0 : i32
    %c0_i32_1 = arith.constant 0 : i32
    return %c0_i32, %c0_i32_0 : i32, i32
  }
  func.func @transform_5(%arg0: i32) -> (i32, i32) {
    %c0_i32 = arith.constant 0 : i32
    %c0_i32_0 = arith.constant 0 : i32
    %c0_i32_1 = arith.constant 0 : i32
    return %c0_i32, %c0_i32_0 : i32, i32
  }
  func.func @transform_6(%arg0: i32) -> (i32, i32, i32) {
    %c0_i32 = arith.constant 0 : i32
    %c0_i32_0 = arith.constant 0 : i32
    %c0_i32_1 = arith.constant 0 : i32
    return %arg0, %c0_i32, %c0_i32_0 : i32, i32, i32
  }
  func.func @transform_7(%arg0: i32) -> (i32, i32, i32) {
    %c0_i32 = arith.constant 0 : i32
    %c0_i32_0 = arith.constant 0 : i32
    %c0_i32_1 = arith.constant 0 : i32
    return %arg0, %c0_i32, %c0_i32_0 : i32, i32, i32
  }
}

</mosaic_0001>

<llo_original>
// kernel: tpu_custom_call.1
$region0: #{tpu_custom_call.1}
  #allocation0 [shape = 'u32[]', space=smem, size = 0x4, offset = 0x4, fixed_abs, tag = 'smem constant byte address 0x4 - core index']
  #allocation1 [shape = 'u32[72,128]{1,0:T(1,128)}', space=vmem, size = 0x9000, scoped, tag = 'internal scratch']
  %s0 = inlined_call_operand.hbm [shape: f32[4,64,256], index: 0, kind: input, shape index: {}]
  %s1 = inlined_call_operand.vmem [shape: f32[64,64], index: 1, kind: input, shape index: {}]
  %s2 = inlined_call_operand.vmem [shape: f32[64,64], index: 2, kind: input, shape index: {}]
  %s3 = inlined_call_operand.vmem [shape: f32[64,1], index: 3, kind: input, shape index: {}]
  %s4 = inlined_call_operand.hbm [shape: f32[64,64], index: 4, kind: input, shape index: {}]
  %s5 = inlined_call_operand.vmem [shape: f32[64,1], index: 5, kind: input, shape index: {}]
  %s6 = inlined_call_operand.hbm [shape: f32[4,64,256], index: 6, kind: output, shape index: {0}]
  %s7 = inlined_call_operand.vmem [shape: f32[4,64,2], index: 7, kind: output, shape index: {1}]
  %8 = xla_tuple %s6, %s7
  %s9 = sld [smem:[#allocation0]]
  $region73: #{tpu_custom_call.1} parent=0
    _
  %s11 = ssub.s32 1, %s9
  %s12 = scalar_select 0, %s11, %s9
  $region1: #{tpu_custom_call.1} parent=0
    #allocation2 [shape = 'u8[262144]{0}', space=vmem, size = 0x40000, scoped, tag = 'input window, operand 0']
    #allocation3 [shape = 's32[2]{0}', space=sflag, size = 0x8, scoped, tag = 'scoped memory for tpu_custom_call.1']
    #allocation4 [shape = 's32[2]{0}', space=sflag, size = 0x8, scoped, tag = 'scoped memory for tpu_custom_call.1']
    #allocation5 [shape = 'u8[32768]{0}', space=vmem, size = 0x8000, scoped, tag = 'input window, operand 4, single buffered']
    #allocation6 [shape = 's32[1]{0}', space=sflag, size = 0x4, scoped, tag = 'scoped memory for tpu_custom_call.1']
    #allocation7 [shape = 'u8[262144]{0}', space=vmem, size = 0x40000, scoped, tag = 'output window, operand 0']
    %13 = vsyncpa [#allocation3], 0
    %s14 = scalar_lea.sflag [#allocation3], 1
    %15 = vsyncpa %s14, 0
    %16 = vsyncpa [#allocation6], 0
    %17 = vsyncpa [#allocation4], 0
    %s18 = scalar_lea.sflag [#allocation4], 1
    %19 = vsyncpa %s18, 0
    loop: start=0, step=1, limit=4
    $region2: #{tpu_custom_call.1} parent=1 // loop_pre_header
      _
    $region3: #{tpu_custom_call.1} parent=1 // loop_header
      %s21 = sphi 0, %s25
      %p22 = scmp.ge.s32.totalorder %s21, 4
      %s31 = sphi 0, %s33
      %s34 = sphi 0, %s31
      %s35 = sphi 0, %s34
      %s51 = sphi 0, %s35
      %s55 = sphi 0, %s55
      %s57 = sphi 0, %s55
      %s58 = sphi 0, %s57
      %s72 = sphi 0, %s58
      %s76 = sphi 0, %s76
      %s78 = sphi 0, %s76
      %s79 = sphi 0, %s78
      %s93 = sphi 0, %s79
      %s97 = sphi 0, %s97
      %s99 = sphi 0, %s97
      %s100 = sphi 0, %s99
      %s114 = sphi 0, %s100
      %s118 = sphi 0, %s118
      %s120 = sphi 0, %s118
      %s121 = sphi 0, %s120
      %s135 = sphi 0, %s121
      %s139 = sphi 0, %s139
      %s141 = sphi 0, %s139
      %s142 = sphi 0, %s141
      %s156 = sphi 0, %s142
      %s162 = sphi 0, %s164
      %s165 = sphi 0, %s162
      %s166 = sphi 0, %s165
      %s182 = sphi 0, %s166
      %s188 = sphi 0, %s190
      %s191 = sphi 0, %s188
      %s192 = sphi 0, %s191
      %s208 = sphi 0, %s192
    $region4: #{tpu_custom_call.1} parent=1 // loop_header_branch
      %24 = sbr.rel (%p22) target = $region8
    $region5: #{tpu_custom_call.1} parent=1 // loop_body
      %s26 = ssub.s32 %s21, 1
      %s27 = ssub.s32 %s21, 2
      %s28 = sadd.s32 %s21, 1
      %s29 = ssub.s32 %s21, %s28
      %p30 = scmp.eq.s32.totalorder %s29, 0
      %s32 = sadd.s32 %s31, 1
      %s33 = scalar_select %p30, %s31, %s32
      %p36 = pneg %p30
      %p37 = scmp.eq.s32.totalorder %s21, 1
      %p38 = por %p36, %p37
      %p39 = scmp.ne.s32.totalorder %s31, %s34
      %p40 = scmp.eq.s32.totalorder %s21, 0
      %p41 = por %p39, %p40
      %p42 = scmp.ne.s32.totalorder %s31, %s34
      %p43 = scmp.eq.s32.totalorder %s26, 1
      %p44 = por %p42, %p43
      %p45 = scmp.ne.s32.totalorder %s34, %s35
      %p46 = scmp.eq.s32.totalorder %s26, 0
      %p47 = por %p45, %p46
      %p48 = scmp.ne.s32.totalorder %s34, %s35
      %p49 = scmp.eq.s32.totalorder %s27, 1
      %p50 = por %p48, %p49
      %p52 = scmp.ne.s32.totalorder %s35, %s51
      %p53 = scmp.eq.s32.totalorder %s27, 0
      %p54 = por %p52, %p53
      %s56 = sadd.s32 %s55, 1
      %p59 = scmp.eq.s32.totalorder %s21, 1
      %p60 = scmp.ne.s32.totalorder %s55, %s57
      %p61 = scmp.eq.s32.totalorder %s21, 0
      %p62 = por %p60, %p61
      %p63 = scmp.ne.s32.totalorder %s55, %s57
      %p64 = scmp.eq.s32.totalorder %s26, 1
      %p65 = por %p63, %p64
      %p66 = scmp.ne.s32.totalorder %s57, %s58
      %p67 = scmp.eq.s32.totalorder %s26, 0
      %p68 = por %p66, %p67
      %p69 = scmp.ne.s32.totalorder %s57, %s58
      %p70 = scmp.eq.s32.totalorder %s27, 1
      %p71 = por %p69, %p70
      %p73 = scmp.ne.s32.totalorder %s58, %s72
      %p74 = scmp.eq.s32.totalorder %s27, 0
      %p75 = por %p73, %p74
      %s77 = sadd.s32 %s76, 1
      %p80 = scmp.eq.s32.totalorder %s21, 1
      %p81 = scmp.ne.s32.totalorder %s76, %s78
      %p82 = scmp.eq.s32.totalorder %s21, 0
      %p83 = por %p81, %p82
      %p84 = scmp.ne.s32.totalorder %s76, %s78
      %p85 = scmp.eq.s32.totalorder %s26, 1
      %p86 = por %p84, %p85
      %p87 = scmp.ne.s32.totalorder %s78, %s79
      %p88 = scmp.eq.s32.totalorder %s26, 0
      %p89 = por %p87, %p88
      %p90 = scmp.ne.s32.totalorder %s78, %s79
      %p91 = scmp.eq.s32.totalorder %s27, 1
      %p92 = por %p90, %p91
      %p94 = scmp.ne.s32.totalorder %s79, %s93
      %p95 = scmp.eq.s32.totalorder %s27, 0
      %p96 = por %p94, %p95
      %s98 = sadd.s32 %s97, 1
      %p101 = scmp.eq.s32.totalorder %s21, 1
      %p102 = scmp.ne.s32.totalorder %s97, %s99
      %p103 = scmp.eq.s32.totalorder %s21, 0
      %p104 = por %p102, %p103
      %p105 = scmp.ne.s32.totalorder %s97, %s99
      %p106 = scmp.eq.s32.totalorder %s26, 1
      %p107 = por %p105, %p106
      %p108 = scmp.ne.s32.totalorder %s99, %s100
      %p109 = scmp.eq.s32.totalorder %s26, 0
      %p110 = por %p108, %p109
      %p111 = scmp.ne.s32.totalorder %s99, %s100
      %p112 = scmp.eq.s32.totalorder %s27, 1
      %p113 = por %p111, %p112
      %p115 = scmp.ne.s32.totalorder %s100, %s114
      %p116 = scmp.eq.s32.totalorder %s27, 0
      %p117 = por %p115, %p116
      %s119 = sadd.s32 %s118, 1
      %p122 = scmp.eq.s32.totalorder %s21, 1
      %p123 = scmp.ne.s32.totalorder %s118, %s120
      %p124 = scmp.eq.s32.totalorder %s21, 0
      %p125 = por %p123, %p124
      %p126 = scmp.ne.s32.totalorder %s118, %s120
      %p127 = scmp.eq.s32.totalorder %s26, 1
      %p128 = por %p126, %p127
      %p129 = scmp.ne.s32.totalorder %s120, %s121
      %p130 = scmp.eq.s32.totalorder %s26, 0
      %p131 = por %p129, %p130
      %p132 = scmp.ne.s32.totalorder %s120, %s121
      %p133 = scmp.eq.s32.totalorder %s27, 1
      %p134 = por %p132, %p133
      %p136 = scmp.ne.s32.totalorder %s121, %s135
      %p137 = scmp.eq.s32.totalorder %s27, 0
      %p138 = por %p136, %p137
      %s140 = sadd.s32 %s139, 1
      %p143 = scmp.eq.s32.totalorder %s21, 1
      %p144 = scmp.ne.s32.totalorder %s139, %s141
      %p145 = scmp.eq.s32.totalorder %s21, 0
      %p146 = por %p144, %p145
      %p147 = scmp.ne.s32.totalorder %s139, %s141
      %p148 = scmp.eq.s32.totalorder %s26, 1
      %p149 = por %p147, %p148
      %p150 = scmp.ne.s32.totalorder %s141, %s142
      %p151 = scmp.eq.s32.totalorder %s26, 0
      %p152 = por %p150, %p151
      %p153 = scmp.ne.s32.totalorder %s141, %s142
      %p154 = scmp.eq.s32.totalorder %s27, 1
      %p155 = por %p153, %p154
      %p157 = scmp.ne.s32.totalorder %s142, %s156
      %p158 = scmp.eq.s32.totalorder %s27, 0
      %p159 = por %p157, %p158
      %s160 = ssub.s32 %s21, %s28
      %p161 = scmp.eq.s32.totalorder %s160, 0
      %s163 = sadd.s32 %s162, 1
      %s164 = scalar_select %p161, %s162, %s163
      %p167 = pneg %p161
      %p168 = scmp.eq.s32.totalorder %s21, 1
      %p169 = por %p167, %p168
      %p170 = scmp.ne.s32.totalorder %s162, %s165
      %p171 = scmp.eq.s32.totalorder %s21, 0
      %p172 = por %p170, %p171
      %p173 = scmp.ne.s32.totalorder %s162, %s165
      %p174 = scmp.eq.s32.totalorder %s26, 1
      %p175 = por %p173, %p174
      %p176 = scmp.ne.s32.totalorder %s165, %s166
      %p177 = scmp.eq.s32.totalorder %s26, 0
      %p178 = por %p176, %p177
      %p179 = scmp.ne.s32.totalorder %s165, %s166
      %p180 = scmp.eq.s32.totalorder %s27, 1
      %p181 = por %p179, %p180
      %p183 = scmp.ne.s32.totalorder %s166, %s182
      %p184 = scmp.eq.s32.totalorder %s27, 0
      %p185 = por %p183, %p184
      %s186 = ssub.s32 %s21, %s28
      %p187 = scmp.eq.s32.totalorder %s186, 0
      %s189 = sadd.s32 %s188, 1
      %s190 = scalar_select %p187, %s188, %s189
      %p193 = pneg %p187
      %p194 = scmp.eq.s32.totalorder %s21, 1
      %p195 = por %p193, %p194
      %p196 = scmp.ne.s32.totalorder %s188, %s191
      %p197 = scmp.eq.s32.totalorder %s21, 0
      %p198 = por %p196, %p197
      %p199 = scmp.ne.s32.totalorder %s188, %s191
      %p200 = scmp.eq.s32.totalorder %s26, 1
      %p201 = por %p199, %p200
      %p202 = scmp.ne.s32.totalorder %s191, %s192
      %p203 = scmp.eq.s32.totalorder %s26, 0
      %p204 = por %p202, %p203
      %p205 = scmp.ne.s32.totalorder %s191, %s192
      %p206 = scmp.eq.s32.totalorder %s27, 1
      %p207 = por %p205, %p206
      %p209 = scmp.ne.s32.totalorder %s192, %s208
      %p210 = scmp.eq.s32.totalorder %s27, 0
      %p211 = por %p209, %p210
      %p212 = scmp.le.s32.totalorder 1, %s21
      %p213 = scmp.lt.s32.totalorder %s21, 3
      %p214 = pnand %p212, %p213
      %p215 = pneg %p214
      // Predicated region
      $region9: #{tpu_custom_call.1} parent=5 // pred_check
        _
      $region10: #{tpu_custom_call.1} parent=5 // pred_check_branch
        %217 = sbr.rel (%p214) target = $region12
      $region11: #{tpu_custom_call.1} parent=5 // pred_region
        %s218 = ssub.s32 %s21, 1
        // Predicated region
        $region13: #{tpu_custom_call.1} parent=11 // pred_check
          %p219 = pneg %p68
        $region14: #{tpu_custom_call.1} parent=11 // pred_check_branch
          %221 = sbr.rel (%p219) target = $region16
        $region15: #{tpu_custom_call.1} parent=11 // pred_region
          _
        $region16: #{tpu_custom_call.1} parent=11 // pred_fallthru
          _
        // Predicated region
        $region17: #{tpu_custom_call.1} parent=11 // pred_check
          %p222 = pneg %p89
        $region18: #{tpu_custom_call.1} parent=11 // pred_check_branch
          %224 = sbr.rel (%p222) target = $region20
        $region19: #{tpu_custom_call.1} parent=11 // pred_region
          _
        $region20: #{tpu_custom_call.1} parent=11 // pred_fallthru
          _
        // Predicated region
        $region21: #{tpu_custom_call.1} parent=11 // pred_check
          %p225 = pneg %p110
        $region22: #{tpu_custom_call.1} parent=11 // pred_check_branch
          %227 = sbr.rel (%p225) target = $region24
        $region23: #{tpu_custom_call.1} parent=11 // pred_region
          _
        $region24: #{tpu_custom_call.1} parent=11 // pred_fallthru
          _
        // Predicated region
        $region25: #{tpu_custom_call.1} parent=11 // pred_check
          %p228 = pneg %p131
        $region26: #{tpu_custom_call.1} parent=11 // pred_check_branch
          %230 = sbr.rel (%p228) target = $region28
        $region27: #{tpu_custom_call.1} parent=11 // pred_region
          %232 = vsyncadd [#allocation6], 0
          %s233 = sshll.u32 %s4, 4
          %s234 = int_to_ptr.hbm [resolvable:$true] %s233
          %s235 = sshll.u32 [#allocation5], 4
          %s236 = int_to_ptr.vmem [resolvable:$true] %s235
          %241 = dma.hbm_to_vmem [thread:$0]  %s234, 1024, %s236, [#allocation6], 128, 128, 8
        $region28: #{tpu_custom_call.1} parent=11 // pred_fallthru
          _
        // Predicated region
        $region29: #{tpu_custom_call.1} parent=11 // pred_check
          %p242 = pneg %p152
        $region30: #{tpu_custom_call.1} parent=11 // pred_check_branch
          %244 = sbr.rel (%p242) target = $region32
        $region31: #{tpu_custom_call.1} parent=11 // pred_region
          _
        $region32: #{tpu_custom_call.1} parent=11 // pred_fallthru
          _
      $region12: #{tpu_custom_call.1} parent=5 // pred_fallthru
        _
      %p245 = scmp.lt.s32.totalorder %s21, 2
      // Predicated region
      $region33: #{tpu_custom_call.1} parent=5 // pred_check
        %p246 = pneg %p245
      $region34: #{tpu_custom_call.1} parent=5 // pred_check_branch
        %248 = sbr.rel (%p246) target = $region36
      $region35: #{tpu_custom_call.1} parent=5 // pred_region
        // Predicated region
        $region37: #{tpu_custom_call.1} parent=35 // pred_check
          %p249 = pneg %p41
        $region38: #{tpu_custom_call.1} parent=35 // pred_check_branch
          %251 = sbr.rel (%p249) target = $region40
        $region39: #{tpu_custom_call.1} parent=35 // pred_region
          %s252 = sand.u32 %s31, 1
          %s253 = scalar_lea.sflag [#allocation3], %s252
          %s254 = sand.u32 %s31, 1
          %s255 = smul.addr %s254, 256
          %s256 = scalar_lea.vmem [#allocation2], %s255
          %s257 = smul.u32 2, %s21
          %259 = vsyncadd %s253, 0
          %s260 = smul.addr %s257, 16
          %s261 = smul.addr %s260, 8
          %s262 = scalar_lea.hbm %s0, %s261
          %s263 = sshll.u32 %s262, 4
          %s264 = int_to_ptr.hbm [resolvable:$true] %s263
          %s265 = sshll.u32 %s256, 4
          %s266 = int_to_ptr.vmem [resolvable:$true] %s265
          %271 = dma.hbm_to_vmem [thread:$0]  %s264, 4096, %s266, %s253, 256, 256, 16
        $region40: #{tpu_custom_call.1} parent=35 // pred_fallthru
          _
      $region36: #{tpu_custom_call.1} parent=5 // pred_fallthru
        _
      %p272 = scmp.le.s32.totalorder 1, %s21
      %p273 = scmp.lt.s32.totalorder %s21, 3
      %p274 = pnand %p272, %p273
      %p275 = pneg %p274
      // Predicated region
      $region41: #{tpu_custom_call.1} parent=5 // pred_check
        _
      $region42: #{tpu_custom_call.1} parent=5 // pred_check_branch
        %277 = sbr.rel (%p274) target = $region44
      $region43: #{tpu_custom_call.1} parent=5 // pred_region
        %s278 = ssub.s32 %s21, 1
        %s279 = sand.u32 %s34, 1
        %s280 = scalar_lea.sflag [#allocation3], %s279
        %s281 = sand.u32 %s34, 1
        %s282 = smul.addr %s281, 256
        %s283 = scalar_lea.vmem [#allocation2], %s282
        // Predicated region
        $region45: #{tpu_custom_call.1} parent=43 // pred_check
          %p284 = pneg %p47
        $region46: #{tpu_custom_call.1} parent=43 // pred_check_branch
          %286 = sbr.rel (%p284) target = $region48
        $region47: #{tpu_custom_call.1} parent=43 // pred_region
          %288 = dma.done %s280, 4096
        $region48: #{tpu_custom_call.1} parent=43 // pred_fallthru
          _
        // Predicated region
        $region49: #{tpu_custom_call.1} parent=43 // pred_check
          %p289 = pneg %p131
        $region50: #{tpu_custom_call.1} parent=43 // pred_check_branch
          %291 = sbr.rel (%p289) target = $region52
        $region51: #{tpu_custom_call.1} parent=43 // pred_region
          %293 = dma.done [#allocation6], 1024
        $region52: #{tpu_custom_call.1} parent=43 // pred_fallthru
          _
        %s294 = sand.u32 %s34, 1
        %s295 = scalar_lea.sflag [#allocation3], %s294
        %s296 = sand.u32 %s34, 1
        %s297 = smul.addr %s296, 256
        %s298 = scalar_lea.vmem [#allocation2], %s297
        %p299 = pneg %p47
        %p300 = pneg %p44
        %p301 = pneg %p68
        %p302 = pneg %p65
        %p303 = pneg %p89
        %p304 = pneg %p86
        %p305 = pneg %p110
        %p306 = pneg %p107
        %p307 = pneg %p131
        %p308 = pneg %p128
        %p309 = pneg %p152
        %p310 = pneg %p149
        %p311 = pneg %p178
        %p312 = pneg %p175
        %s313 = sand.u32 %s165, 1
        %s314 = scalar_lea.sflag [#allocation4], %s313
        %s315 = sand.u32 %s165, 1
        %s316 = smul.addr %s315, 256
        %s317 = scalar_lea.vmem [#allocation7], %s316
        %p318 = pneg %p204
        %p319 = pneg %p201
        %s320 = smul.u32 2, %s26
        %p321 = scmp.lt.s32.totalorder %s320, 3
        %s322 = scalar_select %p321, %s320, 3
        %s323 = smul.addr %s322, 8
        %s324 = smul.addr %s323, 8
        %s325 = scalar_lea.vmem %s7, %s324
        %s326 = smul.u32 2, %s26
        %s327 = smul.u32 2, %s26
        %s328 = smul.u32 2, %s26
        %p329 = scmp.lt.s32.totalorder %s328, 3
        %s330 = scalar_select %p329, %s328, 3
        %s331 = smul.addr %s330, 8
        %s332 = smul.addr %s331, 8
        %s333 = scalar_lea.vmem %s7, %s332
        %s334 = smul.u32 2, %s26
        %v335 = vld [vmem:[%s283] sm:$0xff]
        %v336 = vld [vmem:[%s283 + $0x8] sm:$0xff]
        %v337 = vld [vmem:[%s283 + $0x10] sm:$0xff]
        %v338 = vld [vmem:[%s283 + $0x18] sm:$0xff]
        %v339 = vld [vmem:[%s283 + $0x20] sm:$0xff]
        %v340 = vld [vmem:[%s283 + $0x28] sm:$0xff]
        %v341 = vld [vmem:[%s283 + $0x30] sm:$0xff]
        %v342 = vld [vmem:[%s283 + $0x38] sm:$0xff]
        %v343 = vld [vmem:[%s283 + $0x40] sm:$0xff]
        %v344 = vld [vmem:[%s283 + $0x48] sm:$0xff]
        %v345 = vld [vmem:[%s283 + $0x50] sm:$0xff]
        %v346 = vld [vmem:[%s283 + $0x58] sm:$0xff]
        %v347 = vld [vmem:[%s283 + $0x60] sm:$0xff]
        %v348 = vld [vmem:[%s283 + $0x68] sm:$0xff]
        %v349 = vld [vmem:[%s283 + $0x70] sm:$0xff]
        %v350 = vld [vmem:[%s283 + $0x78] sm:$0xff]
        %v351 = vld [vmem:[%s1] sm:$0xff]
        %v352 = vld [vmem:[%s1 + $0x8] sm:$0xff]
        %v353 = vld [vmem:[%s1 + $0x10] sm:$0xff]
        %v354 = vld [vmem:[%s1 + $0x18] sm:$0xff]
        %v355 = vld [vmem:[%s1 + $0x20] sm:$0xff]
        %v356 = vld [vmem:[%s1 + $0x28] sm:$0xff]
        %v357 = vld [vmem:[%s1 + $0x30] sm:$0xff]
        %v358 = vld [vmem:[%s1 + $0x38] sm:$0xff]
        %vm359 = vcmask 523264
        %v361 = vsel %vm359, %v351, 0
        %v364 = vsel %vm359, %v352, 0
        %v367 = vsel %vm359, %v353, 0
        %v370 = vsel %vm359, %v354, 0
        %v373 = vsel %vm359, %v355, 0
        %v376 = vsel %vm359, %v356, 0
        %v379 = vsel %vm359, %v357, 0
        %v382 = vsel %vm359, %v358, 0
        %384 = vmatpush.msra.mxu0 0.0
        %385 = vmatpush.msra.mxu0 0.0
        %386 = vmatpush.msra.mxu0 0.0
        %387 = vmatpush.msra.mxu0 0.0
        %388 = vmatpush.msra.mxu0 0.0
        %389 = vmatpush.msra.mxu0 0.0
        %390 = vmatpush.msra.mxu0 0.0
        %391 = vmatpush.msra.mxu0 0.0
        %392 = vmatpush.msra.mxu0 %v349
        %393 = vmatpush.msra.mxu0 %v347
        %394 = vmatpush.msra.mxu0 %v345
        %395 = vmatpush.msra.mxu0 %v343
        %396 = vmatpush.msra.mxu0 %v341
        %397 = vmatpush.msra.mxu0 %v339
        %398 = vmatpush.msra.mxu0 %v337
        %399 = vmatpush.msra.mxu0 %v335
        %400 = vmatmul.f32.gmra.mxu0 %v361
        %v401 = vpop.f32.mrf.mxu0
        %v402 = vadd.f32 0.0, %v401
        %403 = vmatmul.f32.gmra.mxu0 %v364
        %v404 = vpop.f32.mrf.mxu0
        %v405 = vadd.f32 0.0, %v404
        %406 = vmatmul.f32.gmra.mxu0 %v367
        %v407 = vpop.f32.mrf.mxu0
        %v408 = vadd.f32 0.0, %v407
        %409 = vmatmul.f32.gmra.mxu0 %v370
        %v410 = vpop.f32.mrf.mxu0
        %v411 = vadd.f32 0.0, %v410
        %412 = vmatmul.f32.gmra.mxu0 %v373
        %v413 = vpop.f32.mrf.mxu0
        %v414 = vadd.f32 0.0, %v413
        %415 = vmatmul.f32.gmra.mxu0 %v376
        %v416 = vpop.f32.mrf.mxu0
        %v417 = vadd.f32 0.0, %v416
        %418 = vmatmul.f32.gmra.mxu0 %v379
        %v419 = vpop.f32.mrf.mxu0
        %v420 = vadd.f32 0.0, %v419
        %421 = vmatmul.f32.gmra.mxu0 %v382
        %v422 = vpop.f32.mrf.mxu0
        %v423 = vadd.f32 0.0, %v422
        %424 = vdwg.mxu0
        %425 = vmatpush.msra.mxu0 0.0
        %426 = vmatpush.msra.mxu0 0.0
        %427 = vmatpush.msra.mxu0 0.0
        %428 = vmatpush.msra.mxu0 0.0
        %429 = vmatpush.msra.mxu0 0.0
        %430 = vmatpush.msra.mxu0 0.0
        %431 = vmatpush.msra.mxu0 0.0
        %432 = vmatpush.msra.mxu0 0.0
        %433 = vmatpush.msra.mxu0 %v350
        %434 = vmatpush.msra.mxu0 %v348
        %435 = vmatpush.msra.mxu0 %v346
        %436 = vmatpush.msra.mxu0 %v344
        %437 = vmatpush.msra.mxu0 %v342
        %438 = vmatpush.msra.mxu0 %v340
        %439 = vmatpush.msra.mxu0 %v338
        %440 = vmatpush.msra.mxu0 %v336
        %441 = vmatmul.f32.gmra.mxu0 %v361
        %v442 = vpop.f32.mrf.mxu0
        %v443 = vadd.f32 0.0, %v442
        %444 = vmatmul.f32.gmra.mxu0 %v364
        %v445 = vpop.f32.mrf.mxu0
        %v446 = vadd.f32 0.0, %v445
        %447 = vmatmul.f32.gmra.mxu0 %v367
        %v448 = vpop.f32.mrf.mxu0
        %v449 = vadd.f32 0.0, %v448
        %450 = vmatmul.f32.gmra.mxu0 %v370
        %v451 = vpop.f32.mrf.mxu0
        %v452 = vadd.f32 0.0, %v451
        %453 = vmatmul.f32.gmra.mxu0 %v373
        %v454 = vpop.f32.mrf.mxu0
        %v455 = vadd.f32 0.0, %v454
        %456 = vmatmul.f32.gmra.mxu0 %v376
        %v457 = vpop.f32.mrf.mxu0
        %v458 = vadd.f32 0.0, %v457
        %459 = vmatmul.f32.gmra.mxu0 %v379
        %v460 = vpop.f32.mrf.mxu0
        %v461 = vadd.f32 0.0, %v460
        %462 = vmatmul.f32.gmra.mxu0 %v382
        %v463 = vpop.f32.mrf.mxu0
        %v464 = vadd.f32 0.0, %v463
        %465 = vdwg.mxu0
        %466 = vxpose.xlu0.b32.start [1/16] %v335, 128
        %467 = vxpose.xlu0.b32.cont [2/16] %v337, 128
        %468 = vxpose.xlu0.b32.cont [3/16] %v339, 128
        %469 = vxpose.xlu0.b32.cont [4/16] %v341, 128
        %470 = vxpose.xlu0.b32.cont [5/16] %v343, 128
        %471 = vxpose.xlu0.b32.cont [6/16] %v345, 128
        %472 = vxpose.xlu0.b32.cont [7/16] %v347, 128
        %473 = vxpose.xlu0.b32.cont [8/16] %v349, 128
        %474 = vxpose.xlu0.b32.cont [9/16] 0.0, 128
        %475 = vxpose.xlu0.b32.cont [10/16] 0.0, 128
        %476 = vxpose.xlu0.b32.cont [11/16] 0.0, 128
        %477 = vxpose.xlu0.b32.cont [12/16] 0.0, 128
        %478 = vxpose.xlu0.b32.cont [13/16] 0.0, 128
        %479 = vxpose.xlu0.b32.cont [14/16] 0.0, 128
        %480 = vxpose.xlu0.b32.cont [15/16] 0.0, 128
        %481 = vxpose.xlu0.b32.end [16/16] 0.0, 128
        %v482 = vpop.trf.xlu0
        %v483 = vpop.trf.xlu0
        %v484 = vpop.trf.xlu0
        %v485 = vpop.trf.xlu0
        %v486 = vpop.trf.xlu0
        %v487 = vpop.trf.xlu0
        %v488 = vpop.trf.xlu0
        %v489 = vpop.trf.xlu0
        %v490 = vpop.trf.xlu0
        %v491 = vpop.trf.xlu0
        %v492 = vpop.trf.xlu0
        %v493 = vpop.trf.xlu0
        %v494 = vpop.trf.xlu0
        %v495 = vpop.trf.xlu0
        %v496 = vpop.trf.xlu0
        %v497 = vpop.trf.xlu0
        %498 = vxpose.xlu0.b32.start [1/16] %v336, 128
        %499 = vxpose.xlu0.b32.cont [2/16] %v338, 128
        %500 = vxpose.xlu0.b32.cont [3/16] %v340, 128
        %501 = vxpose.xlu0.b32.cont [4/16] %v342, 128
        %502 = vxpose.xlu0.b32.cont [5/16] %v344, 128
        %503 = vxpose.xlu0.b32.cont [6/16] %v346, 128
        %504 = vxpose.xlu0.b32.cont [7/16] %v348, 128
        %505 = vxpose.xlu0.b32.cont [8/16] %v350, 128
        %506 = vxpose.xlu0.b32.cont [9/16] 0.0, 128
        %507 = vxpose.xlu0.b32.cont [10/16] 0.0, 128
        %508 = vxpose.xlu0.b32.cont [11/16] 0.0, 128
        %509 = vxpose.xlu0.b32.cont [12/16] 0.0, 128
        %510 = vxpose.xlu0.b32.cont [13/16] 0.0, 128
        %511 = vxpose.xlu0.b32.cont [14/16] 0.0, 128
        %512 = vxpose.xlu0.b32.cont [15/16] 0.0, 128
        %513 = vxpose.xlu0.b32.end [16/16] 0.0, 128
        %v514 = vpop.trf.xlu0
        %v515 = vpop.trf.xlu0
        %v516 = vpop.trf.xlu0
        %v517 = vpop.trf.xlu0
        %v518 = vpop.trf.xlu0
        %v519 = vpop.trf.xlu0
        %v520 = vpop.trf.xlu0
        %v521 = vpop.trf.xlu0
        %v522 = vpop.trf.xlu0
        %v523 = vpop.trf.xlu0
        %v524 = vpop.trf.xlu0
        %v525 = vpop.trf.xlu0
        %v526 = vpop.trf.xlu0
        %v527 = vpop.trf.xlu0
        %v528 = vpop.trf.xlu0
        %v529 = vpop.trf.xlu0
        %v531 = vsel %vm359, %v482, 0
        %v534 = vsel %vm359, %v483, 0
        %v537 = vsel %vm359, %v484, 0
        %v540 = vsel %vm359, %v485, 0
        %v543 = vsel %vm359, %v486, 0
        %v546 = vsel %vm359, %v487, 0
        %v549 = vsel %vm359, %v488, 0
        %v552 = vsel %vm359, %v489, 0
        %v555 = vsel %vm359, %v490, 0
        %v558 = vsel %vm359, %v491, 0
        %v561 = vsel %vm359, %v492, 0
        %v564 = vsel %vm359, %v493, 0
        %v567 = vsel %vm359, %v494, 0
        %v570 = vsel %vm359, %v495, 0
        %v573 = vsel %vm359, %v496, 0
        %v576 = vsel %vm359, %v497, 0
        %v579 = vsel %vm359, %v514, 0
        %v582 = vsel %vm359, %v515, 0
        %v585 = vsel %vm359, %v516, 0
        %v588 = vsel %vm359, %v517, 0
        %v591 = vsel %vm359, %v518, 0
        %v594 = vsel %vm359, %v519, 0
        %v597 = vsel %vm359, %v520, 0
        %v600 = vsel %vm359, %v521, 0
        %v603 = vsel %vm359, %v522, 0
        %v606 = vsel %vm359, %v523, 0
        %v609 = vsel %vm359, %v524, 0
        %v612 = vsel %vm359, %v525, 0
        %v615 = vsel %vm359, %v526, 0
        %v618 = vsel %vm359, %v527, 0
        %v621 = vsel %vm359, %v528, 0
        %v624 = vsel %vm359, %v529, 0
        %626 = vmatpush.msra.mxu0 0.0
        %627 = vmatpush.msra.mxu0 0.0
        %628 = vmatpush.msra.mxu0 0.0
        %629 = vmatpush.msra.mxu0 0.0
        %630 = vmatpush.msra.mxu0 0.0
        %631 = vmatpush.msra.mxu0 0.0
        %632 = vmatpush.msra.mxu0 0.0
        %633 = vmatpush.msra.mxu0 0.0
        %634 = vmatpush.msra.mxu0 %v423
        %635 = vmatpush.msra.mxu0 %v420
        %636 = vmatpush.msra.mxu0 %v417
        %637 = vmatpush.msra.mxu0 %v414
        %638 = vmatpush.msra.mxu0 %v411
        %639 = vmatpush.msra.mxu0 %v408
        %640 = vmatpush.msra.mxu0 %v405
        %641 = vmatpush.msra.mxu0 %v402
        %642 = vmatmul.f32.gmra.mxu0 %v531
        %v643 = vpop.f32.mrf.mxu0
        %v644 = vadd.f32 0.0, %v643
        %645 = vmatmul.f32.gmra.mxu0 %v534
        %v646 = vpop.f32.mrf.mxu0
        %v647 = vadd.f32 0.0, %v646
        %648 = vmatmul.f32.gmra.mxu0 %v537
        %v649 = vpop.f32.mrf.mxu0
        %v650 = vadd.f32 0.0, %v649
        %651 = vmatmul.f32.gmra.mxu0 %v540
        %v652 = vpop.f32.mrf.mxu0
        %v653 = vadd.f32 0.0, %v652
        %654 = vmatmul.f32.gmra.mxu0 %v543
        %v655 = vpop.f32.mrf.mxu0
        %v656 = vadd.f32 0.0, %v655
        %657 = vmatmul.f32.gmra.mxu0 %v546
        %v658 = vpop.f32.mrf.mxu0
        %v659 = vadd.f32 0.0, %v658
        %660 = vmatmul.f32.gmra.mxu0 %v549
        %v661 = vpop.f32.mrf.mxu0
        %v662 = vadd.f32 0.0, %v661
        %663 = vmatmul.f32.gmra.mxu0 %v552
        %v664 = vpop.f32.mrf.mxu0
        %v665 = vadd.f32 0.0, %v664
        %666 = vmatmul.f32.gmra.mxu0 %v555
        %v667 = vpop.f32.mrf.mxu0
        %v668 = vadd.f32 0.0, %v667
        %669 = vmatmul.f32.gmra.mxu0 %v558
        %v670 = vpop.f32.mrf.mxu0
        %v671 = vadd.f32 0.0, %v670
        %672 = vmatmul.f32.gmra.mxu0 %v561
        %v673 = vpop.f32.mrf.mxu0
        %v674 = vadd.f32 0.0, %v673
        %675 = vmatmul.f32.gmra.mxu0 %v564
        %v676 = vpop.f32.mrf.mxu0
        %v677 = vadd.f32 0.0, %v676
        %678 = vmatmul.f32.gmra.mxu0 %v567
        %v679 = vpop.f32.mrf.mxu0
        %v680 = vadd.f32 0.0, %v679
        %681 = vmatmul.f32.gmra.mxu0 %v570
        %v682 = vpop.f32.mrf.mxu0
        %v683 = vadd.f32 0.0, %v682
        %684 = vmatmul.f32.gmra.mxu0 %v573
        %v685 = vpop.f32.mrf.mxu0
        %v686 = vadd.f32 0.0, %v685
        %687 = vmatmul.f32.gmra.mxu0 %v576
        %v688 = vpop.f32.mrf.mxu0
        %v689 = vadd.f32 0.0, %v688
        %690 = vmatmul.f32.gmra.mxu0 %v579
        %v691 = vpop.f32.mrf.mxu0
        %v692 = vadd.f32 0.0, %v691
        %693 = vmatmul.f32.gmra.mxu0 %v582
        %v694 = vpop.f32.mrf.mxu0
        %v695 = vadd.f32 0.0, %v694
        %696 = vmatmul.f32.gmra.mxu0 %v585
        %v697 = vpop.f32.mrf.mxu0
        %v698 = vadd.f32 0.0, %v697
        %699 = vmatmul.f32.gmra.mxu0 %v588
        %v700 = vpop.f32.mrf.mxu0
        %v701 = vadd.f32 0.0, %v700
        %702 = vmatmul.f32.gmra.mxu0 %v591
        %v703 = vpop.f32.mrf.mxu0
        %v704 = vadd.f32 0.0, %v703
        %705 = vmatmul.f32.gmra.mxu0 %v594
        %v706 = vpop.f32.mrf.mxu0
        %v707 = vadd.f32 0.0, %v706
        %708 = vmatmul.f32.gmra.mxu0 %v597
        %v709 = vpop.f32.mrf.mxu0
        %v710 = vadd.f32 0.0, %v709
        %711 = vmatmul.f32.gmra.mxu0 %v600
        %v712 = vpop.f32.mrf.mxu0
        %v713 = vadd.f32 0.0, %v712
        %714 = vmatmul.f32.gmra.mxu0 %v603
        %v715 = vpop.f32.mrf.mxu0
        %v716 = vadd.f32 0.0, %v715
        %717 = vmatmul.f32.gmra.mxu0 %v606
        %v718 = vpop.f32.mrf.mxu0
        %v719 = vadd.f32 0.0, %v718
        %720 = vmatmul.f32.gmra.mxu0 %v609
        %v721 = vpop.f32.mrf.mxu0
        %v722 = vadd.f32 0.0, %v721
        %723 = vmatmul.f32.gmra.mxu0 %v612
        %v724 = vpop.f32.mrf.mxu0
        %v725 = vadd.f32 0.0, %v724
        %726 = vmatmul.f32.gmra.mxu0 %v615
        %v727 = vpop.f32.mrf.mxu0
        %v728 = vadd.f32 0.0, %v727
        %729 = vmatmul.f32.gmra.mxu0 %v618
        %v730 = vpop.f32.mrf.mxu0
        %v731 = vadd.f32 0.0, %v730
        %732 = vmatmul.f32.gmra.mxu0 %v621
        %v733 = vpop.f32.mrf.mxu0
        %v734 = vadd.f32 0.0, %v733
        %735 = vmatmul.f32.gmra.mxu0 %v624
        %v736 = vpop.f32.mrf.mxu0
        %v737 = vadd.f32 0.0, %v736
        %738 = vdwg.mxu0
        %739 = vmatpush.msra.mxu0 0.0
        %740 = vmatpush.msra.mxu0 0.0
        %741 = vmatpush.msra.mxu0 0.0
        %742 = vmatpush.msra.mxu0 0.0
        %743 = vmatpush.msra.mxu0 0.0
        %744 = vmatpush.msra.mxu0 0.0
        %745 = vmatpush.msra.mxu0 0.0
        %746 = vmatpush.msra.mxu0 0.0
        %747 = vmatpush.msra.mxu0 %v464
        %748 = vmatpush.msra.mxu0 %v461
        %749 = vmatpush.msra.mxu0 %v458
        %750 = vmatpush.msra.mxu0 %v455
        %751 = vmatpush.msra.mxu0 %v452
        %752 = vmatpush.msra.mxu0 %v449
        %753 = vmatpush.msra.mxu0 %v446
        %754 = vmatpush.msra.mxu0 %v443
        %755 = vmatmul.f32.gmra.mxu0 %v531
        %v756 = vpop.f32.mrf.mxu0
        %v757 = vadd.f32 0.0, %v756
        %758 = vmatmul.f32.gmra.mxu0 %v534
        %v759 = vpop.f32.mrf.mxu0
        %v760 = vadd.f32 0.0, %v759
        %761 = vmatmul.f32.gmra.mxu0 %v537
        %v762 = vpop.f32.mrf.mxu0
        %v763 = vadd.f32 0.0, %v762
        %764 = vmatmul.f32.gmra.mxu0 %v540
        %v765 = vpop.f32.mrf.mxu0
        %v766 = vadd.f32 0.0, %v765
        %767 = vmatmul.f32.gmra.mxu0 %v543
        %v768 = vpop.f32.mrf.mxu0
        %v769 = vadd.f32 0.0, %v768
        %770 = vmatmul.f32.gmra.mxu0 %v546
        %v771 = vpop.f32.mrf.mxu0
        %v772 = vadd.f32 0.0, %v771
        %773 = vmatmul.f32.gmra.mxu0 %v549
        %v774 = vpop.f32.mrf.mxu0
        %v775 = vadd.f32 0.0, %v774
        %776 = vmatmul.f32.gmra.mxu0 %v552
        %v777 = vpop.f32.mrf.mxu0
        %v778 = vadd.f32 0.0, %v777
        %779 = vmatmul.f32.gmra.mxu0 %v555
        %v780 = vpop.f32.mrf.mxu0
        %v781 = vadd.f32 0.0, %v780
        %782 = vmatmul.f32.gmra.mxu0 %v558
        %v783 = vpop.f32.mrf.mxu0
        %v784 = vadd.f32 0.0, %v783
        %785 = vmatmul.f32.gmra.mxu0 %v561
        %v786 = vpop.f32.mrf.mxu0
        %v787 = vadd.f32 0.0, %v786
        %788 = vmatmul.f32.gmra.mxu0 %v564
        %v789 = vpop.f32.mrf.mxu0
        %v790 = vadd.f32 0.0, %v789
        %791 = vmatmul.f32.gmra.mxu0 %v567
        %v792 = vpop.f32.mrf.mxu0
        %v793 = vadd.f32 0.0, %v792
        %794 = vmatmul.f32.gmra.mxu0 %v570
        %v795 = vpop.f32.mrf.mxu0
        %v796 = vadd.f32 0.0, %v795
        %797 = vmatmul.f32.gmra.mxu0 %v573
        %v798 = vpop.f32.mrf.mxu0
        %v799 = vadd.f32 0.0, %v798
        %800 = vmatmul.f32.gmra.mxu0 %v576
        %v801 = vpop.f32.mrf.mxu0
        %v802 = vadd.f32 0.0, %v801
        %803 = vmatmul.f32.gmra.mxu0 %v579
        %v804 = vpop.f32.mrf.mxu0
        %v805 = vadd.f32 0.0, %v804
        %806 = vmatmul.f32.gmra.mxu0 %v582
        %v807 = vpop.f32.mrf.mxu0
        %v808 = vadd.f32 0.0, %v807
        %809 = vmatmul.f32.gmra.mxu0 %v585
        %v810 = vpop.f32.mrf.mxu0
        %v811 = vadd.f32 0.0, %v810
        %812 = vmatmul.f32.gmra.mxu0 %v588
        %v813 = vpop.f32.mrf.mxu0
        %v814 = vadd.f32 0.0, %v813
        %815 = vmatmul.f32.gmra.mxu0 %v591
        %v816 = vpop.f32.mrf.mxu0
        %v817 = vadd.f32 0.0, %v816
        %818 = vmatmul.f32.gmra.mxu0 %v594
        %v819 = vpop.f32.mrf.mxu0
        %v820 = vadd.f32 0.0, %v819
        %821 = vmatmul.f32.gmra.mxu0 %v597
        %v822 = vpop.f32.mrf.mxu0
        %v823 = vadd.f32 0.0, %v822
        %824 = vmatmul.f32.gmra.mxu0 %v600
        %v825 = vpop.f32.mrf.mxu0
        %v826 = vadd.f32 0.0, %v825
        %827 = vmatmul.f32.gmra.mxu0 %v603
        %v828 = vpop.f32.mrf.mxu0
        %v829 = vadd.f32 0.0, %v828
        %830 = vmatmul.f32.gmra.mxu0 %v606
        %v831 = vpop.f32.mrf.mxu0
        %v832 = vadd.f32 0.0, %v831
        %833 = vmatmul.f32.gmra.mxu0 %v609
        %v834 = vpop.f32.mrf.mxu0
        %v835 = vadd.f32 0.0, %v834
        %836 = vmatmul.f32.gmra.mxu0 %v612
        %v837 = vpop.f32.mrf.mxu0
        %v838 = vadd.f32 0.0, %v837
        %839 = vmatmul.f32.gmra.mxu0 %v615
        %v840 = vpop.f32.mrf.mxu0
        %v841 = vadd.f32 0.0, %v840
        %842 = vmatmul.f32.gmra.mxu0 %v618
        %v843 = vpop.f32.mrf.mxu0
        %v844 = vadd.f32 0.0, %v843
        %845 = vmatmul.f32.gmra.mxu0 %v621
        %v846 = vpop.f32.mrf.mxu0
        %v847 = vadd.f32 0.0, %v846
        %848 = vmatmul.f32.gmra.mxu0 %v624
        %v849 = vpop.f32.mrf.mxu0
        %v850 = vadd.f32 0.0, %v849
        %851 = vdwg.mxu0
        %v852 = vmax.f32 %v644, %v757
        %853 = vmax.xlane.f32.xlu0 %v852
        %v854 = vpop.xlane.xlu0 %853
        %v855 = vmax.f32 %v647, %v760
        %856 = vmax.xlane.f32.xlu0 %v855
        %v857 = vpop.xlane.xlu0 %856
        %v858 = vmax.f32 %v650, %v763
        %859 = vmax.xlane.f32.xlu0 %v858
        %v860 = vpop.xlane.xlu0 %859
        %v861 = vmax.f32 %v653, %v766
        %862 = vmax.xlane.f32.xlu0 %v861
        %v863 = vpop.xlane.xlu0 %862
        %v864 = vmax.f32 %v656, %v769
        %865 = vmax.xlane.f32.xlu0 %v864
        %v866 = vpop.xlane.xlu0 %865
        %v867 = vmax.f32 %v659, %v772
        %868 = vmax.xlane.f32.xlu0 %v867
        %v869 = vpop.xlane.xlu0 %868
        %v870 = vmax.f32 %v662, %v775
        %871 = vmax.xlane.f32.xlu0 %v870
        %v872 = vpop.xlane.xlu0 %871
        %v873 = vmax.f32 %v665, %v778
        %874 = vmax.xlane.f32.xlu0 %v873
        %v875 = vpop.xlane.xlu0 %874
        %v876 = vmax.f32 %v668, %v781
        %877 = vmax.xlane.f32.xlu0 %v876
        %v878 = vpop.xlane.xlu0 %877
        %v879 = vmax.f32 %v671, %v784
        %880 = vmax.xlane.f32.xlu0 %v879
        %v881 = vpop.xlane.xlu0 %880
        %v882 = vmax.f32 %v674, %v787
        %883 = vmax.xlane.f32.xlu0 %v882
        %v884 = vpop.xlane.xlu0 %883
        %v885 = vmax.f32 %v677, %v790
        %886 = vmax.xlane.f32.xlu0 %v885
        %v887 = vpop.xlane.xlu0 %886
        %v888 = vmax.f32 %v680, %v793
        %889 = vmax.xlane.f32.xlu0 %v888
        %v890 = vpop.xlane.xlu0 %889
        %v891 = vmax.f32 %v683, %v796
        %892 = vmax.xlane.f32.xlu0 %v891
        %v893 = vpop.xlane.xlu0 %892
        %v894 = vmax.f32 %v686, %v799
        %895 = vmax.xlane.f32.xlu0 %v894
        %v896 = vpop.xlane.xlu0 %895
        %v897 = vmax.f32 %v689, %v802
        %898 = vmax.xlane.f32.xlu0 %v897
        %v899 = vpop.xlane.xlu0 %898
        %v900 = vmax.f32 %v692, %v805
        %901 = vmax.xlane.f32.xlu0 %v900
        %v902 = vpop.xlane.xlu0 %901
        %v903 = vmax.f32 %v695, %v808
        %904 = vmax.xlane.f32.xlu0 %v903
        %v905 = vpop.xlane.xlu0 %904
        %v906 = vmax.f32 %v698, %v811
        %907 = vmax.xlane.f32.xlu0 %v906
        %v908 = vpop.xlane.xlu0 %907
        %v909 = vmax.f32 %v701, %v814
        %910 = vmax.xlane.f32.xlu0 %v909
        %v911 = vpop.xlane.xlu0 %910
        %v912 = vmax.f32 %v704, %v817
        %913 = vmax.xlane.f32.xlu0 %v912
        %v914 = vpop.xlane.xlu0 %913
        %v915 = vmax.f32 %v707, %v820
        %916 = vmax.xlane.f32.xlu0 %v915
        %v917 = vpop.xlane.xlu0 %916
        %v918 = vmax.f32 %v710, %v823
        %919 = vmax.xlane.f32.xlu0 %v918
        %v920 = vpop.xlane.xlu0 %919
        %v921 = vmax.f32 %v713, %v826
        %922 = vmax.xlane.f32.xlu0 %v921
        %v923 = vpop.xlane.xlu0 %922
        %v924 = vmax.f32 %v716, %v829
        %925 = vmax.xlane.f32.xlu0 %v924
        %v926 = vpop.xlane.xlu0 %925
        %v927 = vmax.f32 %v719, %v832
        %928 = vmax.xlane.f32.xlu0 %v927
        %v929 = vpop.xlane.xlu0 %928
        %v930 = vmax.f32 %v722, %v835
        %931 = vmax.xlane.f32.xlu0 %v930
        %v932 = vpop.xlane.xlu0 %931
        %v933 = vmax.f32 %v725, %v838
        %934 = vmax.xlane.f32.xlu0 %v933
        %v935 = vpop.xlane.xlu0 %934
        %v936 = vmax.f32 %v728, %v841
        %937 = vmax.xlane.f32.xlu0 %v936
        %v938 = vpop.xlane.xlu0 %937
        %v939 = vmax.f32 %v731, %v844
        %940 = vmax.xlane.f32.xlu0 %v939
        %v941 = vpop.xlane.xlu0 %940
        %v942 = vmax.f32 %v734, %v847
        %943 = vmax.xlane.f32.xlu0 %v942
        %v944 = vpop.xlane.xlu0 %943
        %v945 = vmax.f32 %v737, %v850
        %946 = vmax.xlane.f32.xlu0 %v945
        %v947 = vpop.xlane.xlu0 %946
        %v948 = vmax.f32 %v854, %v866
        %v949 = vmax.f32 %v857, %v869
        %v950 = vmax.f32 %v860, %v872
        %v951 = vmax.f32 %v863, %v875
        %v952 = vmax.f32 %v948, %v878
        %v953 = vmax.f32 %v949, %v881
        %v954 = vmax.f32 %v950, %v884
        %v955 = vmax.f32 %v951, %v887
        %v956 = vmax.f32 %v952, %v890
        %v957 = vmax.f32 %v953, %v893
        %v958 = vmax.f32 %v954, %v896
        %v959 = vmax.f32 %v955, %v899
        %v960 = vmax.f32 %v956, %v902
        %v961 = vmax.f32 %v957, %v905
        %v962 = vmax.f32 %v958, %v908
        %v963 = vmax.f32 %v959, %v911
        %v964 = vmax.f32 %v960, %v914
        %v965 = vmax.f32 %v961, %v917
        %v966 = vmax.f32 %v962, %v920
        %v967 = vmax.f32 %v963, %v923
        %v968 = vmax.f32 %v964, %v926
        %v969 = vmax.f32 %v965, %v929
        %v970 = vmax.f32 %v966, %v932
        %v971 = vmax.f32 %v967, %v935
        %v972 = vmax.f32 %v968, %v938
        %v973 = vmax.f32 %v969, %v941
        %v974 = vmax.f32 %v970, %v944
        %v975 = vmax.f32 %v971, %v947
        %v976 = vmax.f32 %v972, %v973
        %v977 = vmax.f32 %v974, %v975
        %v978 = vmax.f32 %v976, %v977
        %v979 = vrot.slane %v978, 4
        %v980 = vmax.f32 %v978, %v979
        %v981 = vrot.slane %v980, 2
        %v982 = vmax.f32 %v980, %v981
        %v983 = vrot.slane %v982, 1
        %v984 = vmax.f32 %v982, %v983
        %v985 = vsub.f32 %v644, %v984
        %v986 = vsub.f32 %v757, %v984
        %v987 = vsub.f32 %v647, %v984
        %v988 = vsub.f32 %v760, %v984
        %v989 = vsub.f32 %v650, %v984
        %v990 = vsub.f32 %v763, %v984
        %v991 = vsub.f32 %v653, %v984
        %v992 = vsub.f32 %v766, %v984
        %v993 = vsub.f32 %v656, %v984
        %v994 = vsub.f32 %v769, %v984
        %v995 = vsub.f32 %v659, %v984
        %v996 = vsub.f32 %v772, %v984
        %v997 = vsub.f32 %v662, %v984
        %v998 = vsub.f32 %v775, %v984
        %v999 = vsub.f32 %v665, %v984
        %v1000 = vsub.f32 %v778, %v984
        %v1001 = vsub.f32 %v668, %v984
        %v1002 = vsub.f32 %v781, %v984
        %v1003 = vsub.f32 %v671, %v984
        %v1004 = vsub.f32 %v784, %v984
        %v1005 = vsub.f32 %v674, %v984
        %v1006 = vsub.f32 %v787, %v984
        %v1007 = vsub.f32 %v677, %v984
        %v1008 = vsub.f32 %v790, %v984
        %v1009 = vsub.f32 %v680, %v984
        %v1010 = vsub.f32 %v793, %v984
        %v1011 = vsub.f32 %v683, %v984
        %v1012 = vsub.f32 %v796, %v984
        %v1013 = vsub.f32 %v686, %v984
        %v1014 = vsub.f32 %v799, %v984
        %v1015 = vsub.f32 %v689, %v984
        %v1016 = vsub.f32 %v802, %v984
        %v1017 = vsub.f32 %v692, %v984
        %v1018 = vsub.f32 %v805, %v984
        %v1019 = vsub.f32 %v695, %v984
        %v1020 = vsub.f32 %v808, %v984
        %v1021 = vsub.f32 %v698, %v984
        %v1022 = vsub.f32 %v811, %v984
        %v1023 = vsub.f32 %v701, %v984
        %v1024 = vsub.f32 %v814, %v984
        %v1025 = vsub.f32 %v704, %v984
        %v1026 = vsub.f32 %v817, %v984
        %v1027 = vsub.f32 %v707, %v984
        %v1028 = vsub.f32 %v820, %v984
        %v1029 = vsub.f32 %v710, %v984
        %v1030 = vsub.f32 %v823, %v984
        %v1031 = vsub.f32 %v713, %v984
        %v1032 = vsub.f32 %v826, %v984
        %v1033 = vsub.f32 %v716, %v984
        %v1034 = vsub.f32 %v829, %v984
        %v1035 = vsub.f32 %v719, %v984
        %v1036 = vsub.f32 %v832, %v984
        %v1037 = vsub.f32 %v722, %v984
        %v1038 = vsub.f32 %v835, %v984
        %v1039 = vsub.f32 %v725, %v984
        %v1040 = vsub.f32 %v838, %v984
        %v1041 = vsub.f32 %v728, %v984
        %v1042 = vsub.f32 %v841, %v984
        %v1043 = vsub.f32 %v731, %v984
        %v1044 = vsub.f32 %v844, %v984
        %v1045 = vsub.f32 %v734, %v984
        %v1046 = vsub.f32 %v847, %v984
        %v1047 = vsub.f32 %v737, %v984
        %v1048 = vsub.f32 %v850, %v984
        %v1049 = vmul.f32 %v985, 1.442695
        %v1050 = vpow.pop %v1049
        %v1051 = vmul.f32 %v986, 1.442695
        %v1052 = vpow.pop %v1051
        %v1053 = vmul.f32 %v987, 1.442695
        %v1054 = vpow.pop %v1053
        %v1055 = vmul.f32 %v988, 1.442695
        %v1056 = vpow.pop %v1055
        %v1057 = vmul.f32 %v989, 1.442695
        %v1058 = vpow.pop %v1057
        %v1059 = vmul.f32 %v990, 1.442695
        %v1060 = vpow.pop %v1059
        %v1061 = vmul.f32 %v991, 1.442695
        %v1062 = vpow.pop %v1061
        %v1063 = vmul.f32 %v992, 1.442695
        %v1064 = vpow.pop %v1063
        %v1065 = vmul.f32 %v993, 1.442695
        %v1066 = vpow.pop %v1065
        %v1067 = vmul.f32 %v994, 1.442695
        %v1068 = vpow.pop %v1067
        %v1069 = vmul.f32 %v995, 1.442695
        %v1070 = vpow.pop %v1069
        %v1071 = vmul.f32 %v996, 1.442695
        %v1072 = vpow.pop %v1071
        %v1073 = vmul.f32 %v997, 1.442695
        %v1074 = vpow.pop %v1073
        %v1075 = vmul.f32 %v998, 1.442695
        %v1076 = vpow.pop %v1075
        %v1077 = vmul.f32 %v999, 1.442695
        %v1078 = vpow.pop %v1077
        %v1079 = vmul.f32 %v1000, 1.442695
        %v1080 = vpow.pop %v1079
        %v1081 = vmul.f32 %v1001, 1.442695
        %v1082 = vpow.pop %v1081
        %v1083 = vmul.f32 %v1002, 1.442695
        %v1084 = vpow.pop %v1083
        %v1085 = vmul.f32 %v1003, 1.442695
        %v1086 = vpow.pop %v1085
        %v1087 = vmul.f32 %v1004, 1.442695
        %v1088 = vpow.pop %v1087
        %v1089 = vmul.f32 %v1005, 1.442695
        %v1090 = vpow.pop %v1089
        %v1091 = vmul.f32 %v1006, 1.442695
        %v1092 = vpow.pop %v1091
        %v1093 = vmul.f32 %v1007, 1.442695
        %v1094 = vpow.pop %v1093
        %v1095 = vmul.f32 %v1008, 1.442695
        %v1096 = vpow.pop %v1095
        %v1097 = vmul.f32 %v1009, 1.442695
        %v1098 = vpow.pop %v1097
        %v1099 = vmul.f32 %v1010, 1.442695
        %v1100 = vpow.pop %v1099
        %v1101 = vmul.f32 %v1011, 1.442695
        %v1102 = vpow.pop %v1101
        %v1103 = vmul.f32 %v1012, 1.442695
        %v1104 = vpow.pop %v1103
        %v1105 = vmul.f32 %v1013, 1.442695
        %v1106 = vpow.pop %v1105
        %v1107 = vmul.f32 %v1014, 1.442695
        %v1108 = vpow.pop %v1107
        %v1109 = vmul.f32 %v1015, 1.442695
        %v1110 = vpow.pop %v1109
        %v1111 = vmul.f32 %v1016, 1.442695
        %v1112 = vpow.pop %v1111
        %v1113 = vmul.f32 %v1017, 1.442695
        %v1114 = vpow.pop %v1113
        %v1115 = vmul.f32 %v1018, 1.442695
        %v1116 = vpow.pop %v1115
        %v1117 = vmul.f32 %v1019, 1.442695
        %v1118 = vpow.pop %v1117
        %v1119 = vmul.f32 %v1020, 1.442695
        %v1120 = vpow.pop %v1119
        %v1121 = vmul.f32 %v1021, 1.442695
        %v1122 = vpow.pop %v1121
        %v1123 = vmul.f32 %v1022, 1.442695
        %v1124 = vpow.pop %v1123
        %v1125 = vmul.f32 %v1023, 1.442695
        %v1126 = vpow.pop %v1125
        %v1127 = vmul.f32 %v1024, 1.442695
        %v1128 = vpow.pop %v1127
        %v1129 = vmul.f32 %v1025, 1.442695
        %v1130 = vpow.pop %v1129
        %v1131 = vmul.f32 %v1026, 1.442695
        %v1132 = vpow.pop %v1131
        %v1133 = vmul.f32 %v1027, 1.442695
        %v1134 = vpow.pop %v1133
        %v1135 = vmul.f32 %v1028, 1.442695
        %v1136 = vpow.pop %v1135
        %v1137 = vmul.f32 %v1029, 1.442695
        %v1138 = vpow.pop %v1137
        %v1139 = vmul.f32 %v1030, 1.442695
        %v1140 = vpow.pop %v1139
        %v1141 = vmul.f32 %v1031, 1.442695
        %v1142 = vpow.pop %v1141
        %v1143 = vmul.f32 %v1032, 1.442695
        %v1144 = vpow.pop %v1143
        %v1145 = vmul.f32 %v1033, 1.442695
        %v1146 = vpow.pop %v1145
        %v1147 = vmul.f32 %v1034, 1.442695
        %v1148 = vpow.pop %v1147
        %v1149 = vmul.f32 %v1035, 1.442695
        %v1150 = vpow.pop %v1149
        %v1151 = vmul.f32 %v1036, 1.442695
        %v1152 = vpow.pop %v1151
        %v1153 = vmul.f32 %v1037, 1.442695
        %v1154 = vpow.pop %v1153
        %v1155 = vmul.f32 %v1038, 1.442695
        %v1156 = vpow.pop %v1155
        %v1157 = vmul.f32 %v1039, 1.442695
        %v1158 = vpow.pop %v1157
        %v1159 = vmul.f32 %v1040, 1.442695
        %v1160 = vpow.pop %v1159
        %v1161 = vmul.f32 %v1041, 1.442695
        %v1162 = vpow.pop %v1161
        %v1163 = vmul.f32 %v1042, 1.442695
        %v1164 = vpow.pop %v1163
        %v1165 = vmul.f32 %v1043, 1.442695
        %v1166 = vpow.pop %v1165
        %v1167 = vmul.f32 %v1044, 1.442695
        %v1168 = vpow.pop %v1167
        %v1169 = vmul.f32 %v1045, 1.442695
        %v1170 = vpow.pop %v1169
        %v1171 = vmul.f32 %v1046, 1.442695
        %v1172 = vpow.pop %v1171
        %v1173 = vmul.f32 %v1047, 1.442695
        %v1174 = vpow.pop %v1173
        %v1175 = vmul.f32 %v1048, 1.442695
        %v1176 = vpow.pop %v1175
        %v1177 = vadd.f32 %v1050, %v1054
        %v1178 = vadd.f32 %v1177, %v1058
        %v1179 = vadd.f32 %v1178, %v1062
        %v1180 = vadd.f32 %v1179, %v1066
        %v1181 = vadd.f32 %v1180, %v1070
        %v1182 = vadd.f32 %v1181, %v1074
        %v1183 = vadd.f32 %v1182, %v1078
        %v1184 = vadd.f32 %v1183, %v1082
        %v1185 = vadd.f32 %v1184, %v1086
        %v1186 = vadd.f32 %v1185, %v1090
        %v1187 = vadd.f32 %v1186, %v1094
        %v1188 = vadd.f32 %v1187, %v1098
        %v1189 = vadd.f32 %v1188, %v1102
        %v1190 = vadd.f32 %v1189, %v1106
        %v1191 = vadd.f32 %v1190, %v1110
        %v1192 = vadd.f32 %v1191, %v1114
        %v1193 = vadd.f32 %v1192, %v1118
        %v1194 = vadd.f32 %v1193, %v1122
        %v1195 = vadd.f32 %v1194, %v1126
        %v1196 = vadd.f32 %v1195, %v1130
        %v1197 = vadd.f32 %v1196, %v1134
        %v1198 = vadd.f32 %v1197, %v1138
        %v1199 = vadd.f32 %v1198, %v1142
        %v1200 = vadd.f32 %v1199, %v1146
        %v1201 = vadd.f32 %v1200, %v1150
        %v1202 = vadd.f32 %v1201, %v1154
        %v1203 = vadd.f32 %v1202, %v1158
        %v1204 = vadd.f32 %v1203, %v1162
        %v1205 = vadd.f32 %v1204, %v1166
        %v1206 = vadd.f32 %v1205, %v1170
        %v1207 = vadd.f32 %v1206, %v1174
        %v1208 = vrot.slane %v1207, 4
        %v1209 = vadd.f32 %v1207, %v1208
        %v1210 = vrot.slane %v1209, 2
        %v1211 = vadd.f32 %v1209, %v1210
        %v1212 = vrot.slane %v1211, 1
        %v1213 = vadd.f32 %v1211, %v1212
        %v1214 = vadd.f32 %v1052, %v1056
        %v1215 = vadd.f32 %v1214, %v1060
        %v1216 = vadd.f32 %v1215, %v1064
        %v1217 = vadd.f32 %v1216, %v1068
        %v1218 = vadd.f32 %v1217, %v1072
        %v1219 = vadd.f32 %v1218, %v1076
        %v1220 = vadd.f32 %v1219, %v1080
        %v1221 = vadd.f32 %v1220, %v1084
        %v1222 = vadd.f32 %v1221, %v1088
        %v1223 = vadd.f32 %v1222, %v1092
        %v1224 = vadd.f32 %v1223, %v1096
        %v1225 = vadd.f32 %v1224, %v1100
        %v1226 = vadd.f32 %v1225, %v1104
        %v1227 = vadd.f32 %v1226, %v1108
        %v1228 = vadd.f32 %v1227, %v1112
        %v1229 = vadd.f32 %v1228, %v1116
        %v1230 = vadd.f32 %v1229, %v1120
        %v1231 = vadd.f32 %v1230, %v1124
        %v1232 = vadd.f32 %v1231, %v1128
        %v1233 = vadd.f32 %v1232, %v1132
        %v1234 = vadd.f32 %v1233, %v1136
        %v1235 = vadd.f32 %v1234, %v1140
        %v1236 = vadd.f32 %v1235, %v1144
        %v1237 = vadd.f32 %v1236, %v1148
        %v1238 = vadd.f32 %v1237, %v1152
        %v1239 = vadd.f32 %v1238, %v1156
        %v1240 = vadd.f32 %v1239, %v1160
        %v1241 = vadd.f32 %v1240, %v1164
        %v1242 = vadd.f32 %v1241, %v1168
        %v1243 = vadd.f32 %v1242, %v1172
        %v1244 = vadd.f32 %v1243, %v1176
        %v1245 = vrot.slane %v1244, 4
        %v1246 = vadd.f32 %v1244, %v1245
        %v1247 = vrot.slane %v1246, 2
        %v1248 = vadd.f32 %v1246, %v1247
        %v1249 = vrot.slane %v1248, 1
        %v1250 = vadd.f32 %v1248, %v1249
        %v1251 = vrcp.pop %v1213
        %v1252 = vrcp.pop %v1250
        %v1253 = vmul.f32 %v1213, %v1251
        %v1254 = vmul.f32 %v1250, %v1252
        %v1255 = vsub.f32 2.0, %v1253
        %v1256 = vsub.f32 2.0, %v1254
        %v1257 = vmul.f32 %v1251, %v1255
        %v1258 = vmul.f32 %v1252, %v1256
        %v1259 = vpack.c.bf16 %v1054, %v1050
        %v1260 = vpack.c.bf16 %v1056, %v1052
        %v1261 = vpack.c.bf16 %v1062, %v1058
        %v1262 = vpack.c.bf16 %v1064, %v1060
        %v1263 = vpack.c.bf16 %v1070, %v1066
        %v1264 = vpack.c.bf16 %v1072, %v1068
        %v1265 = vpack.c.bf16 %v1078, %v1074
        %v1266 = vpack.c.bf16 %v1080, %v1076
        %v1267 = vpack.c.bf16 %v1086, %v1082
        %v1268 = vpack.c.bf16 %v1088, %v1084
        %v1269 = vpack.c.bf16 %v1094, %v1090
        %v1270 = vpack.c.bf16 %v1096, %v1092
        %v1271 = vpack.c.bf16 %v1102, %v1098
        %v1272 = vpack.c.bf16 %v1104, %v1100
        %v1273 = vpack.c.bf16 %v1110, %v1106
        %v1274 = vpack.c.bf16 %v1112, %v1108
        %v1275 = vpack.c.bf16 %v1118, %v1114
        %v1276 = vpack.c.bf16 %v1120, %v1116
        %v1277 = vpack.c.bf16 %v1126, %v1122
        %v1278 = vpack.c.bf16 %v1128, %v1124
        %v1279 = vpack.c.bf16 %v1134, %v1130
        %v1280 = vpack.c.bf16 %v1136, %v1132
        %v1281 = vpack.c.bf16 %v1142, %v1138
        %v1282 = vpack.c.bf16 %v1144, %v1140
        %v1283 = vpack.c.bf16 %v1150, %v1146
        %v1284 = vpack.c.bf16 %v1152, %v1148
        %v1285 = vpack.c.bf16 %v1158, %v1154
        %v1286 = vpack.c.bf16 %v1160, %v1156
        %v1287 = vpack.c.bf16 %v1166, %v1162
        %v1288 = vpack.c.bf16 %v1168, %v1164
        %v1289 = vpack.c.bf16 %v1174, %v1170
        %v1290 = vpack.c.bf16 %v1176, %v1172
        %v1291 = vpack.c.bf16 %v1257, %v1257
        %v1292 = vpack.c.bf16 %v1258, %v1258
        %1293 = vmatpush.bf16.msra.mxu0 %v1273
        %1294 = vmatpush.bf16.msra.mxu0 %v1271
        %1295 = vmatpush.bf16.msra.mxu0 %v1269
        %1296 = vmatpush.bf16.msra.mxu0 %v1267
        %1297 = vmatpush.bf16.msra.mxu0 %v1265
        %1298 = vmatpush.bf16.msra.mxu0 %v1263
        %1299 = vmatpush.bf16.msra.mxu0 %v1261
        %1300 = vmatpush.bf16.msra.mxu0 %v1259
        %1301 = vmatmul.bf16.gmra.mxu0 %v1291
        %v1302 = vpop.f32.mrf.mxu0
        %v1303 = vadd.f32 1e-09, %v1302
        %v1304 = vpop.f32.mrf.mxu0
        %1305 = vdwg.mxu0
        %1306 = vmatpush.bf16.msra.mxu0 %v1289
        %1307 = vmatpush.bf16.msra.mxu0 %v1287
        %1308 = vmatpush.bf16.msra.mxu0 %v1285
        %1309 = vmatpush.bf16.msra.mxu0 %v1283
        %1310 = vmatpush.bf16.msra.mxu0 %v1281
        %1311 = vmatpush.bf16.msra.mxu0 %v1279
        %1312 = vmatpush.bf16.msra.mxu0 %v1277
        %1313 = vmatpush.bf16.msra.mxu0 %v1275
        %1314 = vmatmul.bf16.gmra.mxu0 %v1292
        %v1315 = vpop.f32.mrf.mxu0
        %v1316 = vadd.f32 %v1303, %v1315
        %v1317 = vpop.f32.mrf.mxu0
        %1318 = vdwg.mxu0
        %1319 = vmatpush.bf16.msra.mxu0 %v1274
        %1320 = vmatpush.bf16.msra.mxu0 %v1272
        %1321 = vmatpush.bf16.msra.mxu0 %v1270
        %1322 = vmatpush.bf16.msra.mxu0 %v1268
        %1323 = vmatpush.bf16.msra.mxu0 %v1266
        %1324 = vmatpush.bf16.msra.mxu0 %v1264
        %1325 = vmatpush.bf16.msra.mxu0 %v1262
        %1326 = vmatpush.bf16.msra.mxu0 %v1260
        %1327 = vmatmul.bf16.gmra.mxu0 %v1291
        %v1328 = vpop.f32.mrf.mxu0
        %v1329 = vadd.f32 1e-09, %v1328
        %v1330 = vpop.f32.mrf.mxu0
        %1331 = vdwg.mxu0
        %1332 = vmatpush.bf16.msra.mxu0 %v1290
        %1333 = vmatpush.bf16.msra.mxu0 %v1288
        %1334 = vmatpush.bf16.msra.mxu0 %v1286
        %1335 = vmatpush.bf16.msra.mxu0 %v1284
        %1336 = vmatpush.bf16.msra.mxu0 %v1282
        %1337 = vmatpush.bf16.msra.mxu0 %v1280
        %1338 = vmatpush.bf16.msra.mxu0 %v1278
        %1339 = vmatpush.bf16.msra.mxu0 %v1276
        %1340 = vmatmul.bf16.gmra.mxu0 %v1292
        %v1341 = vpop.f32.mrf.mxu0
        %v1342 = vadd.f32 %v1329, %v1341
        %v1343 = vpop.f32.mrf.mxu0
        %1344 = vdwg.mxu0
        %v1345 = vrcp.pop %v1316
        %v1346 = vrcp.pop %v1342
        %v1347 = vmul.f32 %v1316, %v1345
        %v1348 = vmul.f32 %v1342, %v1346
        %v1349 = vsub.f32 2.0, %v1347
        %v1350 = vsub.f32 2.0, %v1348
        %v1351 = vmul.f32 %v1345, %v1349
        %v1352 = vmul.f32 %v1346, %v1350
        %v1353 = vld [vmem:[%s2] sm:$0xff]
        %v1354 = vld [vmem:[%s2 + $0x8] sm:$0xff]
        %v1355 = vld [vmem:[%s2 + $0x10] sm:$0xff]
        %v1356 = vld [vmem:[%s2 + $0x18] sm:$0xff]
        %v1357 = vld [vmem:[%s2 + $0x20] sm:$0xff]
        %v1358 = vld [vmem:[%s2 + $0x28] sm:$0xff]
        %v1359 = vld [vmem:[%s2 + $0x30] sm:$0xff]
        %v1360 = vld [vmem:[%s2 + $0x38] sm:$0xff]
        %v1361 = vld [vmem:[%s3] sm:$0xff]
        %v1362 = vld [vmem:[%s3 + $0x8] sm:$0xff]
        %v1363 = vld [vmem:[%s3 + $0x10] sm:$0xff]
        %v1364 = vld [vmem:[%s3 + $0x18] sm:$0xff]
        %v1365 = vld [vmem:[%s3 + $0x20] sm:$0xff]
        %v1366 = vld [vmem:[%s3 + $0x28] sm:$0xff]
        %v1367 = vld [vmem:[%s3 + $0x30] sm:$0xff]
        %v1368 = vld [vmem:[%s3 + $0x38] sm:$0xff]
        %1370 = vset.pattern.permute.xlu0 0
        %1371 = vperm.xlu0 %1370, %v1361
        %v1372 = vpop.permute.xlu0 %1371
        %1375 = vset.pattern.permute.xlu0 0
        %1376 = vperm.xlu0 %1375, %v1362
        %v1377 = vpop.permute.xlu0 %1376
        %1380 = vset.pattern.permute.xlu0 0
        %1381 = vperm.xlu0 %1380, %v1363
        %v1382 = vpop.permute.xlu0 %1381
        %1385 = vset.pattern.permute.xlu0 0
        %1386 = vperm.xlu0 %1385, %v1364
        %v1387 = vpop.permute.xlu0 %1386
        %1390 = vset.pattern.permute.xlu0 0
        %1391 = vperm.xlu0 %1390, %v1365
        %v1392 = vpop.permute.xlu0 %1391
        %1395 = vset.pattern.permute.xlu0 0
        %1396 = vperm.xlu0 %1395, %v1366
        %v1397 = vpop.permute.xlu0 %1396
        %1400 = vset.pattern.permute.xlu0 0
        %1401 = vperm.xlu0 %1400, %v1367
        %v1402 = vpop.permute.xlu0 %1401
        %1405 = vset.pattern.permute.xlu0 0
        %1406 = vperm.xlu0 %1405, %v1368
        %v1407 = vpop.permute.xlu0 %1406
        %v1410 = vsel %vm359, %v1353, 0
        %v1413 = vsel %vm359, %v1354, 0
        %v1416 = vsel %vm359, %v1355, 0
        %v1419 = vsel %vm359, %v1356, 0
        %v1422 = vsel %vm359, %v1357, 0
        %v1425 = vsel %vm359, %v1358, 0
        %v1428 = vsel %vm359, %v1359, 0
        %v1431 = vsel %vm359, %v1360, 0
        %1433 = vmatpush.msra.mxu0 0.0
        %1434 = vmatpush.msra.mxu0 0.0
        %1435 = vmatpush.msra.mxu0 0.0
        %1436 = vmatpush.msra.mxu0 0.0
        %1437 = vmatpush.msra.mxu0 0.0
        %1438 = vmatpush.msra.mxu0 0.0
        %1439 = vmatpush.msra.mxu0 0.0
        %1440 = vmatpush.msra.mxu0 0.0
        %1441 = vmatpush.msra.mxu0 %v349
        %1442 = vmatpush.msra.mxu0 %v347
        %1443 = vmatpush.msra.mxu0 %v345
        %1444 = vmatpush.msra.mxu0 %v343
        %1445 = vmatpush.msra.mxu0 %v341
        %1446 = vmatpush.msra.mxu0 %v339
        %1447 = vmatpush.msra.mxu0 %v337
        %1448 = vmatpush.msra.mxu0 %v335
        %1449 = vmatmul.f32.gmra.mxu0 %v1410
        %v1450 = vpop.f32.mrf.mxu0
        %v1451 = vadd.f32 %v1372, %v1450
        %1452 = vmatmul.f32.gmra.mxu0 %v1413
        %v1453 = vpop.f32.mrf.mxu0
        %v1454 = vadd.f32 %v1377, %v1453
        %1455 = vmatmul.f32.gmra.mxu0 %v1416
        %v1456 = vpop.f32.mrf.mxu0
        %v1457 = vadd.f32 %v1382, %v1456
        %1458 = vmatmul.f32.gmra.mxu0 %v1419
        %v1459 = vpop.f32.mrf.mxu0
        %v1460 = vadd.f32 %v1387, %v1459
        %1461 = vmatmul.f32.gmra.mxu0 %v1422
        %v1462 = vpop.f32.mrf.mxu0
        %v1463 = vadd.f32 %v1392, %v1462
        %1464 = vmatmul.f32.gmra.mxu0 %v1425
        %v1465 = vpop.f32.mrf.mxu0
        %v1466 = vadd.f32 %v1397, %v1465
        %1467 = vmatmul.f32.gmra.mxu0 %v1428
        %v1468 = vpop.f32.mrf.mxu0
        %v1469 = vadd.f32 %v1402, %v1468
        %1470 = vmatmul.f32.gmra.mxu0 %v1431
        %v1471 = vpop.f32.mrf.mxu0
        %v1472 = vadd.f32 %v1407, %v1471
        %1473 = vdwg.mxu0
        %1474 = vmatpush.msra.mxu0 0.0
        %1475 = vmatpush.msra.mxu0 0.0
        %1476 = vmatpush.msra.mxu0 0.0
        %1477 = vmatpush.msra.mxu0 0.0
        %1478 = vmatpush.msra.mxu0 0.0
        %1479 = vmatpush.msra.mxu0 0.0
        %1480 = vmatpush.msra.mxu0 0.0
        %1481 = vmatpush.msra.mxu0 0.0
        %1482 = vmatpush.msra.mxu0 %v350
        %1483 = vmatpush.msra.mxu0 %v348
        %1484 = vmatpush.msra.mxu0 %v346
        %1485 = vmatpush.msra.mxu0 %v344
        %1486 = vmatpush.msra.mxu0 %v342
        %1487 = vmatpush.msra.mxu0 %v340
        %1488 = vmatpush.msra.mxu0 %v338
        %1489 = vmatpush.msra.mxu0 %v336
        %1490 = vmatmul.f32.gmra.mxu0 %v1410
        %v1491 = vpop.f32.mrf.mxu0
        %v1492 = vadd.f32 %v1372, %v1491
        %1493 = vmatmul.f32.gmra.mxu0 %v1413
        %v1494 = vpop.f32.mrf.mxu0
        %v1495 = vadd.f32 %v1377, %v1494
        %1496 = vmatmul.f32.gmra.mxu0 %v1416
        %v1497 = vpop.f32.mrf.mxu0
        %v1498 = vadd.f32 %v1382, %v1497
        %1499 = vmatmul.f32.gmra.mxu0 %v1419
        %v1500 = vpop.f32.mrf.mxu0
        %v1501 = vadd.f32 %v1387, %v1500
        %1502 = vmatmul.f32.gmra.mxu0 %v1422
        %v1503 = vpop.f32.mrf.mxu0
        %v1504 = vadd.f32 %v1392, %v1503
        %1505 = vmatmul.f32.gmra.mxu0 %v1425
        %v1506 = vpop.f32.mrf.mxu0
        %v1507 = vadd.f32 %v1397, %v1506
        %1508 = vmatmul.f32.gmra.mxu0 %v1428
        %v1509 = vpop.f32.mrf.mxu0
        %v1510 = vadd.f32 %v1402, %v1509
        %1511 = vmatmul.f32.gmra.mxu0 %v1431
        %v1512 = vpop.f32.mrf.mxu0
        %v1513 = vadd.f32 %v1407, %v1512
        %1514 = vdwg.mxu0
        %v1515 = vmul.f32 %v1451, %v1257
        %v1516 = vmul.f32 %v1492, %v1258
        %v1517 = vmul.f32 %v1454, %v1257
        %v1518 = vmul.f32 %v1495, %v1258
        %v1519 = vmul.f32 %v1457, %v1257
        %v1520 = vmul.f32 %v1498, %v1258
        %v1521 = vmul.f32 %v1460, %v1257
        %v1522 = vmul.f32 %v1501, %v1258
        %v1523 = vmul.f32 %v1463, %v1257
        %v1524 = vmul.f32 %v1504, %v1258
        %v1525 = vmul.f32 %v1466, %v1257
        %v1526 = vmul.f32 %v1507, %v1258
        %v1527 = vmul.f32 %v1469, %v1257
        %v1528 = vmul.f32 %v1510, %v1258
        %v1529 = vmul.f32 %v1472, %v1257
        %v1530 = vmul.f32 %v1513, %v1258
        %v1531 = vpack.c.bf16 %v1517, %v1515
        %v1532 = vpack.c.bf16 %v1518, %v1516
        %v1533 = vpack.c.bf16 %v1521, %v1519
        %v1534 = vpack.c.bf16 %v1522, %v1520
        %v1535 = vpack.c.bf16 %v1525, %v1523
        %v1536 = vpack.c.bf16 %v1526, %v1524
        %v1537 = vpack.c.bf16 %v1529, %v1527
        %v1538 = vpack.c.bf16 %v1530, %v1528
        %1539 = vmatpush.bf16.msra.mxu0 %v1273
        %1540 = vmatpush.bf16.msra.mxu0 %v1271
        %1541 = vmatpush.bf16.msra.mxu0 %v1269
        %1542 = vmatpush.bf16.msra.mxu0 %v1267
        %1543 = vmatpush.bf16.msra.mxu0 %v1265
        %1544 = vmatpush.bf16.msra.mxu0 %v1263
        %1545 = vmatpush.bf16.msra.mxu0 %v1261
        %1546 = vmatpush.bf16.msra.mxu0 %v1259
        %1547 = vmatmul.bf16.gmra.mxu0 %v1531
        %v1548 = vpop.f32.mrf.mxu0
        %v1549 = vadd.f32 0.0, %v1548
        %v1550 = vpop.f32.mrf.mxu0
        %v1551 = vadd.f32 0.0, %v1550
        %1552 = vmatmul.bf16.gmra.mxu0 %v1533
        %v1553 = vpop.f32.mrf.mxu0
        %v1554 = vadd.f32 0.0, %v1553
        %v1555 = vpop.f32.mrf.mxu0
        %v1556 = vadd.f32 0.0, %v1555
        %1557 = vmatmul.bf16.gmra.mxu0 %v1535
        %v1558 = vpop.f32.mrf.mxu0
        %v1559 = vadd.f32 0.0, %v1558
        %v1560 = vpop.f32.mrf.mxu0
        %v1561 = vadd.f32 0.0, %v1560
        %1562 = vmatmul.bf16.gmra.mxu0 %v1537
        %v1563 = vpop.f32.mrf.mxu0
        %v1564 = vadd.f32 0.0, %v1563
        %v1565 = vpop.f32.mrf.mxu0
        %v1566 = vadd.f32 0.0, %v1565
        %1567 = vdwg.mxu0
        %1568 = vmatpush.bf16.msra.mxu0 %v1289
        %1569 = vmatpush.bf16.msra.mxu0 %v1287
        %1570 = vmatpush.bf16.msra.mxu0 %v1285
        %1571 = vmatpush.bf16.msra.mxu0 %v1283
        %1572 = vmatpush.bf16.msra.mxu0 %v1281
        %1573 = vmatpush.bf16.msra.mxu0 %v1279
        %1574 = vmatpush.bf16.msra.mxu0 %v1277
        %1575 = vmatpush.bf16.msra.mxu0 %v1275
        %1576 = vmatmul.bf16.gmra.mxu0 %v1532
        %v1577 = vpop.f32.mrf.mxu0
        %v1578 = vadd.f32 %v1549, %v1577
        %v1579 = vpop.f32.mrf.mxu0
        %v1580 = vadd.f32 %v1551, %v1579
        %1581 = vmatmul.bf16.gmra.mxu0 %v1534
        %v1582 = vpop.f32.mrf.mxu0
        %v1583 = vadd.f32 %v1554, %v1582
        %v1584 = vpop.f32.mrf.mxu0
        %v1585 = vadd.f32 %v1556, %v1584
        %1586 = vmatmul.bf16.gmra.mxu0 %v1536
        %v1587 = vpop.f32.mrf.mxu0
        %v1588 = vadd.f32 %v1559, %v1587
        %v1589 = vpop.f32.mrf.mxu0
        %v1590 = vadd.f32 %v1561, %v1589
        %1591 = vmatmul.bf16.gmra.mxu0 %v1538
        %v1592 = vpop.f32.mrf.mxu0
        %v1593 = vadd.f32 %v1564, %v1592
        %v1594 = vpop.f32.mrf.mxu0
        %v1595 = vadd.f32 %v1566, %v1594
        %1596 = vdwg.mxu0
        %1597 = vmatpush.bf16.msra.mxu0 %v1274
        %1598 = vmatpush.bf16.msra.mxu0 %v1272
        %1599 = vmatpush.bf16.msra.mxu0 %v1270
        %1600 = vmatpush.bf16.msra.mxu0 %v1268
        %1601 = vmatpush.bf16.msra.mxu0 %v1266
        %1602 = vmatpush.bf16.msra.mxu0 %v1264
        %1603 = vmatpush.bf16.msra.mxu0 %v1262
        %1604 = vmatpush.bf16.msra.mxu0 %v1260
        %1605 = vmatmul.bf16.gmra.mxu0 %v1531
        %v1606 = vpop.f32.mrf.mxu0
        %v1607 = vadd.f32 0.0, %v1606
        %v1608 = vpop.f32.mrf.mxu0
        %v1609 = vadd.f32 0.0, %v1608
        %1610 = vmatmul.bf16.gmra.mxu0 %v1533
        %v1611 = vpop.f32.mrf.mxu0
        %v1612 = vadd.f32 0.0, %v1611
        %v1613 = vpop.f32.mrf.mxu0
        %v1614 = vadd.f32 0.0, %v1613
        %1615 = vmatmul.bf16.gmra.mxu0 %v1535
        %v1616 = vpop.f32.mrf.mxu0
        %v1617 = vadd.f32 0.0, %v1616
        %v1618 = vpop.f32.mrf.mxu0
        %v1619 = vadd.f32 0.0, %v1618
        %1620 = vmatmul.bf16.gmra.mxu0 %v1537
        %v1621 = vpop.f32.mrf.mxu0
        %v1622 = vadd.f32 0.0, %v1621
        %v1623 = vpop.f32.mrf.mxu0
        %v1624 = vadd.f32 0.0, %v1623
        %1625 = vdwg.mxu0
        %1626 = vmatpush.bf16.msra.mxu0 %v1290
        %1627 = vmatpush.bf16.msra.mxu0 %v1288
        %1628 = vmatpush.bf16.msra.mxu0 %v1286
        %1629 = vmatpush.bf16.msra.mxu0 %v1284
        %1630 = vmatpush.bf16.msra.mxu0 %v1282
        %1631 = vmatpush.bf16.msra.mxu0 %v1280
        %1632 = vmatpush.bf16.msra.mxu0 %v1278
        %1633 = vmatpush.bf16.msra.mxu0 %v1276
        %1634 = vmatmul.bf16.gmra.mxu0 %v1532
        %v1635 = vpop.f32.mrf.mxu0
        %v1636 = vadd.f32 %v1607, %v1635
        %v1637 = vpop.f32.mrf.mxu0
        %v1638 = vadd.f32 %v1609, %v1637
        %1639 = vmatmul.bf16.gmra.mxu0 %v1534
        %v1640 = vpop.f32.mrf.mxu0
        %v1641 = vadd.f32 %v1612, %v1640
        %v1642 = vpop.f32.mrf.mxu0
        %v1643 = vadd.f32 %v1614, %v1642
        %1644 = vmatmul.bf16.gmra.mxu0 %v1536
        %v1645 = vpop.f32.mrf.mxu0
        %v1646 = vadd.f32 %v1617, %v1645
        %v1647 = vpop.f32.mrf.mxu0
        %v1648 = vadd.f32 %v1619, %v1647
        %1649 = vmatmul.bf16.gmra.mxu0 %v1538
        %v1650 = vpop.f32.mrf.mxu0
        %v1651 = vadd.f32 %v1622, %v1650
        %v1652 = vpop.f32.mrf.mxu0
        %v1653 = vadd.f32 %v1624, %v1652
        %1654 = vdwg.mxu0
        %v1655 = vperm.slane %v1351, 0
        %v1656 = vperm.slane %v1352, 0
        %v1657 = vmul.f32 %v1578, %v1655
        %v1658 = vmul.f32 %v1636, %v1656
        %v1659 = vmul.f32 %v1580, %v1655
        %v1660 = vmul.f32 %v1638, %v1656
        %v1661 = vmul.f32 %v1583, %v1655
        %v1662 = vmul.f32 %v1641, %v1656
        %v1663 = vmul.f32 %v1585, %v1655
        %v1664 = vmul.f32 %v1643, %v1656
        %v1665 = vmul.f32 %v1588, %v1655
        %v1666 = vmul.f32 %v1646, %v1656
        %v1667 = vmul.f32 %v1590, %v1655
        %v1668 = vmul.f32 %v1648, %v1656
        %v1669 = vmul.f32 %v1593, %v1655
        %v1670 = vmul.f32 %v1651, %v1656
        %v1671 = vmul.f32 %v1595, %v1655
        %v1672 = vmul.f32 %v1653, %v1656
        %v1673 = vld [vmem:[#allocation5] sm:$0xff]
        %v1674 = vld [vmem:[#allocation5 + $0x8] sm:$0xff]
        %v1675 = vld [vmem:[#allocation5 + $0x10] sm:$0xff]
        %v1676 = vld [vmem:[#allocation5 + $0x18] sm:$0xff]
        %v1677 = vld [vmem:[#allocation5 + $0x20] sm:$0xff]
        %v1678 = vld [vmem:[#allocation5 + $0x28] sm:$0xff]
        %v1679 = vld [vmem:[#allocation5 + $0x30] sm:$0xff]
        %v1680 = vld [vmem:[#allocation5 + $0x38] sm:$0xff]
        %v1681 = vsub.f32 %v335, %v1657
        %v1682 = vsub.f32 %v336, %v1658
        %v1683 = vsub.f32 %v337, %v1659
        %v1684 = vsub.f32 %v338, %v1660
        %v1685 = vsub.f32 %v339, %v1661
        %v1686 = vsub.f32 %v340, %v1662
        %v1687 = vsub.f32 %v341, %v1663
        %v1688 = vsub.f32 %v342, %v1664
        %v1689 = vsub.f32 %v343, %v1665
        %v1690 = vsub.f32 %v344, %v1666
        %v1691 = vsub.f32 %v345, %v1667
        %v1692 = vsub.f32 %v346, %v1668
        %v1693 = vsub.f32 %v347, %v1669
        %v1694 = vsub.f32 %v348, %v1670
        %v1695 = vsub.f32 %v349, %v1671
        %v1696 = vsub.f32 %v350, %v1672
        %v1697 = vld [vmem:[%s5] sm:$0xff]
        %v1698 = vld [vmem:[%s5 + $0x8] sm:$0xff]
        %v1699 = vld [vmem:[%s5 + $0x10] sm:$0xff]
        %v1700 = vld [vmem:[%s5 + $0x18] sm:$0xff]
        %v1701 = vld [vmem:[%s5 + $0x20] sm:$0xff]
        %v1702 = vld [vmem:[%s5 + $0x28] sm:$0xff]
        %v1703 = vld [vmem:[%s5 + $0x30] sm:$0xff]
        %v1704 = vld [vmem:[%s5 + $0x38] sm:$0xff]
        %1706 = vset.pattern.permute.xlu0 0
        %1707 = vperm.xlu0 %1706, %v1697
        %v1708 = vpop.permute.xlu0 %1707
        %1711 = vset.pattern.permute.xlu0 0
        %1712 = vperm.xlu0 %1711, %v1698
        %v1713 = vpop.permute.xlu0 %1712
        %1716 = vset.pattern.permute.xlu0 0
        %1717 = vperm.xlu0 %1716, %v1699
        %v1718 = vpop.permute.xlu0 %1717
        %1721 = vset.pattern.permute.xlu0 0
        %1722 = vperm.xlu0 %1721, %v1700
        %v1723 = vpop.permute.xlu0 %1722
        %1726 = vset.pattern.permute.xlu0 0
        %1727 = vperm.xlu0 %1726, %v1701
        %v1728 = vpop.permute.xlu0 %1727
        %1731 = vset.pattern.permute.xlu0 0
        %1732 = vperm.xlu0 %1731, %v1702
        %v1733 = vpop.permute.xlu0 %1732
        %1736 = vset.pattern.permute.xlu0 0
        %1737 = vperm.xlu0 %1736, %v1703
        %v1738 = vpop.permute.xlu0 %1737
        %1741 = vset.pattern.permute.xlu0 0
        %1742 = vperm.xlu0 %1741, %v1704
        %v1743 = vpop.permute.xlu0 %1742
        %v1746 = vsel %vm359, %v1673, 0
        %v1749 = vsel %vm359, %v1674, 0
        %v1752 = vsel %vm359, %v1675, 0
        %v1755 = vsel %vm359, %v1676, 0
        %v1758 = vsel %vm359, %v1677, 0
        %v1761 = vsel %vm359, %v1678, 0
        %v1764 = vsel %vm359, %v1679, 0
        %v1767 = vsel %vm359, %v1680, 0
        %1769 = vmatpush.msra.mxu0 0.0
        %1770 = vmatpush.msra.mxu0 0.0
        %1771 = vmatpush.msra.mxu0 0.0
        %1772 = vmatpush.msra.mxu0 0.0
        %1773 = vmatpush.msra.mxu0 0.0
        %1774 = vmatpush.msra.mxu0 0.0
        %1775 = vmatpush.msra.mxu0 0.0
        %1776 = vmatpush.msra.mxu0 0.0
        %1777 = vmatpush.msra.mxu0 %v1695
        %1778 = vmatpush.msra.mxu0 %v1693
        %1779 = vmatpush.msra.mxu0 %v1691
        %1780 = vmatpush.msra.mxu0 %v1689
        %1781 = vmatpush.msra.mxu0 %v1687
        %1782 = vmatpush.msra.mxu0 %v1685
        %1783 = vmatpush.msra.mxu0 %v1683
        %1784 = vmatpush.msra.mxu0 %v1681
        %1785 = vmatmul.f32.gmra.mxu0 %v1746
        %v1786 = vpop.f32.mrf.mxu0
        %v1787 = vadd.f32 %v1708, %v1786
        %1788 = vmatmul.f32.gmra.mxu0 %v1749
        %v1789 = vpop.f32.mrf.mxu0
        %v1790 = vadd.f32 %v1713, %v1789
        %1791 = vmatmul.f32.gmra.mxu0 %v1752
        %v1792 = vpop.f32.mrf.mxu0
        %v1793 = vadd.f32 %v1718, %v1792
        %1794 = vmatmul.f32.gmra.mxu0 %v1755
        %v1795 = vpop.f32.mrf.mxu0
        %v1796 = vadd.f32 %v1723, %v1795
        %1797 = vmatmul.f32.gmra.mxu0 %v1758
        %v1798 = vpop.f32.mrf.mxu0
        %v1799 = vadd.f32 %v1728, %v1798
        %1800 = vmatmul.f32.gmra.mxu0 %v1761
        %v1801 = vpop.f32.mrf.mxu0
        %v1802 = vadd.f32 %v1733, %v1801
        %1803 = vmatmul.f32.gmra.mxu0 %v1764
        %v1804 = vpop.f32.mrf.mxu0
        %v1805 = vadd.f32 %v1738, %v1804
        %1806 = vmatmul.f32.gmra.mxu0 %v1767
        %v1807 = vpop.f32.mrf.mxu0
        %v1808 = vadd.f32 %v1743, %v1807
        %1809 = vdwg.mxu0
        %1810 = vmatpush.msra.mxu0 0.0
        %1811 = vmatpush.msra.mxu0 0.0
        %1812 = vmatpush.msra.mxu0 0.0
        %1813 = vmatpush.msra.mxu0 0.0
        %1814 = vmatpush.msra.mxu0 0.0
        %1815 = vmatpush.msra.mxu0 0.0
        %1816 = vmatpush.msra.mxu0 0.0
        %1817 = vmatpush.msra.mxu0 0.0
        %1818 = vmatpush.msra.mxu0 %v1696
        %1819 = vmatpush.msra.mxu0 %v1694
        %1820 = vmatpush.msra.mxu0 %v1692
        %1821 = vmatpush.msra.mxu0 %v1690
        %1822 = vmatpush.msra.mxu0 %v1688
        %1823 = vmatpush.msra.mxu0 %v1686
        %1824 = vmatpush.msra.mxu0 %v1684
        %1825 = vmatpush.msra.mxu0 %v1682
        %1826 = vmatmul.f32.gmra.mxu0 %v1746
        %v1827 = vpop.f32.mrf.mxu0
        %v1828 = vadd.f32 %v1708, %v1827
        %1829 = vmatmul.f32.gmra.mxu0 %v1749
        %v1830 = vpop.f32.mrf.mxu0
        %v1831 = vadd.f32 %v1713, %v1830
        %1832 = vmatmul.f32.gmra.mxu0 %v1752
        %v1833 = vpop.f32.mrf.mxu0
        %v1834 = vadd.f32 %v1718, %v1833
        %1835 = vmatmul.f32.gmra.mxu0 %v1755
        %v1836 = vpop.f32.mrf.mxu0
        %v1837 = vadd.f32 %v1723, %v1836
        %1838 = vmatmul.f32.gmra.mxu0 %v1758
        %v1839 = vpop.f32.mrf.mxu0
        %v1840 = vadd.f32 %v1728, %v1839
        %1841 = vmatmul.f32.gmra.mxu0 %v1761
        %v1842 = vpop.f32.mrf.mxu0
        %v1843 = vadd.f32 %v1733, %v1842
        %1844 = vmatmul.f32.gmra.mxu0 %v1764
        %v1845 = vpop.f32.mrf.mxu0
        %v1846 = vadd.f32 %v1738, %v1845
        %1847 = vmatmul.f32.gmra.mxu0 %v1767
        %v1848 = vpop.f32.mrf.mxu0
        %v1849 = vadd.f32 %v1743, %v1848
        %1850 = vdwg.mxu0
        %1851 = vst [vmem:[%s317] sm:$0xff] %v1787
        %1852 = vst [vmem:[%s317 + $0x8] sm:$0xff] %v1828
        %1853 = vst [vmem:[%s317 + $0x10] sm:$0xff] %v1790
        %1854 = vst [vmem:[%s317 + $0x18] sm:$0xff] %v1831
        %1855 = vst [vmem:[%s317 + $0x20] sm:$0xff] %v1793
        %1856 = vst [vmem:[%s317 + $0x28] sm:$0xff] %v1834
        %1857 = vst [vmem:[%s317 + $0x30] sm:$0xff] %v1796
        %1858 = vst [vmem:[%s317 + $0x38] sm:$0xff] %v1837
        %1859 = vst [vmem:[%s317 + $0x40] sm:$0xff] %v1799
        %1860 = vst [vmem:[%s317 + $0x48] sm:$0xff] %v1840
        %1861 = vst [vmem:[%s317 + $0x50] sm:$0xff] %v1802
        %1862 = vst [vmem:[%s317 + $0x58] sm:$0xff] %v1843
        %1863 = vst [vmem:[%s317 + $0x60] sm:$0xff] %v1805
        %1864 = vst [vmem:[%s317 + $0x68] sm:$0xff] %v1846
        %1865 = vst [vmem:[%s317 + $0x70] sm:$0xff] %v1808
        %1866 = vst [vmem:[%s317 + $0x78] sm:$0xff] %v1849
        %v1867 = vadd.f32 %v1787, %v1828
        %1868 = vadd.xlane.f32.xlu0 %v1867
        %v1869 = vpop.xlane.xlu0 %1868
        %v1870 = vadd.f32 %v1790, %v1831
        %1871 = vadd.xlane.f32.xlu0 %v1870
        %v1872 = vpop.xlane.xlu0 %1871
        %v1873 = vadd.f32 %v1793, %v1834
        %1874 = vadd.xlane.f32.xlu0 %v1873
        %v1875 = vpop.xlane.xlu0 %1874
        %v1876 = vadd.f32 %v1796, %v1837
        %1877 = vadd.xlane.f32.xlu0 %v1876
        %v1878 = vpop.xlane.xlu0 %1877
        %v1879 = vadd.f32 %v1799, %v1840
        %1880 = vadd.xlane.f32.xlu0 %v1879
        %v1881 = vpop.xlane.xlu0 %1880
        %v1882 = vadd.f32 %v1802, %v1843
        %1883 = vadd.xlane.f32.xlu0 %v1882
        %v1884 = vpop.xlane.xlu0 %1883
        %v1885 = vadd.f32 %v1805, %v1846
        %1886 = vadd.xlane.f32.xlu0 %v1885
        %v1887 = vpop.xlane.xlu0 %1886
        %v1888 = vadd.f32 %v1808, %v1849
        %1889 = vadd.xlane.f32.xlu0 %v1888
        %v1890 = vpop.xlane.xlu0 %1889
        %vm1891 = vcmask 7168
        %1892 = vst.msk [vmem:[%s333] sm:$0xff] %vm1891, %v1869
        %1893 = vst.msk [vmem:[%s333 + $0x8] sm:$0xff] %vm1891, %v1872
        %1894 = vst.msk [vmem:[%s333 + $0x10] sm:$0xff] %vm1891, %v1875
        %1895 = vst.msk [vmem:[%s333 + $0x18] sm:$0xff] %vm1891, %v1878
        %1896 = vst.msk [vmem:[%s333 + $0x20] sm:$0xff] %vm1891, %v1881
        %1897 = vst.msk [vmem:[%s333 + $0x28] sm:$0xff] %vm1891, %v1884
        %1898 = vst.msk [vmem:[%s333 + $0x30] sm:$0xff] %vm1891, %v1887
        %1899 = vst.msk [vmem:[%s333 + $0x38] sm:$0xff] %vm1891, %v1890
        %v1900 = vmul.f32 %v1787, %v1787
        %v1901 = vmul.f32 %v1828, %v1828
        %v1902 = vmul.f32 %v1790, %v1790
        %v1903 = vmul.f32 %v1831, %v1831
        %v1904 = vmul.f32 %v1793, %v1793
        %v1905 = vmul.f32 %v1834, %v1834
        %v1906 = vmul.f32 %v1796, %v1796
        %v1907 = vmul.f32 %v1837, %v1837
        %v1908 = vmul.f32 %v1799, %v1799
        %v1909 = vmul.f32 %v1840, %v1840
        %v1910 = vmul.f32 %v1802, %v1802
        %v1911 = vmul.f32 %v1843, %v1843
        %v1912 = vmul.f32 %v1805, %v1805
        %v1913 = vmul.f32 %v1846, %v1846
        %v1914 = vmul.f32 %v1808, %v1808
        %v1915 = vmul.f32 %v1849, %v1849
        %v1916 = vadd.f32 %v1900, %v1901
        %1917 = vadd.xlane.f32.xlu0 %v1916
        %v1918 = vpop.xlane.xlu0 %1917
        %v1919 = vadd.f32 %v1902, %v1903
        %1920 = vadd.xlane.f32.xlu0 %v1919
        %v1921 = vpop.xlane.xlu0 %1920
        %v1922 = vadd.f32 %v1904, %v1905
        %1923 = vadd.xlane.f32.xlu0 %v1922
        %v1924 = vpop.xlane.xlu0 %1923
        %v1925 = vadd.f32 %v1906, %v1907
        %1926 = vadd.xlane.f32.xlu0 %v1925
        %v1927 = vpop.xlane.xlu0 %1926
        %v1928 = vadd.f32 %v1908, %v1909
        %1929 = vadd.xlane.f32.xlu0 %v1928
        %v1930 = vpop.xlane.xlu0 %1929
        %v1931 = vadd.f32 %v1910, %v1911
        %1932 = vadd.xlane.f32.xlu0 %v1931
        %v1933 = vpop.xlane.xlu0 %1932
        %v1934 = vadd.f32 %v1912, %v1913
        %1935 = vadd.xlane.f32.xlu0 %v1934
        %v1936 = vpop.xlane.xlu0 %1935
        %v1937 = vadd.f32 %v1914, %v1915
        %1938 = vadd.xlane.f32.xlu0 %v1937
        %v1939 = vpop.xlane.xlu0 %1938
        %vm1940 = vcmask 15368
        %1941 = vst.msk [vmem:[%s333] sm:$0xff] %vm1940, %v1918
        %1942 = vst.msk [vmem:[%s333 + $0x8] sm:$0xff] %vm1940, %v1921
        %1943 = vst.msk [vmem:[%s333 + $0x10] sm:$0xff] %vm1940, %v1924
        %1944 = vst.msk [vmem:[%s333 + $0x18] sm:$0xff] %vm1940, %v1927
        %1945 = vst.msk [vmem:[%s333 + $0x20] sm:$0xff] %vm1940, %v1930
        %1946 = vst.msk [vmem:[%s333 + $0x28] sm:$0xff] %vm1940, %v1933
        %1947 = vst.msk [vmem:[%s333 + $0x30] sm:$0xff] %vm1940, %v1936
        %1948 = vst.msk [vmem:[%s333 + $0x38] sm:$0xff] %vm1940, %v1939
        %s1949 = scalar_lea.vmem %s283, 128 [#allocation2]
        %v1950 = vld [vmem:[%s1949] sm:$0xff]
        %v1951 = vld [vmem:[%s1949 + $0x8] sm:$0xff]
        %v1952 = vld [vmem:[%s1949 + $0x10] sm:$0xff]
        %v1953 = vld [vmem:[%s1949 + $0x18] sm:$0xff]
        %v1954 = vld [vmem:[%s1949 + $0x20] sm:$0xff]
        %v1955 = vld [vmem:[%s1949 + $0x28] sm:$0xff]
        %v1956 = vld [vmem:[%s1949 + $0x30] sm:$0xff]
        %v1957 = vld [vmem:[%s1949 + $0x38] sm:$0xff]
        %v1958 = vld [vmem:[%s1949 + $0x40] sm:$0xff]
        %v1959 = vld [vmem:[%s1949 + $0x48] sm:$0xff]
        %v1960 = vld [vmem:[%s1949 + $0x50] sm:$0xff]
        %v1961 = vld [vmem:[%s1949 + $0x58] sm:$0xff]
        %v1962 = vld [vmem:[%s1949 + $0x60] sm:$0xff]
        %v1963 = vld [vmem:[%s1949 + $0x68] sm:$0xff]
        %v1964 = vld [vmem:[%s1949 + $0x70] sm:$0xff]
        %v1965 = vld [vmem:[%s1949 + $0x78] sm:$0xff]
        %v1966 = vld [vmem:[%s1] sm:$0xff]
        %v1967 = vld [vmem:[%s1 + $0x8] sm:$0xff]
        %v1968 = vld [vmem:[%s1 + $0x10] sm:$0xff]
        %v1969 = vld [vmem:[%s1 + $0x18] sm:$0xff]
        %v1970 = vld [vmem:[%s1 + $0x20] sm:$0xff]
        %v1971 = vld [vmem:[%s1 + $0x28] sm:$0xff]
        %v1972 = vld [vmem:[%s1 + $0x30] sm:$0xff]
        %v1973 = vld [vmem:[%s1 + $0x38] sm:$0xff]
        %v1975 = vsel %vm359, %v1966, 0
        %v1978 = vsel %vm359, %v1967, 0
        %v1981 = vsel %vm359, %v1968, 0
        %v1984 = vsel %vm359, %v1969, 0
        %v1987 = vsel %vm359, %v1970, 0
        %v1990 = vsel %vm359, %v1971, 0
        %v1993 = vsel %vm359, %v1972, 0
        %v1996 = vsel %vm359, %v1973, 0
        %1998 = vmatpush.msra.mxu0 0.0
        %1999 = vmatpush.msra.mxu0 0.0
        %2000 = vmatpush.msra.mxu0 0.0
        %2001 = vmatpush.msra.mxu0 0.0
        %2002 = vmatpush.msra.mxu0 0.0
        %2003 = vmatpush.msra.mxu0 0.0
        %2004 = vmatpush.msra.mxu0 0.0
        %2005 = vmatpush.msra.mxu0 0.0
        %2006 = vmatpush.msra.mxu0 %v1964
        %2007 = vmatpush.msra.mxu0 %v1962
        %2008 = vmatpush.msra.mxu0 %v1960
        %2009 = vmatpush.msra.mxu0 %v1958
        %2010 = vmatpush.msra.mxu0 %v1956
        %2011 = vmatpush.msra.mxu0 %v1954
        %2012 = vmatpush.msra.mxu0 %v1952
        %2013 = vmatpush.msra.mxu0 %v1950
        %2014 = vmatmul.f32.gmra.mxu0 %v1975
        %v2015 = vpop.f32.mrf.mxu0
        %v2016 = vadd.f32 0.0, %v2015
        %2017 = vmatmul.f32.gmra.mxu0 %v1978
        %v2018 = vpop.f32.mrf.mxu0
        %v2019 = vadd.f32 0.0, %v2018
        %2020 = vmatmul.f32.gmra.mxu0 %v1981
        %v2021 = vpop.f32.mrf.mxu0
        %v2022 = vadd.f32 0.0, %v2021
        %2023 = vmatmul.f32.gmra.mxu0 %v1984
        %v2024 = vpop.f32.mrf.mxu0
        %v2025 = vadd.f32 0.0, %v2024
        %2026 = vmatmul.f32.gmra.mxu0 %v1987
        %v2027 = vpop.f32.mrf.mxu0
        %v2028 = vadd.f32 0.0, %v2027
        %2029 = vmatmul.f32.gmra.mxu0 %v1990
        %v2030 = vpop.f32.mrf.mxu0
        %v2031 = vadd.f32 0.0, %v2030
        %2032 = vmatmul.f32.gmra.mxu0 %v1993
        %v2033 = vpop.f32.mrf.mxu0
        %v2034 = vadd.f32 0.0, %v2033
        %2035 = vmatmul.f32.gmra.mxu0 %v1996
        %v2036 = vpop.f32.mrf.mxu0
        %v2037 = vadd.f32 0.0, %v2036
        %2038 = vdwg.mxu0
        %2039 = vmatpush.msra.mxu0 0.0
        %2040 = vmatpush.msra.mxu0 0.0
        %2041 = vmatpush.msra.mxu0 0.0
        %2042 = vmatpush.msra.mxu0 0.0
        %2043 = vmatpush.msra.mxu0 0.0
        %2044 = vmatpush.msra.mxu0 0.0
        %2045 = vmatpush.msra.mxu0 0.0
        %2046 = vmatpush.msra.mxu0 0.0
        %2047 = vmatpush.msra.mxu0 %v1965
        %2048 = vmatpush.msra.mxu0 %v1963
        %2049 = vmatpush.msra.mxu0 %v1961
        %2050 = vmatpush.msra.mxu0 %v1959
        %2051 = vmatpush.msra.mxu0 %v1957
        %2052 = vmatpush.msra.mxu0 %v1955
        %2053 = vmatpush.msra.mxu0 %v1953
        %2054 = vmatpush.msra.mxu0 %v1951
        %2055 = vmatmul.f32.gmra.mxu0 %v1975
        %v2056 = vpop.f32.mrf.mxu0
        %v2057 = vadd.f32 0.0, %v2056
        %2058 = vmatmul.f32.gmra.mxu0 %v1978
        %v2059 = vpop.f32.mrf.mxu0
        %v2060 = vadd.f32 0.0, %v2059
        %2061 = vmatmul.f32.gmra.mxu0 %v1981
        %v2062 = vpop.f32.mrf.mxu0
        %v2063 = vadd.f32 0.0, %v2062
        %2064 = vmatmul.f32.gmra.mxu0 %v1984
        %v2065 = vpop.f32.mrf.mxu0
        %v2066 = vadd.f32 0.0, %v2065
        %2067 = vmatmul.f32.gmra.mxu0 %v1987
        %v2068 = vpop.f32.mrf.mxu0
        %v2069 = vadd.f32 0.0, %v2068
        %2070 = vmatmul.f32.gmra.mxu0 %v1990
        %v2071 = vpop.f32.mrf.mxu0
        %v2072 = vadd.f32 0.0, %v2071
        %2073 = vmatmul.f32.gmra.mxu0 %v1993
        %v2074 = vpop.f32.mrf.mxu0
        %v2075 = vadd.f32 0.0, %v2074
        %2076 = vmatmul.f32.gmra.mxu0 %v1996
        %v2077 = vpop.f32.mrf.mxu0
        %v2078 = vadd.f32 0.0, %v2077
        %2079 = vdwg.mxu0
        %2080 = vxpose.xlu0.b32.start [1/16] %v1950, 128
        %2081 = vxpose.xlu0.b32.cont [2/16] %v1952, 128
        %2082 = vxpose.xlu0.b32.cont [3/16] %v1954, 128
        %2083 = vxpose.xlu0.b32.cont [4/16] %v1956, 128
        %2084 = vxpose.xlu0.b32.cont [5/16] %v1958, 128
        %2085 = vxpose.xlu0.b32.cont [6/16] %v1960, 128
        %2086 = vxpose.xlu0.b32.cont [7/16] %v1962, 128
        %2087 = vxpose.xlu0.b32.cont [8/16] %v1964, 128
        %2088 = vxpose.xlu0.b32.cont [9/16] 0.0, 128
        %2089 = vxpose.xlu0.b32.cont [10/16] 0.0, 128
        %2090 = vxpose.xlu0.b32.cont [11/16] 0.0, 128
        %2091 = vxpose.xlu0.b32.cont [12/16] 0.0, 128
        %2092 = vxpose.xlu0.b32.cont [13/16] 0.0, 128
        %2093 = vxpose.xlu0.b32.cont [14/16] 0.0, 128
        %2094 = vxpose.xlu0.b32.cont [15/16] 0.0, 128
        %2095 = vxpose.xlu0.b32.end [16/16] 0.0, 128
        %v2096 = vpop.trf.xlu0
        %v2097 = vpop.trf.xlu0
        %v2098 = vpop.trf.xlu0
        %v2099 = vpop.trf.xlu0
        %v2100 = vpop.trf.xlu0
        %v2101 = vpop.trf.xlu0
        %v2102 = vpop.trf.xlu0
        %v2103 = vpop.trf.xlu0
        %v2104 = vpop.trf.xlu0
        %v2105 = vpop.trf.xlu0
        %v2106 = vpop.trf.xlu0
        %v2107 = vpop.trf.xlu0
        %v2108 = vpop.trf.xlu0
        %v2109 = vpop.trf.xlu0
        %v2110 = vpop.trf.xlu0
        %v2111 = vpop.trf.xlu0
        %2112 = vxpose.xlu0.b32.start [1/16] %v1951, 128
        %2113 = vxpose.xlu0.b32.cont [2/16] %v1953, 128
        %2114 = vxpose.xlu0.b32.cont [3/16] %v1955, 128
        %2115 = vxpose.xlu0.b32.cont [4/16] %v1957, 128
        %2116 = vxpose.xlu0.b32.cont [5/16] %v1959, 128
        %2117 = vxpose.xlu0.b32.cont [6/16] %v1961, 128
        %2118 = vxpose.xlu0.b32.cont [7/16] %v1963, 128
        %2119 = vxpose.xlu0.b32.cont [8/16] %v1965, 128
        %2120 = vxpose.xlu0.b32.cont [9/16] 0.0, 128
        %2121 = vxpose.xlu0.b32.cont [10/16] 0.0, 128
        %2122 = vxpose.xlu0.b32.cont [11/16] 0.0, 128
        %2123 = vxpose.xlu0.b32.cont [12/16] 0.0, 128
        %2124 = vxpose.xlu0.b32.cont [13/16] 0.0, 128
        %2125 = vxpose.xlu0.b32.cont [14/16] 0.0, 128
        %2126 = vxpose.xlu0.b32.cont [15/16] 0.0, 128
        %2127 = vxpose.xlu0.b32.end [16/16] 0.0, 128
        %v2128 = vpop.trf.xlu0
        %v2129 = vpop.trf.xlu0
        %v2130 = vpop.trf.xlu0
        %v2131 = vpop.trf.xlu0
        %v2132 = vpop.trf.xlu0
        %v2133 = vpop.trf.xlu0
        %v2134 = vpop.trf.xlu0
        %v2135 = vpop.trf.xlu0
        %v2136 = vpop.trf.xlu0
        %v2137 = vpop.trf.xlu0
        %v2138 = vpop.trf.xlu0
        %v2139 = vpop.trf.xlu0
        %v2140 = vpop.trf.xlu0
        %v2141 = vpop.trf.xlu0
        %v2142 = vpop.trf.xlu0
        %v2143 = vpop.trf.xlu0
        %v2145 = vsel %vm359, %v2096, 0
        %v2148 = vsel %vm359, %v2097, 0
        %v2151 = vsel %vm359, %v2098, 0
        %v2154 = vsel %vm359, %v2099, 0
        %v2157 = vsel %vm359, %v2100, 0
        %v2160 = vsel %vm359, %v2101, 0
        %v2163 = vsel %vm359, %v2102, 0
        %v2166 = vsel %vm359, %v2103, 0
        %v2169 = vsel %vm359, %v2104, 0
        %v2172 = vsel %vm359, %v2105, 0
        %v2175 = vsel %vm359, %v2106, 0
        %v2178 = vsel %vm359, %v2107, 0
        %v2181 = vsel %vm359, %v2108, 0
        %v2184 = vsel %vm359, %v2109, 0
        %v2187 = vsel %vm359, %v2110, 0
        %v2190 = vsel %vm359, %v2111, 0
        %v2193 = vsel %vm359, %v2128, 0
        %v2196 = vsel %vm359, %v2129, 0
        %v2199 = vsel %vm359, %v2130, 0
        %v2202 = vsel %vm359, %v2131, 0
        %v2205 = vsel %vm359, %v2132, 0
        %v2208 = vsel %vm359, %v2133, 0
        %v2211 = vsel %vm359, %v2134, 0
        %v2214 = vsel %vm359, %v2135, 0
        %v2217 = vsel %vm359, %v2136, 0
        %v2220 = vsel %vm359, %v2137, 0
        %v2223 = vsel %vm359, %v2138, 0
        %v2226 = vsel %vm359, %v2139, 0
        %v2229 = vsel %vm359, %v2140, 0
        %v2232 = vsel %vm359, %v2141, 0
        %v2235 = vsel %vm359, %v2142, 0
        %v2238 = vsel %vm359, %v2143, 0
        %2240 = vmatpush.msra.mxu0 0.0
        %2241 = vmatpush.msra.mxu0 0.0
        %2242 = vmatpush.msra.mxu0 0.0
        %2243 = vmatpush.msra.mxu0 0.0
        %2244 = vmatpush.msra.mxu0 0.0
        %2245 = vmatpush.msra.mxu0 0.0
        %2246 = vmatpush.msra.mxu0 0.0
        %2247 = vmatpush.msra.mxu0 0.0
        %2248 = vmatpush.msra.mxu0 %v2037
        %2249 = vmatpush.msra.mxu0 %v2034
        %2250 = vmatpush.msra.mxu0 %v2031
        %2251 = vmatpush.msra.mxu0 %v2028
        %2252 = vmatpush.msra.mxu0 %v2025
        %2253 = vmatpush.msra.mxu0 %v2022
        %2254 = vmatpush.msra.mxu0 %v2019
        %2255 = vmatpush.msra.mxu0 %v2016
        %2256 = vmatmul.f32.gmra.mxu0 %v2145
        %v2257 = vpop.f32.mrf.mxu0
        %v2258 = vadd.f32 0.0, %v2257
        %2259 = vmatmul.f32.gmra.mxu0 %v2148
        %v2260 = vpop.f32.mrf.mxu0
        %v2261 = vadd.f32 0.0, %v2260
        %2262 = vmatmul.f32.gmra.mxu0 %v2151
        %v2263 = vpop.f32.mrf.mxu0
        %v2264 = vadd.f32 0.0, %v2263
        %2265 = vmatmul.f32.gmra.mxu0 %v2154
        %v2266 = vpop.f32.mrf.mxu0
        %v2267 = vadd.f32 0.0, %v2266
        %2268 = vmatmul.f32.gmra.mxu0 %v2157
        %v2269 = vpop.f32.mrf.mxu0
        %v2270 = vadd.f32 0.0, %v2269
        %2271 = vmatmul.f32.gmra.mxu0 %v2160
        %v2272 = vpop.f32.mrf.mxu0
        %v2273 = vadd.f32 0.0, %v2272
        %2274 = vmatmul.f32.gmra.mxu0 %v2163
        %v2275 = vpop.f32.mrf.mxu0
        %v2276 = vadd.f32 0.0, %v2275
        %2277 = vmatmul.f32.gmra.mxu0 %v2166
        %v2278 = vpop.f32.mrf.mxu0
        %v2279 = vadd.f32 0.0, %v2278
        %2280 = vmatmul.f32.gmra.mxu0 %v2169
        %v2281 = vpop.f32.mrf.mxu0
        %v2282 = vadd.f32 0.0, %v2281
        %2283 = vmatmul.f32.gmra.mxu0 %v2172
        %v2284 = vpop.f32.mrf.mxu0
        %v2285 = vadd.f32 0.0, %v2284
        %2286 = vmatmul.f32.gmra.mxu0 %v2175
        %v2287 = vpop.f32.mrf.mxu0
        %v2288 = vadd.f32 0.0, %v2287
        %2289 = vmatmul.f32.gmra.mxu0 %v2178
        %v2290 = vpop.f32.mrf.mxu0
        %v2291 = vadd.f32 0.0, %v2290
        %2292 = vmatmul.f32.gmra.mxu0 %v2181
        %v2293 = vpop.f32.mrf.mxu0
        %v2294 = vadd.f32 0.0, %v2293
        %2295 = vmatmul.f32.gmra.mxu0 %v2184
        %v2296 = vpop.f32.mrf.mxu0
        %v2297 = vadd.f32 0.0, %v2296
        %2298 = vmatmul.f32.gmra.mxu0 %v2187
        %v2299 = vpop.f32.mrf.mxu0
        %v2300 = vadd.f32 0.0, %v2299
        %2301 = vmatmul.f32.gmra.mxu0 %v2190
        %v2302 = vpop.f32.mrf.mxu0
        %v2303 = vadd.f32 0.0, %v2302
        %2304 = vmatmul.f32.gmra.mxu0 %v2193
        %v2305 = vpop.f32.mrf.mxu0
        %v2306 = vadd.f32 0.0, %v2305
        %2307 = vmatmul.f32.gmra.mxu0 %v2196
        %v2308 = vpop.f32.mrf.mxu0
        %v2309 = vadd.f32 0.0, %v2308
        %2310 = vmatmul.f32.gmra.mxu0 %v2199
        %v2311 = vpop.f32.mrf.mxu0
        %v2312 = vadd.f32 0.0, %v2311
        %2313 = vmatmul.f32.gmra.mxu0 %v2202
        %v2314 = vpop.f32.mrf.mxu0
        %v2315 = vadd.f32 0.0, %v2314
        %2316 = vmatmul.f32.gmra.mxu0 %v2205
        %v2317 = vpop.f32.mrf.mxu0
        %v2318 = vadd.f32 0.0, %v2317
        %2319 = vmatmul.f32.gmra.mxu0 %v2208
        %v2320 = vpop.f32.mrf.mxu0
        %v2321 = vadd.f32 0.0, %v2320
        %2322 = vmatmul.f32.gmra.mxu0 %v2211
        %v2323 = vpop.f32.mrf.mxu0
        %v2324 = vadd.f32 0.0, %v2323
        %2325 = vmatmul.f32.gmra.mxu0 %v2214
        %v2326 = vpop.f32.mrf.mxu0
        %v2327 = vadd.f32 0.0, %v2326
        %2328 = vmatmul.f32.gmra.mxu0 %v2217
        %v2329 = vpop.f32.mrf.mxu0
        %v2330 = vadd.f32 0.0, %v2329
        %2331 = vmatmul.f32.gmra.mxu0 %v2220
        %v2332 = vpop.f32.mrf.mxu0
        %v2333 = vadd.f32 0.0, %v2332
        %2334 = vmatmul.f32.gmra.mxu0 %v2223
        %v2335 = vpop.f32.mrf.mxu0
        %v2336 = vadd.f32 0.0, %v2335
        %2337 = vmatmul.f32.gmra.mxu0 %v2226
        %v2338 = vpop.f32.mrf.mxu0
        %v2339 = vadd.f32 0.0, %v2338
        %2340 = vmatmul.f32.gmra.mxu0 %v2229
        %v2341 = vpop.f32.mrf.mxu0
        %v2342 = vadd.f32 0.0, %v2341
        %2343 = vmatmul.f32.gmra.mxu0 %v2232
        %v2344 = vpop.f32.mrf.mxu0
        %v2345 = vadd.f32 0.0, %v2344
        %2346 = vmatmul.f32.gmra.mxu0 %v2235
        %v2347 = vpop.f32.mrf.mxu0
        %v2348 = vadd.f32 0.0, %v2347
        %2349 = vmatmul.f32.gmra.mxu0 %v2238
        %v2350 = vpop.f32.mrf.mxu0
        %v2351 = vadd.f32 0.0, %v2350
        %2352 = vdwg.mxu0
        %2353 = vmatpush.msra.mxu0 0.0
        %2354 = vmatpush.msra.mxu0 0.0
        %2355 = vmatpush.msra.mxu0 0.0
        %2356 = vmatpush.msra.mxu0 0.0
        %2357 = vmatpush.msra.mxu0 0.0
        %2358 = vmatpush.msra.mxu0 0.0
        %2359 = vmatpush.msra.mxu0 0.0
        %2360 = vmatpush.msra.mxu0 0.0
        %2361 = vmatpush.msra.mxu0 %v2078
        %2362 = vmatpush.msra.mxu0 %v2075
        %2363 = vmatpush.msra.mxu0 %v2072
        %2364 = vmatpush.msra.mxu0 %v2069
        %2365 = vmatpush.msra.mxu0 %v2066
        %2366 = vmatpush.msra.mxu0 %v2063
        %2367 = vmatpush.msra.mxu0 %v2060
        %2368 = vmatpush.msra.mxu0 %v2057
        %2369 = vmatmul.f32.gmra.mxu0 %v2145
        %v2370 = vpop.f32.mrf.mxu0
        %v2371 = vadd.f32 0.0, %v2370
        %2372 = vmatmul.f32.gmra.mxu0 %v2148
        %v2373 = vpop.f32.mrf.mxu0
        %v2374 = vadd.f32 0.0, %v2373
        %2375 = vmatmul.f32.gmra.mxu0 %v2151
        %v2376 = vpop.f32.mrf.mxu0
        %v2377 = vadd.f32 0.0, %v2376
        %2378 = vmatmul.f32.gmra.mxu0 %v2154
        %v2379 = vpop.f32.mrf.mxu0
        %v2380 = vadd.f32 0.0, %v2379
        %2381 = vmatmul.f32.gmra.mxu0 %v2157
        %v2382 = vpop.f32.mrf.mxu0
        %v2383 = vadd.f32 0.0, %v2382
        %2384 = vmatmul.f32.gmra.mxu0 %v2160
        %v2385 = vpop.f32.mrf.mxu0
        %v2386 = vadd.f32 0.0, %v2385
        %2387 = vmatmul.f32.gmra.mxu0 %v2163
        %v2388 = vpop.f32.mrf.mxu0
        %v2389 = vadd.f32 0.0, %v2388
        %2390 = vmatmul.f32.gmra.mxu0 %v2166
        %v2391 = vpop.f32.mrf.mxu0
        %v2392 = vadd.f32 0.0, %v2391
        %2393 = vmatmul.f32.gmra.mxu0 %v2169
        %v2394 = vpop.f32.mrf.mxu0
        %v2395 = vadd.f32 0.0, %v2394
        %2396 = vmatmul.f32.gmra.mxu0 %v2172
        %v2397 = vpop.f32.mrf.mxu0
        %v2398 = vadd.f32 0.0, %v2397
        %2399 = vmatmul.f32.gmra.mxu0 %v2175
        %v2400 = vpop.f32.mrf.mxu0
        %v2401 = vadd.f32 0.0, %v2400
        %2402 = vmatmul.f32.gmra.mxu0 %v2178
        %v2403 = vpop.f32.mrf.mxu0
        %v2404 = vadd.f32 0.0, %v2403
        %2405 = vmatmul.f32.gmra.mxu0 %v2181
        %v2406 = vpop.f32.mrf.mxu0
        %v2407 = vadd.f32 0.0, %v2406
        %2408 = vmatmul.f32.gmra.mxu0 %v2184
        %v2409 = vpop.f32.mrf.mxu0
        %v2410 = vadd.f32 0.0, %v2409
        %2411 = vmatmul.f32.gmra.mxu0 %v2187
        %v2412 = vpop.f32.mrf.mxu0
        %v2413 = vadd.f32 0.0, %v2412
        %2414 = vmatmul.f32.gmra.mxu0 %v2190
        %v2415 = vpop.f32.mrf.mxu0
        %v2416 = vadd.f32 0.0, %v2415
        %2417 = vmatmul.f32.gmra.mxu0 %v2193
        %v2418 = vpop.f32.mrf.mxu0
        %v2419 = vadd.f32 0.0, %v2418
        %2420 = vmatmul.f32.gmra.mxu0 %v2196
        %v2421 = vpop.f32.mrf.mxu0
        %v2422 = vadd.f32 0.0, %v2421
        %2423 = vmatmul.f32.gmra.mxu0 %v2199
        %v2424 = vpop.f32.mrf.mxu0
        %v2425 = vadd.f32 0.0, %v2424
        %2426 = vmatmul.f32.gmra.mxu0 %v2202
        %v2427 = vpop.f32.mrf.mxu0
        %v2428 = vadd.f32 0.0, %v2427
        %2429 = vmatmul.f32.gmra.mxu0 %v2205
        %v2430 = vpop.f32.mrf.mxu0
        %v2431 = vadd.f32 0.0, %v2430
        %2432 = vmatmul.f32.gmra.mxu0 %v2208
        %v2433 = vpop.f32.mrf.mxu0
        %v2434 = vadd.f32 0.0, %v2433
        %2435 = vmatmul.f32.gmra.mxu0 %v2211
        %v2436 = vpop.f32.mrf.mxu0
        %v2437 = vadd.f32 0.0, %v2436
        %2438 = vmatmul.f32.gmra.mxu0 %v2214
        %v2439 = vpop.f32.mrf.mxu0
        %v2440 = vadd.f32 0.0, %v2439
        %2441 = vmatmul.f32.gmra.mxu0 %v2217
        %v2442 = vpop.f32.mrf.mxu0
        %v2443 = vadd.f32 0.0, %v2442
        %2444 = vmatmul.f32.gmra.mxu0 %v2220
        %v2445 = vpop.f32.mrf.mxu0
        %v2446 = vadd.f32 0.0, %v2445
        %2447 = vmatmul.f32.gmra.mxu0 %v2223
        %v2448 = vpop.f32.mrf.mxu0
        %v2449 = vadd.f32 0.0, %v2448
        %2450 = vmatmul.f32.gmra.mxu0 %v2226
        %v2451 = vpop.f32.mrf.mxu0
        %v2452 = vadd.f32 0.0, %v2451
        %2453 = vmatmul.f32.gmra.mxu0 %v2229
        %v2454 = vpop.f32.mrf.mxu0
        %v2455 = vadd.f32 0.0, %v2454
        %2456 = vmatmul.f32.gmra.mxu0 %v2232
        %v2457 = vpop.f32.mrf.mxu0
        %v2458 = vadd.f32 0.0, %v2457
        %2459 = vmatmul.f32.gmra.mxu0 %v2235
        %v2460 = vpop.f32.mrf.mxu0
        %v2461 = vadd.f32 0.0, %v2460
        %2462 = vmatmul.f32.gmra.mxu0 %v2238
        %v2463 = vpop.f32.mrf.mxu0
        %v2464 = vadd.f32 0.0, %v2463
        %2465 = vdwg.mxu0
        %v2466 = vmax.f32 %v2258, %v2371
        %2467 = vmax.xlane.f32.xlu0 %v2466
        %v2468 = vpop.xlane.xlu0 %2467
        %v2469 = vmax.f32 %v2261, %v2374
        %2470 = vmax.xlane.f32.xlu0 %v2469
        %v2471 = vpop.xlane.xlu0 %2470
        %v2472 = vmax.f32 %v2264, %v2377
        %2473 = vmax.xlane.f32.xlu0 %v2472
        %v2474 = vpop.xlane.xlu0 %2473
        %v2475 = vmax.f32 %v2267, %v2380
        %2476 = vmax.xlane.f32.xlu0 %v2475
        %v2477 = vpop.xlane.xlu0 %2476
        %v2478 = vmax.f32 %v2270, %v2383
        %2479 = vmax.xlane.f32.xlu0 %v2478
        %v2480 = vpop.xlane.xlu0 %2479
        %v2481 = vmax.f32 %v2273, %v2386
        %2482 = vmax.xlane.f32.xlu0 %v2481
        %v2483 = vpop.xlane.xlu0 %2482
        %v2484 = vmax.f32 %v2276, %v2389
        %2485 = vmax.xlane.f32.xlu0 %v2484
        %v2486 = vpop.xlane.xlu0 %2485
        %v2487 = vmax.f32 %v2279, %v2392
        %2488 = vmax.xlane.f32.xlu0 %v2487
        %v2489 = vpop.xlane.xlu0 %2488
        %v2490 = vmax.f32 %v2282, %v2395
        %2491 = vmax.xlane.f32.xlu0 %v2490
        %v2492 = vpop.xlane.xlu0 %2491
        %v2493 = vmax.f32 %v2285, %v2398
        %2494 = vmax.xlane.f32.xlu0 %v2493
        %v2495 = vpop.xlane.xlu0 %2494
        %v2496 = vmax.f32 %v2288, %v2401
        %2497 = vmax.xlane.f32.xlu0 %v2496
        %v2498 = vpop.xlane.xlu0 %2497
        %v2499 = vmax.f32 %v2291, %v2404
        %2500 = vmax.xlane.f32.xlu0 %v2499
        %v2501 = vpop.xlane.xlu0 %2500
        %v2502 = vmax.f32 %v2294, %v2407
        %2503 = vmax.xlane.f32.xlu0 %v2502
        %v2504 = vpop.xlane.xlu0 %2503
        %v2505 = vmax.f32 %v2297, %v2410
        %2506 = vmax.xlane.f32.xlu0 %v2505
        %v2507 = vpop.xlane.xlu0 %2506
        %v2508 = vmax.f32 %v2300, %v2413
        %2509 = vmax.xlane.f32.xlu0 %v2508
        %v2510 = vpop.xlane.xlu0 %2509
        %v2511 = vmax.f32 %v2303, %v2416
        %2512 = vmax.xlane.f32.xlu0 %v2511
        %v2513 = vpop.xlane.xlu0 %2512
        %v2514 = vmax.f32 %v2306, %v2419
        %2515 = vmax.xlane.f32.xlu0 %v2514
        %v2516 = vpop.xlane.xlu0 %2515
        %v2517 = vmax.f32 %v2309, %v2422
        %2518 = vmax.xlane.f32.xlu0 %v2517
        %v2519 = vpop.xlane.xlu0 %2518
        %v2520 = vmax.f32 %v2312, %v2425
        %2521 = vmax.xlane.f32.xlu0 %v2520
        %v2522 = vpop.xlane.xlu0 %2521
        %v2523 = vmax.f32 %v2315, %v2428
        %2524 = vmax.xlane.f32.xlu0 %v2523
        %v2525 = vpop.xlane.xlu0 %2524
        %v2526 = vmax.f32 %v2318, %v2431
        %2527 = vmax.xlane.f32.xlu0 %v2526
        %v2528 = vpop.xlane.xlu0 %2527
        %v2529 = vmax.f32 %v2321, %v2434
        %2530 = vmax.xlane.f32.xlu0 %v2529
        %v2531 = vpop.xlane.xlu0 %2530
        %v2532 = vmax.f32 %v2324, %v2437
        %2533 = vmax.xlane.f32.xlu0 %v2532
        %v2534 = vpop.xlane.xlu0 %2533
        %v2535 = vmax.f32 %v2327, %v2440
        %2536 = vmax.xlane.f32.xlu0 %v2535
        %v2537 = vpop.xlane.xlu0 %2536
        %v2538 = vmax.f32 %v2330, %v2443
        %2539 = vmax.xlane.f32.xlu0 %v2538
        %v2540 = vpop.xlane.xlu0 %2539
        %v2541 = vmax.f32 %v2333, %v2446
        %2542 = vmax.xlane.f32.xlu0 %v2541
        %v2543 = vpop.xlane.xlu0 %2542
        %v2544 = vmax.f32 %v2336, %v2449
        %2545 = vmax.xlane.f32.xlu0 %v2544
        %v2546 = vpop.xlane.xlu0 %2545
        %v2547 = vmax.f32 %v2339, %v2452
        %2548 = vmax.xlane.f32.xlu0 %v2547
        %v2549 = vpop.xlane.xlu0 %2548
        %v2550 = vmax.f32 %v2342, %v2455
        %2551 = vmax.xlane.f32.xlu0 %v2550
        %v2552 = vpop.xlane.xlu0 %2551
        %v2553 = vmax.f32 %v2345, %v2458
        %2554 = vmax.xlane.f32.xlu0 %v2553
        %v2555 = vpop.xlane.xlu0 %2554
        %v2556 = vmax.f32 %v2348, %v2461
        %2557 = vmax.xlane.f32.xlu0 %v2556
        %v2558 = vpop.xlane.xlu0 %2557
        %v2559 = vmax.f32 %v2351, %v2464
        %2560 = vmax.xlane.f32.xlu0 %v2559
        %v2561 = vpop.xlane.xlu0 %2560
        %v2562 = vmax.f32 %v2468, %v2480
        %v2563 = vmax.f32 %v2471, %v2483
        %v2564 = vmax.f32 %v2474, %v2486
        %v2565 = vmax.f32 %v2477, %v2489
        %v2566 = vmax.f32 %v2562, %v2492
        %v2567 = vmax.f32 %v2563, %v2495
        %v2568 = vmax.f32 %v2564, %v2498
        %v2569 = vmax.f32 %v2565, %v2501
        %v2570 = vmax.f32 %v2566, %v2504
        %v2571 = vmax.f32 %v2567, %v2507
        %v2572 = vmax.f32 %v2568, %v2510
        %v2573 = vmax.f32 %v2569, %v2513
        %v2574 = vmax.f32 %v2570, %v2516
        %v2575 = vmax.f32 %v2571, %v2519
        %v2576 = vmax.f32 %v2572, %v2522
        %v2577 = vmax.f32 %v2573, %v2525
        %v2578 = vmax.f32 %v2574, %v2528
        %v2579 = vmax.f32 %v2575, %v2531
        %v2580 = vmax.f32 %v2576, %v2534
        %v2581 = vmax.f32 %v2577, %v2537
        %v2582 = vmax.f32 %v2578, %v2540
        %v2583 = vmax.f32 %v2579, %v2543
        %v2584 = vmax.f32 %v2580, %v2546
        %v2585 = vmax.f32 %v2581, %v2549
        %v2586 = vmax.f32 %v2582, %v2552
        %v2587 = vmax.f32 %v2583, %v2555
        %v2588 = vmax.f32 %v2584, %v2558
        %v2589 = vmax.f32 %v2585, %v2561
        %v2590 = vmax.f32 %v2586, %v2587
        %v2591 = vmax.f32 %v2588, %v2589
        %v2592 = vmax.f32 %v2590, %v2591
        %v2593 = vrot.slane %v2592, 4
        %v2594 = vmax.f32 %v2592, %v2593
        %v2595 = vrot.slane %v2594, 2
        %v2596 = vmax.f32 %v2594, %v2595
        %v2597 = vrot.slane %v2596, 1
        %v2598 = vmax.f32 %v2596, %v2597
        %v2599 = vsub.f32 %v2258, %v2598
        %v2600 = vsub.f32 %v2371, %v2598
        %v2601 = vsub.f32 %v2261, %v2598
        %v2602 = vsub.f32 %v2374, %v2598
        %v2603 = vsub.f32 %v2264, %v2598
        %v2604 = vsub.f32 %v2377, %v2598
        %v2605 = vsub.f32 %v2267, %v2598
        %v2606 = vsub.f32 %v2380, %v2598
        %v2607 = vsub.f32 %v2270, %v2598
        %v2608 = vsub.f32 %v2383, %v2598
        %v2609 = vsub.f32 %v2273, %v2598
        %v2610 = vsub.f32 %v2386, %v2598
        %v2611 = vsub.f32 %v2276, %v2598
        %v2612 = vsub.f32 %v2389, %v2598
        %v2613 = vsub.f32 %v2279, %v2598
        %v2614 = vsub.f32 %v2392, %v2598
        %v2615 = vsub.f32 %v2282, %v2598
        %v2616 = vsub.f32 %v2395, %v2598
        %v2617 = vsub.f32 %v2285, %v2598
        %v2618 = vsub.f32 %v2398, %v2598
        %v2619 = vsub.f32 %v2288, %v2598
        %v2620 = vsub.f32 %v2401, %v2598
        %v2621 = vsub.f32 %v2291, %v2598
        %v2622 = vsub.f32 %v2404, %v2598
        %v2623 = vsub.f32 %v2294, %v2598
        %v2624 = vsub.f32 %v2407, %v2598
        %v2625 = vsub.f32 %v2297, %v2598
        %v2626 = vsub.f32 %v2410, %v2598
        %v2627 = vsub.f32 %v2300, %v2598
        %v2628 = vsub.f32 %v2413, %v2598
        %v2629 = vsub.f32 %v2303, %v2598
        %v2630 = vsub.f32 %v2416, %v2598
        %v2631 = vsub.f32 %v2306, %v2598
        %v2632 = vsub.f32 %v2419, %v2598
        %v2633 = vsub.f32 %v2309, %v2598
        %v2634 = vsub.f32 %v2422, %v2598
        %v2635 = vsub.f32 %v2312, %v2598
        %v2636 = vsub.f32 %v2425, %v2598
        %v2637 = vsub.f32 %v2315, %v2598
        %v2638 = vsub.f32 %v2428, %v2598
        %v2639 = vsub.f32 %v2318, %v2598
        %v2640 = vsub.f32 %v2431, %v2598
        %v2641 = vsub.f32 %v2321, %v2598
        %v2642 = vsub.f32 %v2434, %v2598
        %v2643 = vsub.f32 %v2324, %v2598
        %v2644 = vsub.f32 %v2437, %v2598
        %v2645 = vsub.f32 %v2327, %v2598
        %v2646 = vsub.f32 %v2440, %v2598
        %v2647 = vsub.f32 %v2330, %v2598
        %v2648 = vsub.f32 %v2443, %v2598
        %v2649 = vsub.f32 %v2333, %v2598
        %v2650 = vsub.f32 %v2446, %v2598
        %v2651 = vsub.f32 %v2336, %v2598
        %v2652 = vsub.f32 %v2449, %v2598
        %v2653 = vsub.f32 %v2339, %v2598
        %v2654 = vsub.f32 %v2452, %v2598
        %v2655 = vsub.f32 %v2342, %v2598
        %v2656 = vsub.f32 %v2455, %v2598
        %v2657 = vsub.f32 %v2345, %v2598
        %v2658 = vsub.f32 %v2458, %v2598
        %v2659 = vsub.f32 %v2348, %v2598
        %v2660 = vsub.f32 %v2461, %v2598
        %v2661 = vsub.f32 %v2351, %v2598
        %v2662 = vsub.f32 %v2464, %v2598
        %v2663 = vmul.f32 %v2599, 1.442695
        %v2664 = vpow.pop %v2663
        %v2665 = vmul.f32 %v2600, 1.442695
        %v2666 = vpow.pop %v2665
        %v2667 = vmul.f32 %v2601, 1.442695
        %v2668 = vpow.pop %v2667
        %v2669 = vmul.f32 %v2602, 1.442695
        %v2670 = vpow.pop %v2669
        %v2671 = vmul.f32 %v2603, 1.442695
        %v2672 = vpow.pop %v2671
        %v2673 = vmul.f32 %v2604, 1.442695
        %v2674 = vpow.pop %v2673
        %v2675 = vmul.f32 %v2605, 1.442695
        %v2676 = vpow.pop %v2675
        %v2677 = vmul.f32 %v2606, 1.442695
        %v2678 = vpow.pop %v2677
        %v2679 = vmul.f32 %v2607, 1.442695
        %v2680 = vpow.pop %v2679
        %v2681 = vmul.f32 %v2608, 1.442695
        %v2682 = vpow.pop %v2681
        %v2683 = vmul.f32 %v2609, 1.442695
        %v2684 = vpow.pop %v2683
        %v2685 = vmul.f32 %v2610, 1.442695
        %v2686 = vpow.pop %v2685
        %v2687 = vmul.f32 %v2611, 1.442695
        %v2688 = vpow.pop %v2687
        %v2689 = vmul.f32 %v2612, 1.442695
        %v2690 = vpow.pop %v2689
        %v2691 = vmul.f32 %v2613, 1.442695
        %v2692 = vpow.pop %v2691
        %v2693 = vmul.f32 %v2614, 1.442695
        %v2694 = vpow.pop %v2693
        %v2695 = vmul.f32 %v2615, 1.442695
        %v2696 = vpow.pop %v2695
        %v2697 = vmul.f32 %v2616, 1.442695
        %v2698 = vpow.pop %v2697
        %v2699 = vmul.f32 %v2617, 1.442695
        %v2700 = vpow.pop %v2699
        %v2701 = vmul.f32 %v2618, 1.442695
        %v2702 = vpow.pop %v2701
        %v2703 = vmul.f32 %v2619, 1.442695
        %v2704 = vpow.pop %v2703
        %v2705 = vmul.f32 %v2620, 1.442695
        %v2706 = vpow.pop %v2705
        %v2707 = vmul.f32 %v2621, 1.442695
        %v2708 = vpow.pop %v2707
        %v2709 = vmul.f32 %v2622, 1.442695
        %v2710 = vpow.pop %v2709
        %v2711 = vmul.f32 %v2623, 1.442695
        %v2712 = vpow.pop %v2711
        %v2713 = vmul.f32 %v2624, 1.442695
        %v2714 = vpow.pop %v2713
        %v2715 = vmul.f32 %v2625, 1.442695
        %v2716 = vpow.pop %v2715
        %v2717 = vmul.f32 %v2626, 1.442695
        %v2718 = vpow.pop %v2717
        %v2719 = vmul.f32 %v2627, 1.442695
        %v2720 = vpow.pop %v2719
        %v2721 = vmul.f32 %v2628, 1.442695
        %v2722 = vpow.pop %v2721
        %v2723 = vmul.f32 %v2629, 1.442695
        %v2724 = vpow.pop %v2723
        %v2725 = vmul.f32 %v2630, 1.442695
        %v2726 = vpow.pop %v2725
        %v2727 = vmul.f32 %v2631, 1.442695
        %v2728 = vpow.pop %v2727
        %v2729 = vmul.f32 %v2632, 1.442695
        %v2730 = vpow.pop %v2729
        %v2731 = vmul.f32 %v2633, 1.442695
        %v2732 = vpow.pop %v2731
        %v2733 = vmul.f32 %v2634, 1.442695
        %v2734 = vpow.pop %v2733
        %v2735 = vmul.f32 %v2635, 1.442695
        %v2736 = vpow.pop %v2735
        %v2737 = vmul.f32 %v2636, 1.442695
        %v2738 = vpow.pop %v2737
        %v2739 = vmul.f32 %v2637, 1.442695
        %v2740 = vpow.pop %v2739
        %v2741 = vmul.f32 %v2638, 1.442695
        %v2742 = vpow.pop %v2741
        %v2743 = vmul.f32 %v2639, 1.442695
        %v2744 = vpow.pop %v2743
        %v2745 = vmul.f32 %v2640, 1.442695
        %v2746 = vpow.pop %v2745
        %v2747 = vmul.f32 %v2641, 1.442695
        %v2748 = vpow.pop %v2747
        %v2749 = vmul.f32 %v2642, 1.442695
        %v2750 = vpow.pop %v2749
        %v2751 = vmul.f32 %v2643, 1.442695
        %v2752 = vpow.pop %v2751
        %v2753 = vmul.f32 %v2644, 1.442695
        %v2754 = vpow.pop %v2753
        %v2755 = vmul.f32 %v2645, 1.442695
        %v2756 = vpow.pop %v2755
        %v2757 = vmul.f32 %v2646, 1.442695
        %v2758 = vpow.pop %v2757
        %v2759 = vmul.f32 %v2647, 1.442695
        %v2760 = vpow.pop %v2759
        %v2761 = vmul.f32 %v2648, 1.442695
        %v2762 = vpow.pop %v2761
        %v2763 = vmul.f32 %v2649, 1.442695
        %v2764 = vpow.pop %v2763
        %v2765 = vmul.f32 %v2650, 1.442695
        %v2766 = vpow.pop %v2765
        %v2767 = vmul.f32 %v2651, 1.442695
        %v2768 = vpow.pop %v2767
        %v2769 = vmul.f32 %v2652, 1.442695
        %v2770 = vpow.pop %v2769
        %v2771 = vmul.f32 %v2653, 1.442695
        %v2772 = vpow.pop %v2771
        %v2773 = vmul.f32 %v2654, 1.442695
        %v2774 = vpow.pop %v2773
        %v2775 = vmul.f32 %v2655, 1.442695
        %v2776 = vpow.pop %v2775
        %v2777 = vmul.f32 %v2656, 1.442695
        %v2778 = vpow.pop %v2777
        %v2779 = vmul.f32 %v2657, 1.442695
        %v2780 = vpow.pop %v2779
        %v2781 = vmul.f32 %v2658, 1.442695
        %v2782 = vpow.pop %v2781
        %v2783 = vmul.f32 %v2659, 1.442695
        %v2784 = vpow.pop %v2783
        %v2785 = vmul.f32 %v2660, 1.442695
        %v2786 = vpow.pop %v2785
        %v2787 = vmul.f32 %v2661, 1.442695
        %v2788 = vpow.pop %v2787
        %v2789 = vmul.f32 %v2662, 1.442695
        %v2790 = vpow.pop %v2789
        %v2791 = vadd.f32 %v2664, %v2668
        %v2792 = vadd.f32 %v2791, %v2672
        %v2793 = vadd.f32 %v2792, %v2676
        %v2794 = vadd.f32 %v2793, %v2680
        %v2795 = vadd.f32 %v2794, %v2684
        %v2796 = vadd.f32 %v2795, %v2688
        %v2797 = vadd.f32 %v2796, %v2692
        %v2798 = vadd.f32 %v2797, %v2696
        %v2799 = vadd.f32 %v2798, %v2700
        %v2800 = vadd.f32 %v2799, %v2704
        %v2801 = vadd.f32 %v2800, %v2708
        %v2802 = vadd.f32 %v2801, %v2712
        %v2803 = vadd.f32 %v2802, %v2716
        %v2804 = vadd.f32 %v2803, %v2720
        %v2805 = vadd.f32 %v2804, %v2724
        %v2806 = vadd.f32 %v2805, %v2728
        %v2807 = vadd.f32 %v2806, %v2732
        %v2808 = vadd.f32 %v2807, %v2736
        %v2809 = vadd.f32 %v2808, %v2740
        %v2810 = vadd.f32 %v2809, %v2744
        %v2811 = vadd.f32 %v2810, %v2748
        %v2812 = vadd.f32 %v2811, %v2752
        %v2813 = vadd.f32 %v2812, %v2756
        %v2814 = vadd.f32 %v2813, %v2760
        %v2815 = vadd.f32 %v2814, %v2764
        %v2816 = vadd.f32 %v2815, %v2768
        %v2817 = vadd.f32 %v2816, %v2772
        %v2818 = vadd.f32 %v2817, %v2776
        %v2819 = vadd.f32 %v2818, %v2780
        %v2820 = vadd.f32 %v2819, %v2784
        %v2821 = vadd.f32 %v2820, %v2788
        %v2822 = vrot.slane %v2821, 4
        %v2823 = vadd.f32 %v2821, %v2822
        %v2824 = vrot.slane %v2823, 2
        %v2825 = vadd.f32 %v2823, %v2824
        %v2826 = vrot.slane %v2825, 1
        %v2827 = vadd.f32 %v2825, %v2826
        %v2828 = vadd.f32 %v2666, %v2670
        %v2829 = vadd.f32 %v2828, %v2674
        %v2830 = vadd.f32 %v2829, %v2678
        %v2831 = vadd.f32 %v2830, %v2682
        %v2832 = vadd.f32 %v2831, %v2686
        %v2833 = vadd.f32 %v2832, %v2690
        %v2834 = vadd.f32 %v2833, %v2694
        %v2835 = vadd.f32 %v2834, %v2698
        %v2836 = vadd.f32 %v2835, %v2702
        %v2837 = vadd.f32 %v2836, %v2706
        %v2838 = vadd.f32 %v2837, %v2710
        %v2839 = vadd.f32 %v2838, %v2714
        %v2840 = vadd.f32 %v2839, %v2718
        %v2841 = vadd.f32 %v2840, %v2722
        %v2842 = vadd.f32 %v2841, %v2726
        %v2843 = vadd.f32 %v2842, %v2730
        %v2844 = vadd.f32 %v2843, %v2734
        %v2845 = vadd.f32 %v2844, %v2738
        %v2846 = vadd.f32 %v2845, %v2742
        %v2847 = vadd.f32 %v2846, %v2746
        %v2848 = vadd.f32 %v2847, %v2750
        %v2849 = vadd.f32 %v2848, %v2754
        %v2850 = vadd.f32 %v2849, %v2758
        %v2851 = vadd.f32 %v2850, %v2762
        %v2852 = vadd.f32 %v2851, %v2766
        %v2853 = vadd.f32 %v2852, %v2770
        %v2854 = vadd.f32 %v2853, %v2774
        %v2855 = vadd.f32 %v2854, %v2778
        %v2856 = vadd.f32 %v2855, %v2782
        %v2857 = vadd.f32 %v2856, %v2786
        %v2858 = vadd.f32 %v2857, %v2790
        %v2859 = vrot.slane %v2858, 4
        %v2860 = vadd.f32 %v2858, %v2859
        %v2861 = vrot.slane %v2860, 2
        %v2862 = vadd.f32 %v2860, %v2861
        %v2863 = vrot.slane %v2862, 1
        %v2864 = vadd.f32 %v2862, %v2863
        %v2865 = vrcp.pop %v2827
        %v2866 = vrcp.pop %v2864
        %v2867 = vmul.f32 %v2827, %v2865
        %v2868 = vmul.f32 %v2864, %v2866
        %v2869 = vsub.f32 2.0, %v2867
        %v2870 = vsub.f32 2.0, %v2868
        %v2871 = vmul.f32 %v2865, %v2869
        %v2872 = vmul.f32 %v2866, %v2870
        %v2873 = vpack.c.bf16 %v2668, %v2664
        %v2874 = vpack.c.bf16 %v2670, %v2666
        %v2875 = vpack.c.bf16 %v2676, %v2672
        %v2876 = vpack.c.bf16 %v2678, %v2674
        %v2877 = vpack.c.bf16 %v2684, %v2680
        %v2878 = vpack.c.bf16 %v2686, %v2682
        %v2879 = vpack.c.bf16 %v2692, %v2688
        %v2880 = vpack.c.bf16 %v2694, %v2690
        %v2881 = vpack.c.bf16 %v2700, %v2696
        %v2882 = vpack.c.bf16 %v2702, %v2698
        %v2883 = vpack.c.bf16 %v2708, %v2704
        %v2884 = vpack.c.bf16 %v2710, %v2706
        %v2885 = vpack.c.bf16 %v2716, %v2712
        %v2886 = vpack.c.bf16 %v2718, %v2714
        %v2887 = vpack.c.bf16 %v2724, %v2720
        %v2888 = vpack.c.bf16 %v2726, %v2722
        %v2889 = vpack.c.bf16 %v2732, %v2728
        %v2890 = vpack.c.bf16 %v2734, %v2730
        %v2891 = vpack.c.bf16 %v2740, %v2736
        %v2892 = vpack.c.bf16 %v2742, %v2738
        %v2893 = vpack.c.bf16 %v2748, %v2744
        %v2894 = vpack.c.bf16 %v2750, %v2746
        %v2895 = vpack.c.bf16 %v2756, %v2752
        %v2896 = vpack.c.bf16 %v2758, %v2754
        %v2897 = vpack.c.bf16 %v2764, %v2760
        %v2898 = vpack.c.bf16 %v2766, %v2762
        %v2899 = vpack.c.bf16 %v2772, %v2768
        %v2900 = vpack.c.bf16 %v2774, %v2770
        %v2901 = vpack.c.bf16 %v2780, %v2776
        %v2902 = vpack.c.bf16 %v2782, %v2778
        %v2903 = vpack.c.bf16 %v2788, %v2784
        %v2904 = vpack.c.bf16 %v2790, %v2786
        %v2905 = vpack.c.bf16 %v2871, %v2871
        %v2906 = vpack.c.bf16 %v2872, %v2872
        %2907 = vmatpush.bf16.msra.mxu0 %v2887
        %2908 = vmatpush.bf16.msra.mxu0 %v2885
        %2909 = vmatpush.bf16.msra.mxu0 %v2883
        %2910 = vmatpush.bf16.msra.mxu0 %v2881
        %2911 = vmatpush.bf16.msra.mxu0 %v2879
        %2912 = vmatpush.bf16.msra.mxu0 %v2877
        %2913 = vmatpush.bf16.msra.mxu0 %v2875
        %2914 = vmatpush.bf16.msra.mxu0 %v2873
        %2915 = vmatmul.bf16.gmra.mxu0 %v2905
        %v2916 = vpop.f32.mrf.mxu0
        %v2917 = vadd.f32 1e-09, %v2916
        %v2918 = vpop.f32.mrf.mxu0
        %2919 = vdwg.mxu0
        %2920 = vmatpush.bf16.msra.mxu0 %v2903
        %2921 = vmatpush.bf16.msra.mxu0 %v2901
        %2922 = vmatpush.bf16.msra.mxu0 %v2899
        %2923 = vmatpush.bf16.msra.mxu0 %v2897
        %2924 = vmatpush.bf16.msra.mxu0 %v2895
        %2925 = vmatpush.bf16.msra.mxu0 %v2893
        %2926 = vmatpush.bf16.msra.mxu0 %v2891
        %2927 = vmatpush.bf16.msra.mxu0 %v2889
        %2928 = vmatmul.bf16.gmra.mxu0 %v2906
        %v2929 = vpop.f32.mrf.mxu0
        %v2930 = vadd.f32 %v2917, %v2929
        %v2931 = vpop.f32.mrf.mxu0
        %2932 = vdwg.mxu0
        %2933 = vmatpush.bf16.msra.mxu0 %v2888
        %2934 = vmatpush.bf16.msra.mxu0 %v2886
        %2935 = vmatpush.bf16.msra.mxu0 %v2884
        %2936 = vmatpush.bf16.msra.mxu0 %v2882
        %2937 = vmatpush.bf16.msra.mxu0 %v2880
        %2938 = vmatpush.bf16.msra.mxu0 %v2878
        %2939 = vmatpush.bf16.msra.mxu0 %v2876
        %2940 = vmatpush.bf16.msra.mxu0 %v2874
        %2941 = vmatmul.bf16.gmra.mxu0 %v2905
        %v2942 = vpop.f32.mrf.mxu0
        %v2943 = vadd.f32 1e-09, %v2942
        %v2944 = vpop.f32.mrf.mxu0
        %2945 = vdwg.mxu0
        %2946 = vmatpush.bf16.msra.mxu0 %v2904
        %2947 = vmatpush.bf16.msra.mxu0 %v2902
        %2948 = vmatpush.bf16.msra.mxu0 %v2900
        %2949 = vmatpush.bf16.msra.mxu0 %v2898
        %2950 = vmatpush.bf16.msra.mxu0 %v2896
        %2951 = vmatpush.bf16.msra.mxu0 %v2894
        %2952 = vmatpush.bf16.msra.mxu0 %v2892
        %2953 = vmatpush.bf16.msra.mxu0 %v2890
        %2954 = vmatmul.bf16.gmra.mxu0 %v2906
        %v2955 = vpop.f32.mrf.mxu0
        %v2956 = vadd.f32 %v2943, %v2955
        %v2957 = vpop.f32.mrf.mxu0
        %2958 = vdwg.mxu0
        %v2959 = vrcp.pop %v2930
        %v2960 = vrcp.pop %v2956
        %v2961 = vmul.f32 %v2930, %v2959
        %v2962 = vmul.f32 %v2956, %v2960
        %v2963 = vsub.f32 2.0, %v2961
        %v2964 = vsub.f32 2.0, %v2962
        %v2965 = vmul.f32 %v2959, %v2963
        %v2966 = vmul.f32 %v2960, %v2964
        %v2967 = vld [vmem:[%s2] sm:$0xff]
        %v2968 = vld [vmem:[%s2 + $0x8] sm:$0xff]
        %v2969 = vld [vmem:[%s2 + $0x10] sm:$0xff]
        %v2970 = vld [vmem:[%s2 + $0x18] sm:$0xff]
        %v2971 = vld [vmem:[%s2 + $0x20] sm:$0xff]
        %v2972 = vld [vmem:[%s2 + $0x28] sm:$0xff]
        %v2973 = vld [vmem:[%s2 + $0x30] sm:$0xff]
        %v2974 = vld [vmem:[%s2 + $0x38] sm:$0xff]
        %v2975 = vld [vmem:[%s3] sm:$0xff]
        %v2976 = vld [vmem:[%s3 + $0x8] sm:$0xff]
        %v2977 = vld [vmem:[%s3 + $0x10] sm:$0xff]
        %v2978 = vld [vmem:[%s3 + $0x18] sm:$0xff]
        %v2979 = vld [vmem:[%s3 + $0x20] sm:$0xff]
        %v2980 = vld [vmem:[%s3 + $0x28] sm:$0xff]
        %v2981 = vld [vmem:[%s3 + $0x30] sm:$0xff]
        %v2982 = vld [vmem:[%s3 + $0x38] sm:$0xff]
        %2984 = vset.pattern.permute.xlu0 0
        %2985 = vperm.xlu0 %2984, %v2975
        %v2986 = vpop.permute.xlu0 %2985
        %2989 = vset.pattern.permute.xlu0 0
        %2990 = vperm.xlu0 %2989, %v2976
        %v2991 = vpop.permute.xlu0 %2990
        %2994 = vset.pattern.permute.xlu0 0
        %2995 = vperm.xlu0 %2994, %v2977
        %v2996 = vpop.permute.xlu0 %2995
        %2999 = vset.pattern.permute.xlu0 0
        %3000 = vperm.xlu0 %2999, %v2978
        %v3001 = vpop.permute.xlu0 %3000
        %3004 = vset.pattern.permute.xlu0 0
        %3005 = vperm.xlu0 %3004, %v2979
        %v3006 = vpop.permute.xlu0 %3005
        %3009 = vset.pattern.permute.xlu0 0
        %3010 = vperm.xlu0 %3009, %v2980
        %v3011 = vpop.permute.xlu0 %3010
        %3014 = vset.pattern.permute.xlu0 0
        %3015 = vperm.xlu0 %3014, %v2981
        %v3016 = vpop.permute.xlu0 %3015
        %3019 = vset.pattern.permute.xlu0 0
        %3020 = vperm.xlu0 %3019, %v2982
        %v3021 = vpop.permute.xlu0 %3020
        %v3024 = vsel %vm359, %v2967, 0
        %v3027 = vsel %vm359, %v2968, 0
        %v3030 = vsel %vm359, %v2969, 0
        %v3033 = vsel %vm359, %v2970, 0
        %v3036 = vsel %vm359, %v2971, 0
        %v3039 = vsel %vm359, %v2972, 0
        %v3042 = vsel %vm359, %v2973, 0
        %v3045 = vsel %vm359, %v2974, 0
        %3047 = vmatpush.msra.mxu0 0.0
        %3048 = vmatpush.msra.mxu0 0.0
        %3049 = vmatpush.msra.mxu0 0.0
        %3050 = vmatpush.msra.mxu0 0.0
        %3051 = vmatpush.msra.mxu0 0.0
        %3052 = vmatpush.msra.mxu0 0.0
        %3053 = vmatpush.msra.mxu0 0.0
        %3054 = vmatpush.msra.mxu0 0.0
        %3055 = vmatpush.msra.mxu0 %v1964
        %3056 = vmatpush.msra.mxu0 %v1962
        %3057 = vmatpush.msra.mxu0 %v1960
        %3058 = vmatpush.msra.mxu0 %v1958
        %3059 = vmatpush.msra.mxu0 %v1956
        %3060 = vmatpush.msra.mxu0 %v1954
        %3061 = vmatpush.msra.mxu0 %v1952
        %3062 = vmatpush.msra.mxu0 %v1950
        %3063 = vmatmul.f32.gmra.mxu0 %v3024
        %v3064 = vpop.f32.mrf.mxu0
        %v3065 = vadd.f32 %v2986, %v3064
        %3066 = vmatmul.f32.gmra.mxu0 %v3027
        %v3067 = vpop.f32.mrf.mxu0
        %v3068 = vadd.f32 %v2991, %v3067
        %3069 = vmatmul.f32.gmra.mxu0 %v3030
        %v3070 = vpop.f32.mrf.mxu0
        %v3071 = vadd.f32 %v2996, %v3070
        %3072 = vmatmul.f32.gmra.mxu0 %v3033
        %v3073 = vpop.f32.mrf.mxu0
        %v3074 = vadd.f32 %v3001, %v3073
        %3075 = vmatmul.f32.gmra.mxu0 %v3036
        %v3076 = vpop.f32.mrf.mxu0
        %v3077 = vadd.f32 %v3006, %v3076
        %3078 = vmatmul.f32.gmra.mxu0 %v3039
        %v3079 = vpop.f32.mrf.mxu0
        %v3080 = vadd.f32 %v3011, %v3079
        %3081 = vmatmul.f32.gmra.mxu0 %v3042
        %v3082 = vpop.f32.mrf.mxu0
        %v3083 = vadd.f32 %v3016, %v3082
        %3084 = vmatmul.f32.gmra.mxu0 %v3045
        %v3085 = vpop.f32.mrf.mxu0
        %v3086 = vadd.f32 %v3021, %v3085
        %3087 = vdwg.mxu0
        %3088 = vmatpush.msra.mxu0 0.0
        %3089 = vmatpush.msra.mxu0 0.0
        %3090 = vmatpush.msra.mxu0 0.0
        %3091 = vmatpush.msra.mxu0 0.0
        %3092 = vmatpush.msra.mxu0 0.0
        %3093 = vmatpush.msra.mxu0 0.0
        %3094 = vmatpush.msra.mxu0 0.0
        %3095 = vmatpush.msra.mxu0 0.0
        %3096 = vmatpush.msra.mxu0 %v1965
        %3097 = vmatpush.msra.mxu0 %v1963
        %3098 = vmatpush.msra.mxu0 %v1961
        %3099 = vmatpush.msra.mxu0 %v1959
        %3100 = vmatpush.msra.mxu0 %v1957
        %3101 = vmatpush.msra.mxu0 %v1955
        %3102 = vmatpush.msra.mxu0 %v1953
        %3103 = vmatpush.msra.mxu0 %v1951
        %3104 = vmatmul.f32.gmra.mxu0 %v3024
        %v3105 = vpop.f32.mrf.mxu0
        %v3106 = vadd.f32 %v2986, %v3105
        %3107 = vmatmul.f32.gmra.mxu0 %v3027
        %v3108 = vpop.f32.mrf.mxu0
        %v3109 = vadd.f32 %v2991, %v3108
        %3110 = vmatmul.f32.gmra.mxu0 %v3030
        %v3111 = vpop.f32.mrf.mxu0
        %v3112 = vadd.f32 %v2996, %v3111
        %3113 = vmatmul.f32.gmra.mxu0 %v3033
        %v3114 = vpop.f32.mrf.mxu0
        %v3115 = vadd.f32 %v3001, %v3114
        %3116 = vmatmul.f32.gmra.mxu0 %v3036
        %v3117 = vpop.f32.mrf.mxu0
        %v3118 = vadd.f32 %v3006, %v3117
        %3119 = vmatmul.f32.gmra.mxu0 %v3039
        %v3120 = vpop.f32.mrf.mxu0
        %v3121 = vadd.f32 %v3011, %v3120
        %3122 = vmatmul.f32.gmra.mxu0 %v3042
        %v3123 = vpop.f32.mrf.mxu0
        %v3124 = vadd.f32 %v3016, %v3123
        %3125 = vmatmul.f32.gmra.mxu0 %v3045
        %v3126 = vpop.f32.mrf.mxu0
        %v3127 = vadd.f32 %v3021, %v3126
        %3128 = vdwg.mxu0
        %v3129 = vmul.f32 %v3065, %v2871
        %v3130 = vmul.f32 %v3106, %v2872
        %v3131 = vmul.f32 %v3068, %v2871
        %v3132 = vmul.f32 %v3109, %v2872
        %v3133 = vmul.f32 %v3071, %v2871
        %v3134 = vmul.f32 %v3112, %v2872
        %v3135 = vmul.f32 %v3074, %v2871
        %v3136 = vmul.f32 %v3115, %v2872
        %v3137 = vmul.f32 %v3077, %v2871
        %v3138 = vmul.f32 %v3118, %v2872
        %v3139 = vmul.f32 %v3080, %v2871
        %v3140 = vmul.f32 %v3121, %v2872
        %v3141 = vmul.f32 %v3083, %v2871
        %v3142 = vmul.f32 %v3124, %v2872
        %v3143 = vmul.f32 %v3086, %v2871
        %v3144 = vmul.f32 %v3127, %v2872
        %v3145 = vpack.c.bf16 %v3131, %v3129
        %v3146 = vpack.c.bf16 %v3132, %v3130
        %v3147 = vpack.c.bf16 %v3135, %v3133
        %v3148 = vpack.c.bf16 %v3136, %v3134
        %v3149 = vpack.c.bf16 %v3139, %v3137
        %v3150 = vpack.c.bf16 %v3140, %v3138
        %v3151 = vpack.c.bf16 %v3143, %v3141
        %v3152 = vpack.c.bf16 %v3144, %v3142
        %3153 = vmatpush.bf16.msra.mxu0 %v2887
        %3154 = vmatpush.bf16.msra.mxu0 %v2885
        %3155 = vmatpush.bf16.msra.mxu0 %v2883
        %3156 = vmatpush.bf16.msra.mxu0 %v2881
        %3157 = vmatpush.bf16.msra.mxu0 %v2879
        %3158 = vmatpush.bf16.msra.mxu0 %v2877
        %3159 = vmatpush.bf16.msra.mxu0 %v2875
        %3160 = vmatpush.bf16.msra.mxu0 %v2873
        %3161 = vmatmul.bf16.gmra.mxu0 %v3145
        %v3162 = vpop.f32.mrf.mxu0
        %v3163 = vadd.f32 0.0, %v3162
        %v3164 = vpop.f32.mrf.mxu0
        %v3165 = vadd.f32 0.0, %v3164
        %3166 = vmatmul.bf16.gmra.mxu0 %v3147
        %v3167 = vpop.f32.mrf.mxu0
        %v3168 = vadd.f32 0.0, %v3167
        %v3169 = vpop.f32.mrf.mxu0
        %v3170 = vadd.f32 0.0, %v3169
        %3171 = vmatmul.bf16.gmra.mxu0 %v3149
        %v3172 = vpop.f32.mrf.mxu0
        %v3173 = vadd.f32 0.0, %v3172
        %v3174 = vpop.f32.mrf.mxu0
        %v3175 = vadd.f32 0.0, %v3174
        %3176 = vmatmul.bf16.gmra.mxu0 %v3151
        %v3177 = vpop.f32.mrf.mxu0
        %v3178 = vadd.f32 0.0, %v3177
        %v3179 = vpop.f32.mrf.mxu0
        %v3180 = vadd.f32 0.0, %v3179
        %3181 = vdwg.mxu0
        %3182 = vmatpush.bf16.msra.mxu0 %v2903
        %3183 = vmatpush.bf16.msra.mxu0 %v2901
        %3184 = vmatpush.bf16.msra.mxu0 %v2899
        %3185 = vmatpush.bf16.msra.mxu0 %v2897
        %3186 = vmatpush.bf16.msra.mxu0 %v2895
        %3187 = vmatpush.bf16.msra.mxu0 %v2893
        %3188 = vmatpush.bf16.msra.mxu0 %v2891
        %3189 = vmatpush.bf16.msra.mxu0 %v2889
        %3190 = vmatmul.bf16.gmra.mxu0 %v3146
        %v3191 = vpop.f32.mrf.mxu0
        %v3192 = vadd.f32 %v3163, %v3191
        %v3193 = vpop.f32.mrf.mxu0
        %v3194 = vadd.f32 %v3165, %v3193
        %3195 = vmatmul.bf16.gmra.mxu0 %v3148
        %v3196 = vpop.f32.mrf.mxu0
        %v3197 = vadd.f32 %v3168, %v3196
        %v3198 = vpop.f32.mrf.mxu0
        %v3199 = vadd.f32 %v3170, %v3198
        %3200 = vmatmul.bf16.gmra.mxu0 %v3150
        %v3201 = vpop.f32.mrf.mxu0
        %v3202 = vadd.f32 %v3173, %v3201
        %v3203 = vpop.f32.mrf.mxu0
        %v3204 = vadd.f32 %v3175, %v3203
        %3205 = vmatmul.bf16.gmra.mxu0 %v3152
        %v3206 = vpop.f32.mrf.mxu0
        %v3207 = vadd.f32 %v3178, %v3206
        %v3208 = vpop.f32.mrf.mxu0
        %v3209 = vadd.f32 %v3180, %v3208
        %3210 = vdwg.mxu0
        %3211 = vmatpush.bf16.msra.mxu0 %v2888
        %3212 = vmatpush.bf16.msra.mxu0 %v2886
        %3213 = vmatpush.bf16.msra.mxu0 %v2884
        %3214 = vmatpush.bf16.msra.mxu0 %v2882
        %3215 = vmatpush.bf16.msra.mxu0 %v2880
        %3216 = vmatpush.bf16.msra.mxu0 %v2878
        %3217 = vmatpush.bf16.msra.mxu0 %v2876
        %3218 = vmatpush.bf16.msra.mxu0 %v2874
        %3219 = vmatmul.bf16.gmra.mxu0 %v3145
        %v3220 = vpop.f32.mrf.mxu0
        %v3221 = vadd.f32 0.0, %v3220
        %v3222 = vpop.f32.mrf.mxu0
        %v3223 = vadd.f32 0.0, %v3222
        %3224 = vmatmul.bf16.gmra.mxu0 %v3147
        %v3225 = vpop.f32.mrf.mxu0
        %v3226 = vadd.f32 0.0, %v3225
        %v3227 = vpop.f32.mrf.mxu0
        %v3228 = vadd.f32 0.0, %v3227
        %3229 = vmatmul.bf16.gmra.mxu0 %v3149
        %v3230 = vpop.f32.mrf.mxu0
        %v3231 = vadd.f32 0.0, %v3230
        %v3232 = vpop.f32.mrf.mxu0
        %v3233 = vadd.f32 0.0, %v3232
        %3234 = vmatmul.bf16.gmra.mxu0 %v3151
        %v3235 = vpop.f32.mrf.mxu0
        %v3236 = vadd.f32 0.0, %v3235
        %v3237 = vpop.f32.mrf.mxu0
        %v3238 = vadd.f32 0.0, %v3237
        %3239 = vdwg.mxu0
        %3240 = vmatpush.bf16.msra.mxu0 %v2904
        %3241 = vmatpush.bf16.msra.mxu0 %v2902
        %3242 = vmatpush.bf16.msra.mxu0 %v2900
        %3243 = vmatpush.bf16.msra.mxu0 %v2898
        %3244 = vmatpush.bf16.msra.mxu0 %v2896
        %3245 = vmatpush.bf16.msra.mxu0 %v2894
        %3246 = vmatpush.bf16.msra.mxu0 %v2892
        %3247 = vmatpush.bf16.msra.mxu0 %v2890
        %3248 = vmatmul.bf16.gmra.mxu0 %v3146
        %v3249 = vpop.f32.mrf.mxu0
        %v3250 = vadd.f32 %v3221, %v3249
        %v3251 = vpop.f32.mrf.mxu0
        %v3252 = vadd.f32 %v3223, %v3251
        %3253 = vmatmul.bf16.gmra.mxu0 %v3148
        %v3254 = vpop.f32.mrf.mxu0
        %v3255 = vadd.f32 %v3226, %v3254
        %v3256 = vpop.f32.mrf.mxu0
        %v3257 = vadd.f32 %v3228, %v3256
        %3258 = vmatmul.bf16.gmra.mxu0 %v3150
        %v3259 = vpop.f32.mrf.mxu0
        %v3260 = vadd.f32 %v3231, %v3259
        %v3261 = vpop.f32.mrf.mxu0
        %v3262 = vadd.f32 %v3233, %v3261
        %3263 = vmatmul.bf16.gmra.mxu0 %v3152
        %v3264 = vpop.f32.mrf.mxu0
        %v3265 = vadd.f32 %v3236, %v3264
        %v3266 = vpop.f32.mrf.mxu0
        %v3267 = vadd.f32 %v3238, %v3266
        %3268 = vdwg.mxu0
        %v3269 = vperm.slane %v2965, 0
        %v3270 = vperm.slane %v2966, 0
        %v3271 = vmul.f32 %v3192, %v3269
        %v3272 = vmul.f32 %v3250, %v3270
        %v3273 = vmul.f32 %v3194, %v3269
        %v3274 = vmul.f32 %v3252, %v3270
        %v3275 = vmul.f32 %v3197, %v3269
        %v3276 = vmul.f32 %v3255, %v3270
        %v3277 = vmul.f32 %v3199, %v3269
        %v3278 = vmul.f32 %v3257, %v3270
        %v3279 = vmul.f32 %v3202, %v3269
        %v3280 = vmul.f32 %v3260, %v3270
        %v3281 = vmul.f32 %v3204, %v3269
        %v3282 = vmul.f32 %v3262, %v3270
        %v3283 = vmul.f32 %v3207, %v3269
        %v3284 = vmul.f32 %v3265, %v3270
        %v3285 = vmul.f32 %v3209, %v3269
        %v3286 = vmul.f32 %v3267, %v3270
        %v3287 = vld [vmem:[#allocation5] sm:$0xff]
        %v3288 = vld [vmem:[#allocation5 + $0x8] sm:$0xff]
        %v3289 = vld [vmem:[#allocation5 + $0x10] sm:$0xff]
        %v3290 = vld [vmem:[#allocation5 + $0x18] sm:$0xff]
        %v3291 = vld [vmem:[#allocation5 + $0x20] sm:$0xff]
        %v3292 = vld [vmem:[#allocation5 + $0x28] sm:$0xff]
        %v3293 = vld [vmem:[#allocation5 + $0x30] sm:$0xff]
        %v3294 = vld [vmem:[#allocation5 + $0x38] sm:$0xff]
        %v3295 = vsub.f32 %v1950, %v3271
        %v3296 = vsub.f32 %v1951, %v3272
        %v3297 = vsub.f32 %v1952, %v3273
        %v3298 = vsub.f32 %v1953, %v3274
        %v3299 = vsub.f32 %v1954, %v3275
        %v3300 = vsub.f32 %v1955, %v3276
        %v3301 = vsub.f32 %v1956, %v3277
        %v3302 = vsub.f32 %v1957, %v3278
        %v3303 = vsub.f32 %v1958, %v3279
        %v3304 = vsub.f32 %v1959, %v3280
        %v3305 = vsub.f32 %v1960, %v3281
        %v3306 = vsub.f32 %v1961, %v3282
        %v3307 = vsub.f32 %v1962, %v3283
        %v3308 = vsub.f32 %v1963, %v3284
        %v3309 = vsub.f32 %v1964, %v3285
        %v3310 = vsub.f32 %v1965, %v3286
        %v3311 = vld [vmem:[%s5] sm:$0xff]
        %v3312 = vld [vmem:[%s5 + $0x8] sm:$0xff]
        %v3313 = vld [vmem:[%s5 + $0x10] sm:$0xff]
        %v3314 = vld [vmem:[%s5 + $0x18] sm:$0xff]
        %v3315 = vld [vmem:[%s5 + $0x20] sm:$0xff]
        %v3316 = vld [vmem:[%s5 + $0x28] sm:$0xff]
        %v3317 = vld [vmem:[%s5 + $0x30] sm:$0xff]
        %v3318 = vld [vmem:[%s5 + $0x38] sm:$0xff]
        %3320 = vset.pattern.permute.xlu0 0
        %3321 = vperm.xlu0 %3320, %v3311
        %v3322 = vpop.permute.xlu0 %3321
        %3325 = vset.pattern.permute.xlu0 0
        %3326 = vperm.xlu0 %3325, %v3312
        %v3327 = vpop.permute.xlu0 %3326
        %3330 = vset.pattern.permute.xlu0 0
        %3331 = vperm.xlu0 %3330, %v3313
        %v3332 = vpop.permute.xlu0 %3331
        %3335 = vset.pattern.permute.xlu0 0
        %3336 = vperm.xlu0 %3335, %v3314
        %v3337 = vpop.permute.xlu0 %3336
        %3340 = vset.pattern.permute.xlu0 0
        %3341 = vperm.xlu0 %3340, %v3315
        %v3342 = vpop.permute.xlu0 %3341
        %3345 = vset.pattern.permute.xlu0 0
        %3346 = vperm.xlu0 %3345, %v3316
        %v3347 = vpop.permute.xlu0 %3346
        %3350 = vset.pattern.permute.xlu0 0
        %3351 = vperm.xlu0 %3350, %v3317
        %v3352 = vpop.permute.xlu0 %3351
        %3355 = vset.pattern.permute.xlu0 0
        %3356 = vperm.xlu0 %3355, %v3318
        %v3357 = vpop.permute.xlu0 %3356
        %v3360 = vsel %vm359, %v3287, 0
        %v3363 = vsel %vm359, %v3288, 0
        %v3366 = vsel %vm359, %v3289, 0
        %v3369 = vsel %vm359, %v3290, 0
        %v3372 = vsel %vm359, %v3291, 0
        %v3375 = vsel %vm359, %v3292, 0
        %v3378 = vsel %vm359, %v3293, 0
        %v3381 = vsel %vm359, %v3294, 0
        %3383 = vmatpush.msra.mxu0 0.0
        %3384 = vmatpush.msra.mxu0 0.0
        %3385 = vmatpush.msra.mxu0 0.0
        %3386 = vmatpush.msra.mxu0 0.0
        %3387 = vmatpush.msra.mxu0 0.0
        %3388 = vmatpush.msra.mxu0 0.0
        %3389 = vmatpush.msra.mxu0 0.0
        %3390 = vmatpush.msra.mxu0 0.0
        %3391 = vmatpush.msra.mxu0 %v3309
        %3392 = vmatpush.msra.mxu0 %v3307
        %3393 = vmatpush.msra.mxu0 %v3305
        %3394 = vmatpush.msra.mxu0 %v3303
        %3395 = vmatpush.msra.mxu0 %v3301
        %3396 = vmatpush.msra.mxu0 %v3299
        %3397 = vmatpush.msra.mxu0 %v3297
        %3398 = vmatpush.msra.mxu0 %v3295
        %3399 = vmatmul.f32.gmra.mxu0 %v3360
        %v3400 = vpop.f32.mrf.mxu0
        %v3401 = vadd.f32 %v3322, %v3400
        %3402 = vmatmul.f32.gmra.mxu0 %v3363
        %v3403 = vpop.f32.mrf.mxu0
        %v3404 = vadd.f32 %v3327, %v3403
        %3405 = vmatmul.f32.gmra.mxu0 %v3366
        %v3406 = vpop.f32.mrf.mxu0
        %v3407 = vadd.f32 %v3332, %v3406
        %3408 = vmatmul.f32.gmra.mxu0 %v3369
        %v3409 = vpop.f32.mrf.mxu0
        %v3410 = vadd.f32 %v3337, %v3409
        %3411 = vmatmul.f32.gmra.mxu0 %v3372
        %v3412 = vpop.f32.mrf.mxu0
        %v3413 = vadd.f32 %v3342, %v3412
        %3414 = vmatmul.f32.gmra.mxu0 %v3375
        %v3415 = vpop.f32.mrf.mxu0
        %v3416 = vadd.f32 %v3347, %v3415
        %3417 = vmatmul.f32.gmra.mxu0 %v3378
        %v3418 = vpop.f32.mrf.mxu0
        %v3419 = vadd.f32 %v3352, %v3418
        %3420 = vmatmul.f32.gmra.mxu0 %v3381
        %v3421 = vpop.f32.mrf.mxu0
        %v3422 = vadd.f32 %v3357, %v3421
        %3423 = vdwg.mxu0
        %3424 = vmatpush.msra.mxu0 0.0
        %3425 = vmatpush.msra.mxu0 0.0
        %3426 = vmatpush.msra.mxu0 0.0
        %3427 = vmatpush.msra.mxu0 0.0
        %3428 = vmatpush.msra.mxu0 0.0
        %3429 = vmatpush.msra.mxu0 0.0
        %3430 = vmatpush.msra.mxu0 0.0
        %3431 = vmatpush.msra.mxu0 0.0
        %3432 = vmatpush.msra.mxu0 %v3310
        %3433 = vmatpush.msra.mxu0 %v3308
        %3434 = vmatpush.msra.mxu0 %v3306
        %3435 = vmatpush.msra.mxu0 %v3304
        %3436 = vmatpush.msra.mxu0 %v3302
        %3437 = vmatpush.msra.mxu0 %v3300
        %3438 = vmatpush.msra.mxu0 %v3298
        %3439 = vmatpush.msra.mxu0 %v3296
        %3440 = vmatmul.f32.gmra.mxu0 %v3360
        %v3441 = vpop.f32.mrf.mxu0
        %v3442 = vadd.f32 %v3322, %v3441
        %3443 = vmatmul.f32.gmra.mxu0 %v3363
        %v3444 = vpop.f32.mrf.mxu0
        %v3445 = vadd.f32 %v3327, %v3444
        %3446 = vmatmul.f32.gmra.mxu0 %v3366
        %v3447 = vpop.f32.mrf.mxu0
        %v3448 = vadd.f32 %v3332, %v3447
        %3449 = vmatmul.f32.gmra.mxu0 %v3369
        %v3450 = vpop.f32.mrf.mxu0
        %v3451 = vadd.f32 %v3337, %v3450
        %3452 = vmatmul.f32.gmra.mxu0 %v3372
        %v3453 = vpop.f32.mrf.mxu0
        %v3454 = vadd.f32 %v3342, %v3453
        %3455 = vmatmul.f32.gmra.mxu0 %v3375
        %v3456 = vpop.f32.mrf.mxu0
        %v3457 = vadd.f32 %v3347, %v3456
        %3458 = vmatmul.f32.gmra.mxu0 %v3378
        %v3459 = vpop.f32.mrf.mxu0
        %v3460 = vadd.f32 %v3352, %v3459
        %3461 = vmatmul.f32.gmra.mxu0 %v3381
        %v3462 = vpop.f32.mrf.mxu0
        %v3463 = vadd.f32 %v3357, %v3462
        %3464 = vdwg.mxu0
        %s3465 = scalar_lea.vmem %s317, 128 [#allocation7]
        %3466 = vst [vmem:[%s3465] sm:$0xff] %v3401
        %3467 = vst [vmem:[%s3465 + $0x8] sm:$0xff] %v3442
        %3468 = vst [vmem:[%s3465 + $0x10] sm:$0xff] %v3404
        %3469 = vst [vmem:[%s3465 + $0x18] sm:$0xff] %v3445
        %3470 = vst [vmem:[%s3465 + $0x20] sm:$0xff] %v3407
        %3471 = vst [vmem:[%s3465 + $0x28] sm:$0xff] %v3448
        %3472 = vst [vmem:[%s3465 + $0x30] sm:$0xff] %v3410
        %3473 = vst [vmem:[%s3465 + $0x38] sm:$0xff] %v3451
        %3474 = vst [vmem:[%s3465 + $0x40] sm:$0xff] %v3413
        %3475 = vst [vmem:[%s3465 + $0x48] sm:$0xff] %v3454
        %3476 = vst [vmem:[%s3465 + $0x50] sm:$0xff] %v3416
        %3477 = vst [vmem:[%s3465 + $0x58] sm:$0xff] %v3457
        %3478 = vst [vmem:[%s3465 + $0x60] sm:$0xff] %v3419
        %3479 = vst [vmem:[%s3465 + $0x68] sm:$0xff] %v3460
        %3480 = vst [vmem:[%s3465 + $0x70] sm:$0xff] %v3422
        %3481 = vst [vmem:[%s3465 + $0x78] sm:$0xff] %v3463
        %v3482 = vadd.f32 %v3401, %v3442
        %3483 = vadd.xlane.f32.xlu0 %v3482
        %v3484 = vpop.xlane.xlu0 %3483
        %v3485 = vadd.f32 %v3404, %v3445
        %3486 = vadd.xlane.f32.xlu0 %v3485
        %v3487 = vpop.xlane.xlu0 %3486
        %v3488 = vadd.f32 %v3407, %v3448
        %3489 = vadd.xlane.f32.xlu0 %v3488
        %v3490 = vpop.xlane.xlu0 %3489
        %v3491 = vadd.f32 %v3410, %v3451
        %3492 = vadd.xlane.f32.xlu0 %v3491
        %v3493 = vpop.xlane.xlu0 %3492
        %v3494 = vadd.f32 %v3413, %v3454
        %3495 = vadd.xlane.f32.xlu0 %v3494
        %v3496 = vpop.xlane.xlu0 %3495
        %v3497 = vadd.f32 %v3416, %v3457
        %3498 = vadd.xlane.f32.xlu0 %v3497
        %v3499 = vpop.xlane.xlu0 %3498
        %v3500 = vadd.f32 %v3419, %v3460
        %3501 = vadd.xlane.f32.xlu0 %v3500
        %v3502 = vpop.xlane.xlu0 %3501
        %v3503 = vadd.f32 %v3422, %v3463
        %3504 = vadd.xlane.f32.xlu0 %v3503
        %v3505 = vpop.xlane.xlu0 %3504
        %s3506 = scalar_lea.vmem %s333, 64
        %3507 = vst.msk [vmem:[%s3506] sm:$0xff] %vm1891, %v3484
        %3508 = vst.msk [vmem:[%s3506 + $0x8] sm:$0xff] %vm1891, %v3487
        %3509 = vst.msk [vmem:[%s3506 + $0x10] sm:$0xff] %vm1891, %v3490
        %3510 = vst.msk [vmem:[%s3506 + $0x18] sm:$0xff] %vm1891, %v3493
        %3511 = vst.msk [vmem:[%s3506 + $0x20] sm:$0xff] %vm1891, %v3496
        %3512 = vst.msk [vmem:[%s3506 + $0x28] sm:$0xff] %vm1891, %v3499
        %3513 = vst.msk [vmem:[%s3506 + $0x30] sm:$0xff] %vm1891, %v3502
        %3514 = vst.msk [vmem:[%s3506 + $0x38] sm:$0xff] %vm1891, %v3505
        %v3515 = vmul.f32 %v3401, %v3401
        %v3516 = vmul.f32 %v3442, %v3442
        %v3517 = vmul.f32 %v3404, %v3404
        %v3518 = vmul.f32 %v3445, %v3445
        %v3519 = vmul.f32 %v3407, %v3407
        %v3520 = vmul.f32 %v3448, %v3448
        %v3521 = vmul.f32 %v3410, %v3410
        %v3522 = vmul.f32 %v3451, %v3451
        %v3523 = vmul.f32 %v3413, %v3413
        %v3524 = vmul.f32 %v3454, %v3454
        %v3525 = vmul.f32 %v3416, %v3416
        %v3526 = vmul.f32 %v3457, %v3457
        %v3527 = vmul.f32 %v3419, %v3419
        %v3528 = vmul.f32 %v3460, %v3460
        %v3529 = vmul.f32 %v3422, %v3422
        %v3530 = vmul.f32 %v3463, %v3463
        %v3531 = vadd.f32 %v3515, %v3516
        %3532 = vadd.xlane.f32.xlu0 %v3531
        %v3533 = vpop.xlane.xlu0 %3532
        %v3534 = vadd.f32 %v3517, %v3518
        %3535 = vadd.xlane.f32.xlu0 %v3534
        %v3536 = vpop.xlane.xlu0 %3535
        %v3537 = vadd.f32 %v3519, %v3520
        %3538 = vadd.xlane.f32.xlu0 %v3537
        %v3539 = vpop.xlane.xlu0 %3538
        %v3540 = vadd.f32 %v3521, %v3522
        %3541 = vadd.xlane.f32.xlu0 %v3540
        %v3542 = vpop.xlane.xlu0 %3541
        %v3543 = vadd.f32 %v3523, %v3524
        %3544 = vadd.xlane.f32.xlu0 %v3543
        %v3545 = vpop.xlane.xlu0 %3544
        %v3546 = vadd.f32 %v3525, %v3526
        %3547 = vadd.xlane.f32.xlu0 %v3546
        %v3548 = vpop.xlane.xlu0 %3547
        %v3549 = vadd.f32 %v3527, %v3528
        %3550 = vadd.xlane.f32.xlu0 %v3549
        %v3551 = vpop.xlane.xlu0 %3550
        %v3552 = vadd.f32 %v3529, %v3530
        %3553 = vadd.xlane.f32.xlu0 %v3552
        %v3554 = vpop.xlane.xlu0 %3553
        %3555 = vst.msk [vmem:[%s3506] sm:$0xff] %vm1940, %v3533
        %3556 = vst.msk [vmem:[%s3506 + $0x8] sm:$0xff] %vm1940, %v3536
        %3557 = vst.msk [vmem:[%s3506 + $0x10] sm:$0xff] %vm1940, %v3539
        %3558 = vst.msk [vmem:[%s3506 + $0x18] sm:$0xff] %vm1940, %v3542
        %3559 = vst.msk [vmem:[%s3506 + $0x20] sm:$0xff] %vm1940, %v3545
        %3560 = vst.msk [vmem:[%s3506 + $0x28] sm:$0xff] %vm1940, %v3548
        %3561 = vst.msk [vmem:[%s3506 + $0x30] sm:$0xff] %vm1940, %v3551
        %3562 = vst.msk [vmem:[%s3506 + $0x38] sm:$0xff] %vm1940, %v3554
        %s3563 = sand.u32 %s165, 1
        %s3564 = scalar_lea.sflag [#allocation4], %s3563
        %s3565 = sand.u32 %s165, 1
        %s3566 = smul.addr %s3565, 256
        %s3567 = scalar_lea.vmem [#allocation7], %s3566
        %s3568 = smul.u32 2, %s26
        %p3569 = scmp.lt.s32.totalorder %s3568, 3
        %s3570 = scalar_select %p3569, %s3568, 3
        %s3571 = smul.addr %s3570, 8
        %s3572 = smul.addr %s3571, 8
        %s3573 = scalar_lea.vmem %s7, %s3572
        // Predicated region
        $region53: #{tpu_custom_call.1} parent=43 // pred_check
          %p3574 = pneg %p175
        $region54: #{tpu_custom_call.1} parent=43 // pred_check_branch
          %3576 = sbr.rel (%p3574) target = $region56
        $region55: #{tpu_custom_call.1} parent=43 // pred_region
          %s3577 = smul.u32 2, %s26
          %3579 = vsyncadd %s3564, 0
          %s3580 = smul.addr %s3577, 16
          %s3581 = smul.addr %s3580, 8
          %s3582 = scalar_lea.hbm %s6, %s3581
          %s3583 = sshll.u32 %s3567, 4
          %s3584 = int_to_ptr.vmem [resolvable:$true] %s3583
          %s3585 = sshll.u32 %s3582, 4
          %s3586 = int_to_ptr.hbm [resolvable:$true] %s3585
          %3591 = dma.vmem_to_hbm [thread:$0]  %s3584, 4096, %s3586, %s3564, 256, 256, 16
        $region56: #{tpu_custom_call.1} parent=43 // pred_fallthru
          _
        // Predicated region
        $region57: #{tpu_custom_call.1} parent=43 // pred_check
          %p3592 = pneg %p201
        $region58: #{tpu_custom_call.1} parent=43 // pred_check_branch
          %3594 = sbr.rel (%p3592) target = $region60
        $region59: #{tpu_custom_call.1} parent=43 // pred_region
          %s3595 = smul.u32 2, %s26
        $region60: #{tpu_custom_call.1} parent=43 // pred_fallthru
          _
      $region44: #{tpu_custom_call.1} parent=5 // pred_fallthru
        _
      %p3596 = scmp.le.s32.totalorder 2, %s21
      // Predicated region
      $region61: #{tpu_custom_call.1} parent=5 // pred_check
        %p3597 = pneg %p3596
      $region62: #{tpu_custom_call.1} parent=5 // pred_check_branch
        %3599 = sbr.rel (%p3597) target = $region64
      $region63: #{tpu_custom_call.1} parent=5 // pred_region
        %s3600 = ssub.s32 %s21, 2
        // Predicated region
        $region65: #{tpu_custom_call.1} parent=63 // pred_check
          %p3601 = pneg %p181
        $region66: #{tpu_custom_call.1} parent=63 // pred_check_branch
          %3603 = sbr.rel (%p3601) target = $region68
        $region67: #{tpu_custom_call.1} parent=63 // pred_region
          %s3604 = sand.u32 %s166, 1
          %s3605 = scalar_lea.sflag [#allocation4], %s3604
          %s3606 = sand.u32 %s166, 1
          %s3607 = smul.addr %s3606, 256
          %s3608 = scalar_lea.vmem [#allocation7], %s3607
          %3610 = dma.done %s3605, 4096
        $region68: #{tpu_custom_call.1} parent=63 // pred_fallthru
          _
        // Predicated region
        $region69: #{tpu_custom_call.1} parent=63 // pred_check
          %p3611 = pneg %p207
        $region70: #{tpu_custom_call.1} parent=63 // pred_check_branch
          %3613 = sbr.rel (%p3611) target = $region72
        $region71: #{tpu_custom_call.1} parent=63 // pred_region
          %s3614 = smul.u32 2, %s27
          %p3615 = scmp.lt.s32.totalorder %s3614, 3
          %s3616 = scalar_select %p3615, %s3614, 3
          %s3617 = smul.addr %s3616, 8
          %s3618 = smul.addr %s3617, 8
          %s3619 = scalar_lea.vmem %s7, %s3618
        $region72: #{tpu_custom_call.1} parent=63 // pred_fallthru
          _
      $region64: #{tpu_custom_call.1} parent=5 // pred_fallthru
        _
    $region6: #{tpu_custom_call.1} parent=1 // loop_footer
      %s25 = sadd.s32 1, %s21
    $region7: #{tpu_custom_call.1} parent=1 // loop_footer_branch
      %20 = sbr.rel target = $region3
    $region8: #{tpu_custom_call.1} parent=1 // loop_exit
      _
    %3620 = vsyncpa [#allocation3], 1
    %s3621 = scalar_lea.sflag [#allocation3], 1
    %3622 = vsyncpa %s3621, 1
    %3623 = vsyncpa [#allocation6], 1
    %3624 = vsyncpa [#allocation4], 1
    %s3625 = scalar_lea.sflag [#allocation4], 1
    %3626 = vsyncpa %s3625, 1

</llo_original>
